<compile_context>
chip_gen: v7x
topology: tpu7x:2x2x1
jax: 0.10.0
libtpu: 0.0.40
codegen_flags: <defaults>
</compile_context>

<pallas_src>
import jax
import jax.numpy as jnp
from jax.experimental import pallas as pl
from jax.experimental.pallas import tpu as pltpu


# ----------------------------- Pallas kernel --------------------------------

def gcn_layer_kernel(a_ref, h_ref, w_ref, b_ref, o_ref, acc_ref):
    k = pl.program_id(1)

    @pl.when(k == 0)
    def _():
        acc_ref[...] = jnp.zeros_like(acc_ref)

    # Aggregate over node (K) tiles: acc += A[i, k] @ H[k]   (bf16 MXU, f32 accum)
    acc_ref[...] += jnp.dot(a_ref[...], h_ref[...],
                            preferred_element_type=jnp.float32)

    @pl.when(k == pl.num_programs(1) - 1)
    def _():
        # Epilogue: (A @ H) @ W + b, ReLU in f32, cast to bf16.  W/b resident.
        z = jnp.dot(acc_ref[...].astype(jnp.bfloat16), w_ref[...],
                    preferred_element_type=jnp.float32) + b_ref[...]
        o_ref[...] = jnp.maximum(z, 0.0).astype(o_ref.dtype)


def gcn_agg_layer(a, h, w, b, *, tm, tk):
    """relu((A @ H) @ W + b), row/K-tiled, bf16 MXU inputs, f32 accumulation."""
    n_pad = a.shape[0]
    d_in = h.shape[1]
    d_out = w.shape[1]
    grid = (n_pad // tm, n_pad // tk)

    flops = 2 * n_pad * n_pad * d_in + 2 * n_pad * d_in * d_out
    bytes_accessed = (a.size * a.dtype.itemsize + h.size * h.dtype.itemsize
                      + w.size * w.dtype.itemsize + b.size * b.dtype.itemsize
                      + n_pad * d_out * 2)

    return pl.pallas_call(
        gcn_layer_kernel,
        out_shape=jax.ShapeDtypeStruct((n_pad, d_out), jnp.bfloat16),
        grid_spec=pltpu.PrefetchScalarGridSpec(
            num_scalar_prefetch=0,
            grid=grid,
            in_specs=[
                pl.BlockSpec((tm, tk), lambda i, k: (i, k)),       # A row/col tile
                pl.BlockSpec((tk, d_in), lambda i, k: (k, 0)),     # H K-tile
                pl.BlockSpec((d_in, d_out), lambda i, k: (0, 0)),  # resident weight
                pl.BlockSpec((1, d_out), lambda i, k: (0, 0)),     # resident bias
            ],
            out_specs=pl.BlockSpec((tm, d_out), lambda i, k: (i, 0)),
            scratch_shapes=[pltpu.VMEM((tm, d_in), jnp.float32)],
        ),
        compiler_params=pltpu.CompilerParams(
            dimension_semantics=("parallel", "arbitrary"),
            vmem_limit_bytes=32 * 1024 * 1024,
        ),
        cost_estimate=pl.CostEstimate(flops=flops, transcendentals=0,
                                      bytes_accessed=bytes_accessed),
    )(a, h, w, b)


# ------------------------------ Wrapper --------------------------------------

def _round_up(v, m):
    return (v + m - 1) // m * m


def _pick_tile(n_pad, cap):
    """Largest multiple of 128 that divides n_pad and is <= cap (n_pad % 128 == 0)."""
    best, t = 128, 128
    while t <= min(n_pad, cap):
        if n_pad % t == 0:
            best = t
        t += 128
    return best


def simple_gnn_pallas(x, a_hat, pool_mat, params):
    w_in, b_in, w1, b1, w2, b2, w_out, b_out = params
    n, f = x.shape
    hidden = w1.shape[0]
    num_graphs = pool_mat.shape[0]

    h_pad = _round_up(hidden, 128)
    f_pad = _round_up(f + 1, 128)      # +1 homogeneous ones column (carries lin_in bias)
    n_pad = _round_up(n, 128)
    tm = _pick_tile(n_pad, 512)        # output row tile (parallel axis)
    tk = _pick_tile(n_pad, 1024)       # reduction tile (fewer grid steps)

    f32 = jnp.float32
    bf16 = jnp.bfloat16

    # --- one-time glue (fold / pad / cast), plain XLA (fused under jit) -------
    # Fold lin_in into conv1:  W_eff = W_in @ W1,  b_eff = b_in @ W1 (ones column).
    w1_aug = jnp.zeros((f_pad, h_pad), f32)
    w1_aug = w1_aug.at[:f, :hidden].set(w_in @ w1)
    w1_aug = w1_aug.at[f, :hidden].set((b_in @ w1)[0])
    w2_pad = jnp.zeros((h_pad, h_pad), f32).at[:hidden, :hidden].set(w2)

    b1_pad = jnp.zeros((1, h_pad), f32).at[:, :hidden].set(b1)
    b2_pad = jnp.zeros((1, h_pad), f32).at[:, :hidden].set(b2)

    x_aug = jnp.zeros((n_pad, f_pad), f32)
    x_aug = x_aug.at[:n, :f].set(x)
    x_aug = x_aug.at[:n, f].set(1.0)   # homogeneous column for folded bias

    a_bf = jnp.zeros((n_pad, n_pad), bf16).at[:n, :n].set(a_hat.astype(bf16))
    x_bf = x_aug.astype(bf16)
    w1_bf = w1_aug.astype(bf16)
    w2_bf = w2_pad.astype(bf16)

    # --- hot path: two tiled GCN layers in Pallas -----------------------------
    h1 = gcn_agg_layer(a_bf, x_bf, w1_bf, b1_pad, tm=tm, tk=tk)  # (n_pad, h_pad) bf16
    h2 = gcn_agg_layer(a_bf, h1, w2_bf, b2_pad, tm=tm, tk=tk)    # (n_pad, h_pad) bf16

    # --- pooling + out linear (tiny; kept in XLA so Pallas stores stay lane-dense)
    # TODO(synk): fuse pooling (P_tile @ h_tile accumulation into a (G, H) scratch)
    #             into the last layer's grid when the node-row axis need not be
    #             a parallel (megacore) axis.
    pool_pad = jnp.zeros((num_graphs, n_pad), f32).at[:, :n].set(pool_mat)
    g = pool_pad @ h2.astype(f32)
    return g[:, :hidden] @ w_out + b_out


# ------------------------- graph preprocessing glue ---------------------------

def build_gcn_norm_adjacency(edge_index, num_nodes):
    """Dense A_hat = D^{-1/2} (A + I) D^{-1/2}, matching PyG GCNConv defaults.
    Duplicate edges are summed (multigraph-safe, like PyG message passing)."""
    src, dst = edge_index[0], edge_index[1]
    adj = jnp.zeros((num_nodes, num_nodes), jnp.float32)
    adj = adj.at[dst, src].add(1.0)                      # message src -> dst
    adj = adj + jnp.eye(num_nodes, dtype=jnp.float32)    # self-loops
    deg = adj.sum(axis=1)
    dinv = jnp.where(deg > 0, 1.0 / jnp.sqrt(deg), 0.0)
    return dinv[:, None] * adj * dinv[None, :]


def build_mean_pool_matrix(batch, num_graphs, num_nodes):
    """(G, N) matrix s.t. P @ H == global_mean_pool(H, batch)."""
    one_hot = (batch[None, :] == jnp.arange(num_graphs)[:, None]).astype(jnp.float32)
    counts = one_hot.sum(axis=1, keepdims=True)
    return one_hot / jnp.maximum(counts, 1.0)


def init_params(key, input_dim, hidden, n_classes):
    ks = jax.random.split(key, 8)

    def lin(kw, kb, fan_in, fan_out):
        bound = 1.0 / jnp.sqrt(fan_in)
        w = jax.random.uniform(kw, (fan_in, fan_out), jnp.float32, -bound, bound)
        b = jax.random.uniform(kb, (1, fan_out), jnp.float32, -bound, bound)
        return w, b

    w_in, b_in = lin(ks[0], ks[1], input_dim, hidden)
    w1, b1 = lin(ks[2], ks[3], hidden, hidden)
    w2, b2 = lin(ks[4], ks[5], hidden, hidden)
    w_out, b_out = lin(ks[6], ks[7], hidden, n_classes)
    return (w_in, b_in, w1, b1, w2, b2, w_out, b_out)


def reference_forward(x, a_hat, pool_mat, params):
    """Pure-f32 JAX reference of the eval-mode PyTorch forward."""
    w_in, b_in, w1, b1, w2, b2, w_out, b_out = params
    h = x @ w_in + b_in
    h = jnp.maximum(a_hat @ (h @ w1) + b1, 0.0)
    h = jnp.maximum(a_hat @ (h @ w2) + b2, 0.0)
    g = pool_mat @ h
    return g @ w_out + b_out


if __name__ == "__main__":
    # 6 ring graphs of 64 nodes each -> N=384, N_pad=384, tm=128, tk=384,
    # grid=(3,1): exercises multiple parallel row tiles; the accumulator path is
    # the same code whether the reduction axis has 1 or many steps.
    input_dim, hidden, n_classes = 8, 32, 1
    nodes_per_graph, num_graphs = 64, 6
    n_nodes = nodes_per_graph * num_graphs

    key = jax.random.PRNGKey(0)
    k_x, k_params = jax.random.split(key)
    x = jax.random.normal(k_x, (n_nodes, input_dim), jnp.float32)

    batch = jnp.repeat(jnp.arange(num_graphs), nodes_per_graph)
    srcs, dsts = [], []
    for g in range(num_graphs):
        base = g * nodes_per_graph
        for i in range(nodes_per_graph):
            a, b = base + i, base + (i + 1) % nodes_per_graph
            srcs += [a, b]
            dsts += [b, a]
    edge_index = jnp.array([srcs, dsts], dtype=jnp.int32)

    a_hat = build_gcn_norm_adjacency(edge_index, n_nodes)
    pool_mat = build_mean_pool_matrix(batch, num_graphs, n_nodes)
    params = init_params(k_params, input_dim, hidden, n_classes)

    fwd = jax.jit(simple_gnn_pallas)
    out = jax.block_until_ready(fwd(x, a_hat, pool_mat, params))
    ref = reference_forward(x, a_hat, pool_mat, params)

    assert out.shape == (num_graphs, n_classes)
    # bf16 MXU inputs (f32 accumulation) => relaxed tolerance vs pure-f32 reference.
    assert jnp.allclose(out, ref, atol=3e-2, rtol=3e-2), (out, ref)

    print("KERNEL_OK")
</pallas_src>

<mosaic_0001>
module attributes {stable_mosaic.version = 11 : i64} {
  func.func @gcn_layer_kernel(%arg0: i32, %arg1: i32, %arg2: memref<384x384xbf16, #tpu.memory_space<vmem>>, %arg3: memref<384x128xbf16, #tpu.memory_space<vmem>>, %arg4: memref<128x128xbf16, #tpu.memory_space<vmem>>, %arg5: memref<1x128xf32, #tpu.memory_space<vmem>>, %arg6: memref<384x128xbf16, #tpu.memory_space<vmem>>, %arg7: memref<384x128xf32, #tpu.memory_space<vmem>>) attributes {dimension_semantics = [#tpu.dimension_semantics<parallel>, #tpu.dimension_semantics<arbitrary>], iteration_bounds = array<i64: 1, 1>, scalar_prefetch = 0 : i64, scratch_operands = 1 : i64, tpu.core_type = #tpu.core_type<tc>, window_params = [{transform_indices = @transform_0, window_bounds = array<i64: 384, 384>}, {transform_indices = @transform_1, window_bounds = array<i64: 384, 128>}, {pipeline_mode = #tpu.pipeline_mode<synchronous>, transform_indices = @transform_2, window_bounds = array<i64: 128, 128>}, {pipeline_mode = #tpu.pipeline_mode<synchronous>, transform_indices = @transform_3, window_bounds = array<i64: 1, 128>}, {transform_indices = @transform_4, window_bounds = array<i64: 384, 128>}]} {
    %c0_i32 = arith.constant 0 : i32
    %0 = arith.cmpi eq, %arg1, %c0_i32 : i32
    %1 = arith.extui %0 : i1 to i32
    %c0_i32_0 = arith.constant 0 : i32
    %2 = arith.cmpi ne, %1, %c0_i32_0 : i32
    scf.if %2 {
      %cst_10 = arith.constant 0.000000e+00 : f32
      %12 = vector.broadcast %cst_10 : f32 to vector<384x128xf32>
      %c0_11 = arith.constant 0 : index
      %c0_12 = arith.constant 0 : index
      %13 = vector.load %arg7[%c0_11, %c0_12] : memref<384x128xf32, #tpu.memory_space<vmem>>, vector<384x128xf32>
      tpu.vector_store %arg7[%c0_11, %c0_12], %12 {strides = array<i32>} : memref<384x128xf32, #tpu.memory_space<vmem>>, vector<384x128xf32>,
    } else {
    }
    %c0 = arith.constant 0 : index
    %c0_1 = arith.constant 0 : index
    %3 = vector.load %arg7[%c0, %c0_1] : memref<384x128xf32, #tpu.memory_space<vmem>>, vector<384x128xf32>
    %c0_2 = arith.constant 0 : index
    %c0_3 = arith.constant 0 : index
    %4 = vector.load %arg2[%c0_2, %c0_3] : memref<384x384xbf16, #tpu.memory_space<vmem>>, vector<384x384xbf16>
    %c0_4 = arith.constant 0 : index
    %c0_5 = arith.constant 0 : index
    %5 = vector.load %arg3[%c0_4, %c0_5] : memref<384x128xbf16, #tpu.memory_space<vmem>>, vector<384x128xbf16>
    %cst = arith.constant dense<0.000000e+00> : vector<384x128xf32>
    %6 = tpu.matmul %4, %5, %cst {dimension_numbers = #tpu.dot_dimension_numbers<[1], [0], [0], [1], [0, 0, 1, 1], [], []>} : vector<384x384xbf16>, vector<384x128xbf16>, vector<384x128xf32> -> vector<384x128xf32>
    %7 = arith.addf %3, %6 : vector<384x128xf32>
    %c0_6 = arith.constant 0 : index
    %c0_7 = arith.constant 0 : index
    %8 = vector.load %arg7[%c0_6, %c0_7] : memref<384x128xf32, #tpu.memory_space<vmem>>, vector<384x128xf32>
    tpu.vector_store %arg7[%c0_6, %c0_7], %7 {strides = array<i32>} : memref<384x128xf32, #tpu.memory_space<vmem>>, vector<384x128xf32>,
    %c0_i32_8 = arith.constant 0 : i32
    %9 = arith.cmpi eq, %arg1, %c0_i32_8 : i32
    %10 = arith.extui %9 : i1 to i32
    %c0_i32_9 = arith.constant 0 : i32
    %11 = arith.cmpi ne, %10, %c0_i32_9 : i32
    scf.if %11 {
      %c0_10 = arith.constant 0 : index
      %c0_11 = arith.constant 0 : index
      %12 = vector.load %arg7[%c0_10, %c0_11] : memref<384x128xf32, #tpu.memory_space<vmem>>, vector<384x128xf32>
      %13 = arith.truncf %12 : vector<384x128xf32> to vector<384x128xbf16>
      %c0_12 = arith.constant 0 : index
      %c0_13 = arith.constant 0 : index
      %14 = vector.load %arg4[%c0_12, %c0_13] : memref<128x128xbf16, #tpu.memory_space<vmem>>, vector<128x128xbf16>
      %cst_14 = arith.constant dense<0.000000e+00> : vector<384x128xf32>
      %15 = tpu.matmul %13, %14, %cst_14 {dimension_numbers = #tpu.dot_dimension_numbers<[1], [0], [0], [1], [0, 0, 1, 1], [], []>} : vector<384x128xbf16>, vector<128x128xbf16>, vector<384x128xf32> -> vector<384x128xf32>
      %c0_15 = arith.constant 0 : index
      %c0_16 = arith.constant 0 : index
      %16 = vector.load %arg5[%c0_15, %c0_16] : memref<1x128xf32, #tpu.memory_space<vmem>>, vector<1x128xf32>
      %17 = vector.broadcast %16 : vector<1x128xf32> to vector<384x128xf32>
      %18 = arith.addf %15, %17 : vector<384x128xf32>
      %cst_17 = arith.constant 0.000000e+00 : f32
      %19 = vector.broadcast %cst_17 : f32 to vector<384x128xf32>
      %20 = arith.maximumf %18, %19 : vector<384x128xf32>
      %21 = arith.truncf %20 : vector<384x128xf32> to vector<384x128xbf16>
      %c0_18 = arith.constant 0 : index
      %c0_19 = arith.constant 0 : index
      %22 = vector.load %arg6[%c0_18, %c0_19] : memref<384x128xbf16, #tpu.memory_space<vmem>>, vector<384x128xbf16>
      tpu.vector_store %arg6[%c0_18, %c0_19], %21 {strides = array<i32>} : memref<384x128xbf16, #tpu.memory_space<vmem>>, vector<384x128xbf16>,
    } else {
    }
    return
  }
  func.func @transform_0(%arg0: i32, %arg1: i32) -> (i32, i32) {
    %c0_i32 = arith.constant 0 : i32
    return %arg0, %arg1 : i32, i32
  }
  func.func @transform_1(%arg0: i32, %arg1: i32) -> (i32, i32) {
    %c0_i32 = arith.constant 0 : i32
    %c0_i32_0 = arith.constant 0 : i32
    return %arg1, %c0_i32 : i32, i32
  }
  func.func @transform_2(%arg0: i32, %arg1: i32) -> (i32, i32) {
    %c0_i32 = arith.constant 0 : i32
    %c0_i32_0 = arith.constant 0 : i32
    %c0_i32_1 = arith.constant 0 : i32
    return %c0_i32, %c0_i32_0 : i32, i32
  }
  func.func @transform_3(%arg0: i32, %arg1: i32) -> (i32, i32) {
    %c0_i32 = arith.constant 0 : i32
    %c0_i32_0 = arith.constant 0 : i32
    %c0_i32_1 = arith.constant 0 : i32
    return %c0_i32, %c0_i32_0 : i32, i32
  }
  func.func @transform_4(%arg0: i32, %arg1: i32) -> (i32, i32) {
    %c0_i32 = arith.constant 0 : i32
    %c0_i32_0 = arith.constant 0 : i32
    return %arg0, %c0_i32 : i32, i32
  }
}

module attributes {stable_mosaic.version = 11 : i64} {
  func.func @gcn_layer_kernel(%arg0: i32, %arg1: i32, %arg2: memref<384x384xbf16, #tpu.memory_space<vmem>>, %arg3: memref<384x128xbf16, #tpu.memory_space<vmem>>, %arg4: memref<128x128xbf16, #tpu.memory_space<vmem>>, %arg5: memref<1x128xf32, #tpu.memory_space<vmem>>, %arg6: memref<384x128xbf16, #tpu.memory_space<vmem>>, %arg7: memref<384x128xf32, #tpu.memory_space<vmem>>) attributes {dimension_semantics = [#tpu.dimension_semantics<parallel>, #tpu.dimension_semantics<arbitrary>], iteration_bounds = array<i64: 1, 1>, scalar_prefetch = 0 : i64, scratch_operands = 1 : i64, tpu.core_type = #tpu.core_type<tc>, window_params = [{transform_indices = @transform_0, window_bounds = array<i64: 384, 384>}, {transform_indices = @transform_1, window_bounds = array<i64: 384, 128>}, {pipeline_mode = #tpu.pipeline_mode<synchronous>, transform_indices = @transform_2, window_bounds = array<i64: 128, 128>}, {pipeline_mode = #tpu.pipeline_mode<synchronous>, transform_indices = @transform_3, window_bounds = array<i64: 1, 128>}, {transform_indices = @transform_4, window_bounds = array<i64: 384, 128>}]} {
    %c0_i32 = arith.constant 0 : i32
    %0 = arith.cmpi eq, %arg1, %c0_i32 : i32
    %1 = arith.extui %0 : i1 to i32
    %c0_i32_0 = arith.constant 0 : i32
    %2 = arith.cmpi ne, %1, %c0_i32_0 : i32
    scf.if %2 {
      %cst_10 = arith.constant 0.000000e+00 : f32
      %12 = vector.broadcast %cst_10 : f32 to vector<384x128xf32>
      %c0_11 = arith.constant 0 : index
      %c0_12 = arith.constant 0 : index
      %13 = vector.load %arg7[%c0_11, %c0_12] : memref<384x128xf32, #tpu.memory_space<vmem>>, vector<384x128xf32>
      tpu.vector_store %arg7[%c0_11, %c0_12], %12 {strides = array<i32>} : memref<384x128xf32, #tpu.memory_space<vmem>>, vector<384x128xf32>,
    } else {
    }
    %c0 = arith.constant 0 : index
    %c0_1 = arith.constant 0 : index
    %3 = vector.load %arg7[%c0, %c0_1] : memref<384x128xf32, #tpu.memory_space<vmem>>, vector<384x128xf32>
    %c0_2 = arith.constant 0 : index
    %c0_3 = arith.constant 0 : index
    %4 = vector.load %arg2[%c0_2, %c0_3] : memref<384x384xbf16, #tpu.memory_space<vmem>>, vector<384x384xbf16>
    %c0_4 = arith.constant 0 : index
    %c0_5 = arith.constant 0 : index
    %5 = vector.load %arg3[%c0_4, %c0_5] : memref<384x128xbf16, #tpu.memory_space<vmem>>, vector<384x128xbf16>
    %cst = arith.constant dense<0.000000e+00> : vector<384x128xf32>
    %6 = tpu.matmul %4, %5, %cst {dimension_numbers = #tpu.dot_dimension_numbers<[1], [0], [0], [1], [0, 0, 1, 1], [], []>} : vector<384x384xbf16>, vector<384x128xbf16>, vector<384x128xf32> -> vector<384x128xf32>
    %7 = arith.addf %3, %6 : vector<384x128xf32>
    %c0_6 = arith.constant 0 : index
    %c0_7 = arith.constant 0 : index
    %8 = vector.load %arg7[%c0_6, %c0_7] : memref<384x128xf32, #tpu.memory_space<vmem>>, vector<384x128xf32>
    tpu.vector_store %arg7[%c0_6, %c0_7], %7 {strides = array<i32>} : memref<384x128xf32, #tpu.memory_space<vmem>>, vector<384x128xf32>,
    %c0_i32_8 = arith.constant 0 : i32
    %9 = arith.cmpi eq, %arg1, %c0_i32_8 : i32
    %10 = arith.extui %9 : i1 to i32
    %c0_i32_9 = arith.constant 0 : i32
    %11 = arith.cmpi ne, %10, %c0_i32_9 : i32
    scf.if %11 {
      %c0_10 = arith.constant 0 : index
      %c0_11 = arith.constant 0 : index
      %12 = vector.load %arg7[%c0_10, %c0_11] : memref<384x128xf32, #tpu.memory_space<vmem>>, vector<384x128xf32>
      %13 = arith.truncf %12 : vector<384x128xf32> to vector<384x128xbf16>
      %c0_12 = arith.constant 0 : index
      %c0_13 = arith.constant 0 : index
      %14 = vector.load %arg4[%c0_12, %c0_13] : memref<128x128xbf16, #tpu.memory_space<vmem>>, vector<128x128xbf16>
      %cst_14 = arith.constant dense<0.000000e+00> : vector<384x128xf32>
      %15 = tpu.matmul %13, %14, %cst_14 {dimension_numbers = #tpu.dot_dimension_numbers<[1], [0], [0], [1], [0, 0, 1, 1], [], []>} : vector<384x128xbf16>, vector<128x128xbf16>, vector<384x128xf32> -> vector<384x128xf32>
      %c0_15 = arith.constant 0 : index
      %c0_16 = arith.constant 0 : index
      %16 = vector.load %arg5[%c0_15, %c0_16] : memref<1x128xf32, #tpu.memory_space<vmem>>, vector<1x128xf32>
      %17 = vector.broadcast %16 : vector<1x128xf32> to vector<384x128xf32>
      %18 = arith.addf %15, %17 : vector<384x128xf32>
      %cst_17 = arith.constant 0.000000e+00 : f32
      %19 = vector.broadcast %cst_17 : f32 to vector<384x128xf32>
      %20 = arith.maximumf %18, %19 : vector<384x128xf32>
      %21 = arith.truncf %20 : vector<384x128xf32> to vector<384x128xbf16>
      %c0_18 = arith.constant 0 : index
      %c0_19 = arith.constant 0 : index
      %22 = vector.load %arg6[%c0_18, %c0_19] : memref<384x128xbf16, #tpu.memory_space<vmem>>, vector<384x128xbf16>
      tpu.vector_store %arg6[%c0_18, %c0_19], %21 {strides = array<i32>} : memref<384x128xbf16, #tpu.memory_space<vmem>>, vector<384x128xbf16>,
    } else {
    }
    return
  }
  func.func @transform_0(%arg0: i32, %arg1: i32) -> (i32, i32) {
    %c0_i32 = arith.constant 0 : i32
    return %arg0, %arg1 : i32, i32
  }
  func.func @transform_1(%arg0: i32, %arg1: i32) -> (i32, i32) {
    %c0_i32 = arith.constant 0 : i32
    %c0_i32_0 = arith.constant 0 : i32
    return %arg1, %c0_i32 : i32, i32
  }
  func.func @transform_2(%arg0: i32, %arg1: i32) -> (i32, i32) {
    %c0_i32 = arith.constant 0 : i32
    %c0_i32_0 = arith.constant 0 : i32
    %c0_i32_1 = arith.constant 0 : i32
    return %c0_i32, %c0_i32_0 : i32, i32
  }
  func.func @transform_3(%arg0: i32, %arg1: i32) -> (i32, i32) {
    %c0_i32 = arith.constant 0 : i32
    %c0_i32_0 = arith.constant 0 : i32
    %c0_i32_1 = arith.constant 0 : i32
    return %c0_i32, %c0_i32_0 : i32, i32
  }
  func.func @transform_4(%arg0: i32, %arg1: i32) -> (i32, i32) {
    %c0_i32 = arith.constant 0 : i32
    %c0_i32_0 = arith.constant 0 : i32
    return %arg0, %c0_i32 : i32, i32
  }
}

</mosaic_0001>

<llo_original>
// kernel: simple_gnn_pallas.3
$region0: #{simple_gnn_pallas.3}
  #allocation0 [shape = 'u32[]', space=smem, size = 0x4, offset = 0x4, fixed_abs, tag = 'smem constant byte address 0x4 - core index']
  #allocation1 [shape = 'u32[144,128]{1,0:T(1,128)}', space=vmem, size = 0x12000, scoped, tag = 'internal scratch']
  #allocation2 [shape = 'f32[384,128]{1,0:T(8,128)}', space=vmem, size = 0x30000, scoped, tag = 'scratch operand']
  %s0 = inlined_call_operand.vmem [shape: bf16[384,384], index: 0, kind: input, shape index: {}]
  %s1 = inlined_call_operand.vmem [shape: bf16[384,128], index: 1, kind: input, shape index: {}]
  %s2 = inlined_call_operand.vmem [shape: bf16[128,128], index: 2, kind: input, shape index: {}]
  %s3 = inlined_call_operand.vmem [shape: f32[1,128], index: 3, kind: input, shape index: {}]
  %s4 = inlined_call_operand.vmem [shape: bf16[384,128], index: 4, kind: output, shape index: {}]
  %s5 = sld [smem:[#allocation0]]
  $region34: #{simple_gnn_pallas.3} parent=0
    _
  %s7 = ssub.s32 1, %s5
  %s8 = scalar_select 0, %s7, %s5
  // Predicated region
  $region2: #{simple_gnn_pallas.3} parent=0 // pred_check
    _
  $region3: #{simple_gnn_pallas.3} parent=0 // pred_check_branch
    %10 = sbr.rel (0) target = $region5
  $region4: #{simple_gnn_pallas.3} parent=0 // pred_region
    _
  $region5: #{simple_gnn_pallas.3} parent=0 // pred_fallthru
    _
  // Predicated region
  $region6: #{simple_gnn_pallas.3} parent=0 // pred_check
    _
  $region7: #{simple_gnn_pallas.3} parent=0 // pred_check_branch
    %12 = sbr.rel (0) target = $region9
  $region8: #{simple_gnn_pallas.3} parent=0 // pred_region
    _
  $region9: #{simple_gnn_pallas.3} parent=0 // pred_fallthru
    _
  // Predicated region
  $region10: #{simple_gnn_pallas.3} parent=0 // pred_check
    _
  $region11: #{simple_gnn_pallas.3} parent=0 // pred_check_branch
    %14 = sbr.rel (0) target = $region13
  $region12: #{simple_gnn_pallas.3} parent=0 // pred_region
    _
  $region13: #{simple_gnn_pallas.3} parent=0 // pred_fallthru
    _
  // Predicated region
  $region14: #{simple_gnn_pallas.3} parent=0 // pred_check
    _
  $region15: #{simple_gnn_pallas.3} parent=0 // pred_check_branch
    %16 = sbr.rel (0) target = $region17
  $region16: #{simple_gnn_pallas.3} parent=0 // pred_region
    _
  $region17: #{simple_gnn_pallas.3} parent=0 // pred_fallthru
    _
  %p18 = scmp.eq.s32.totalorder 0, 0
  // Predicated region
  $region18: #{simple_gnn_pallas.3} parent=0 // pred_check
    %p19 = pneg %p18
  $region19: #{simple_gnn_pallas.3} parent=0 // pred_check_branch
    %21 = sbr.rel (%p19) target = $region21
  $region20: #{simple_gnn_pallas.3} parent=0 // pred_region
    %22 = vst [vmem:[#allocation2] sm:$0xff] 0.0
    %23 = vst [vmem:[#allocation2 + $0x8] sm:$0xff] 0.0
    %24 = vst [vmem:[#allocation2 + $0x10] sm:$0xff] 0.0
    %25 = vst [vmem:[#allocation2 + $0x18] sm:$0xff] 0.0
    %26 = vst [vmem:[#allocation2 + $0x20] sm:$0xff] 0.0
    %27 = vst [vmem:[#allocation2 + $0x28] sm:$0xff] 0.0
    %28 = vst [vmem:[#allocation2 + $0x30] sm:$0xff] 0.0
    %29 = vst [vmem:[#allocation2 + $0x38] sm:$0xff] 0.0
    %30 = vst [vmem:[#allocation2 + $0x40] sm:$0xff] 0.0
    %31 = vst [vmem:[#allocation2 + $0x48] sm:$0xff] 0.0
    %32 = vst [vmem:[#allocation2 + $0x50] sm:$0xff] 0.0
    %33 = vst [vmem:[#allocation2 + $0x58] sm:$0xff] 0.0
    %34 = vst [vmem:[#allocation2 + $0x60] sm:$0xff] 0.0
    %35 = vst [vmem:[#allocation2 + $0x68] sm:$0xff] 0.0
    %36 = vst [vmem:[#allocation2 + $0x70] sm:$0xff] 0.0
    %37 = vst [vmem:[#allocation2 + $0x78] sm:$0xff] 0.0
    %38 = vst [vmem:[#allocation2 + $0x80] sm:$0xff] 0.0
    %39 = vst [vmem:[#allocation2 + $0x88] sm:$0xff] 0.0
    %40 = vst [vmem:[#allocation2 + $0x90] sm:$0xff] 0.0
    %41 = vst [vmem:[#allocation2 + $0x98] sm:$0xff] 0.0
    %42 = vst [vmem:[#allocation2 + $0xa0] sm:$0xff] 0.0
    %43 = vst [vmem:[#allocation2 + $0xa8] sm:$0xff] 0.0
    %44 = vst [vmem:[#allocation2 + $0xb0] sm:$0xff] 0.0
    %45 = vst [vmem:[#allocation2 + $0xb8] sm:$0xff] 0.0
    %46 = vst [vmem:[#allocation2 + $0xc0] sm:$0xff] 0.0
    %47 = vst [vmem:[#allocation2 + $0xc8] sm:$0xff] 0.0
    %48 = vst [vmem:[#allocation2 + $0xd0] sm:$0xff] 0.0
    %49 = vst [vmem:[#allocation2 + $0xd8] sm:$0xff] 0.0
    %50 = vst [vmem:[#allocation2 + $0xe0] sm:$0xff] 0.0
    %51 = vst [vmem:[#allocation2 + $0xe8] sm:$0xff] 0.0
    %52 = vst [vmem:[#allocation2 + $0xf0] sm:$0xff] 0.0
    %53 = vst [vmem:[#allocation2 + $0xf8] sm:$0xff] 0.0
    %54 = vst [vmem:[#allocation2 + $0x100] sm:$0xff] 0.0
    %55 = vst [vmem:[#allocation2 + $0x108] sm:$0xff] 0.0
    %56 = vst [vmem:[#allocation2 + $0x110] sm:$0xff] 0.0
    %57 = vst [vmem:[#allocation2 + $0x118] sm:$0xff] 0.0
    %58 = vst [vmem:[#allocation2 + $0x120] sm:$0xff] 0.0
    %59 = vst [vmem:[#allocation2 + $0x128] sm:$0xff] 0.0
    %60 = vst [vmem:[#allocation2 + $0x130] sm:$0xff] 0.0
    %61 = vst [vmem:[#allocation2 + $0x138] sm:$0xff] 0.0
    %62 = vst [vmem:[#allocation2 + $0x140] sm:$0xff] 0.0
    %63 = vst [vmem:[#allocation2 + $0x148] sm:$0xff] 0.0
    %64 = vst [vmem:[#allocation2 + $0x150] sm:$0xff] 0.0
    %65 = vst [vmem:[#allocation2 + $0x158] sm:$0xff] 0.0
    %66 = vst [vmem:[#allocation2 + $0x160] sm:$0xff] 0.0
    %67 = vst [vmem:[#allocation2 + $0x168] sm:$0xff] 0.0
    %68 = vst [vmem:[#allocation2 + $0x170] sm:$0xff] 0.0
    %69 = vst [vmem:[#allocation2 + $0x178] sm:$0xff] 0.0
  $region21: #{simple_gnn_pallas.3} parent=0 // pred_fallthru
    _
  %v70 = vld [vmem:[#allocation2] sm:$0xff]
  %v71 = vld [vmem:[#allocation2 + $0x8] sm:$0xff]
  %v72 = vld [vmem:[#allocation2 + $0x10] sm:$0xff]
  %v73 = vld [vmem:[#allocation2 + $0x18] sm:$0xff]
  %v74 = vld [vmem:[#allocation2 + $0x20] sm:$0xff]
  %v75 = vld [vmem:[#allocation2 + $0x28] sm:$0xff]
  %v76 = vld [vmem:[#allocation2 + $0x30] sm:$0xff]
  %v77 = vld [vmem:[#allocation2 + $0x38] sm:$0xff]
  %v78 = vld [vmem:[#allocation2 + $0x40] sm:$0xff]
  %v79 = vld [vmem:[#allocation2 + $0x48] sm:$0xff]
  %v80 = vld [vmem:[#allocation2 + $0x50] sm:$0xff]
  %v81 = vld [vmem:[#allocation2 + $0x58] sm:$0xff]
  %v82 = vld [vmem:[#allocation2 + $0x60] sm:$0xff]
  %v83 = vld [vmem:[#allocation2 + $0x68] sm:$0xff]
  %v84 = vld [vmem:[#allocation2 + $0x70] sm:$0xff]
  %v85 = vld [vmem:[#allocation2 + $0x78] sm:$0xff]
  %v86 = vld [vmem:[#allocation2 + $0x80] sm:$0xff]
  %v87 = vld [vmem:[#allocation2 + $0x88] sm:$0xff]
  %v88 = vld [vmem:[#allocation2 + $0x90] sm:$0xff]
  %v89 = vld [vmem:[#allocation2 + $0x98] sm:$0xff]
  %v90 = vld [vmem:[#allocation2 + $0xa0] sm:$0xff]
  %v91 = vld [vmem:[#allocation2 + $0xa8] sm:$0xff]
  %v92 = vld [vmem:[#allocation2 + $0xb0] sm:$0xff]
  %v93 = vld [vmem:[#allocation2 + $0xb8] sm:$0xff]
  %v94 = vld [vmem:[#allocation2 + $0xc0] sm:$0xff]
  %v95 = vld [vmem:[#allocation2 + $0xc8] sm:$0xff]
  %v96 = vld [vmem:[#allocation2 + $0xd0] sm:$0xff]
  %v97 = vld [vmem:[#allocation2 + $0xd8] sm:$0xff]
  %v98 = vld [vmem:[#allocation2 + $0xe0] sm:$0xff]
  %v99 = vld [vmem:[#allocation2 + $0xe8] sm:$0xff]
  %v100 = vld [vmem:[#allocation2 + $0xf0] sm:$0xff]
  %v101 = vld [vmem:[#allocation2 + $0xf8] sm:$0xff]
  %v102 = vld [vmem:[#allocation2 + $0x100] sm:$0xff]
  %v103 = vld [vmem:[#allocation2 + $0x108] sm:$0xff]
  %v104 = vld [vmem:[#allocation2 + $0x110] sm:$0xff]
  %v105 = vld [vmem:[#allocation2 + $0x118] sm:$0xff]
  %v106 = vld [vmem:[#allocation2 + $0x120] sm:$0xff]
  %v107 = vld [vmem:[#allocation2 + $0x128] sm:$0xff]
  %v108 = vld [vmem:[#allocation2 + $0x130] sm:$0xff]
  %v109 = vld [vmem:[#allocation2 + $0x138] sm:$0xff]
  %v110 = vld [vmem:[#allocation2 + $0x140] sm:$0xff]
  %v111 = vld [vmem:[#allocation2 + $0x148] sm:$0xff]
  %v112 = vld [vmem:[#allocation2 + $0x150] sm:$0xff]
  %v113 = vld [vmem:[#allocation2 + $0x158] sm:$0xff]
  %v114 = vld [vmem:[#allocation2 + $0x160] sm:$0xff]
  %v115 = vld [vmem:[#allocation2 + $0x168] sm:$0xff]
  %v116 = vld [vmem:[#allocation2 + $0x170] sm:$0xff]
  %v117 = vld [vmem:[#allocation2 + $0x178] sm:$0xff]
  %v118 = vld [vmem:[%s0] sm:$0xff]
  %v119 = vld [vmem:[%s0 + $0x8] sm:$0xf]
  %v120 = vld [vmem:[%s0 + $0xc] sm:$0xff]
  %v121 = vld [vmem:[%s0 + $0x14] sm:$0xf]
  %v122 = vld [vmem:[%s0 + $0x18] sm:$0xff]
  %v123 = vld [vmem:[%s0 + $0x20] sm:$0xf]
  %v124 = vld [vmem:[%s0 + $0x24] sm:$0xff]
  %v125 = vld [vmem:[%s0 + $0x2c] sm:$0xf]
  %v126 = vld [vmem:[%s0 + $0x30] sm:$0xff]
  %v127 = vld [vmem:[%s0 + $0x38] sm:$0xf]
  %v128 = vld [vmem:[%s0 + $0x3c] sm:$0xff]
  %v129 = vld [vmem:[%s0 + $0x44] sm:$0xf]
  %v130 = vld [vmem:[%s0 + $0x48] sm:$0xff]
  %v131 = vld [vmem:[%s0 + $0x50] sm:$0xf]
  %v132 = vld [vmem:[%s0 + $0x54] sm:$0xff]
  %v133 = vld [vmem:[%s0 + $0x5c] sm:$0xf]
  %v134 = vld [vmem:[%s0 + $0x60] sm:$0xff]
  %v135 = vld [vmem:[%s0 + $0x68] sm:$0xf]
  %v136 = vld [vmem:[%s0 + $0x6c] sm:$0xff]
  %v137 = vld [vmem:[%s0 + $0x74] sm:$0xf]
  %v138 = vld [vmem:[%s0 + $0x78] sm:$0xff]
  %v139 = vld [vmem:[%s0 + $0x80] sm:$0xf]
  %v140 = vld [vmem:[%s0 + $0x84] sm:$0xff]
  %v141 = vld [vmem:[%s0 + $0x8c] sm:$0xf]
  %v142 = vld [vmem:[%s0 + $0x90] sm:$0xff]
  %v143 = vld [vmem:[%s0 + $0x98] sm:$0xf]
  %v144 = vld [vmem:[%s0 + $0x9c] sm:$0xff]
  %v145 = vld [vmem:[%s0 + $0xa4] sm:$0xf]
  %v146 = vld [vmem:[%s0 + $0xa8] sm:$0xff]
  %v147 = vld [vmem:[%s0 + $0xb0] sm:$0xf]
  %v148 = vld [vmem:[%s0 + $0xb4] sm:$0xff]
  %v149 = vld [vmem:[%s0 + $0xbc] sm:$0xf]
  %v150 = vld [vmem:[%s0 + $0xc0] sm:$0xff]
  %v151 = vld [vmem:[%s0 + $0xc8] sm:$0xf]
  %v152 = vld [vmem:[%s0 + $0xcc] sm:$0xff]
  %v153 = vld [vmem:[%s0 + $0xd4] sm:$0xf]
  %v154 = vld [vmem:[%s0 + $0xd8] sm:$0xff]
  %v155 = vld [vmem:[%s0 + $0xe0] sm:$0xf]
  %v156 = vld [vmem:[%s0 + $0xe4] sm:$0xff]
  %v157 = vld [vmem:[%s0 + $0xec] sm:$0xf]
  %v158 = vld [vmem:[%s0 + $0xf0] sm:$0xff]
  %v159 = vld [vmem:[%s0 + $0xf8] sm:$0xf]
  %v160 = vld [vmem:[%s0 + $0xfc] sm:$0xff]
  %v161 = vld [vmem:[%s0 + $0x104] sm:$0xf]
  %v162 = vld [vmem:[%s0 + $0x108] sm:$0xff]
  %v163 = vld [vmem:[%s0 + $0x110] sm:$0xf]
  %v164 = vld [vmem:[%s0 + $0x114] sm:$0xff]
  %v165 = vld [vmem:[%s0 + $0x11c] sm:$0xf]
  %v166 = vld [vmem:[%s0 + $0x120] sm:$0xff]
  %v167 = vld [vmem:[%s0 + $0x128] sm:$0xf]
  %v168 = vld [vmem:[%s0 + $0x12c] sm:$0xff]
  %v169 = vld [vmem:[%s0 + $0x134] sm:$0xf]
  %v170 = vld [vmem:[%s0 + $0x138] sm:$0xff]
  %v171 = vld [vmem:[%s0 + $0x140] sm:$0xf]
  %v172 = vld [vmem:[%s0 + $0x144] sm:$0xff]
  %v173 = vld [vmem:[%s0 + $0x14c] sm:$0xf]
  %v174 = vld [vmem:[%s0 + $0x150] sm:$0xff]
  %v175 = vld [vmem:[%s0 + $0x158] sm:$0xf]
  %v176 = vld [vmem:[%s0 + $0x15c] sm:$0xff]
  %v177 = vld [vmem:[%s0 + $0x164] sm:$0xf]
  %v178 = vld [vmem:[%s0 + $0x168] sm:$0xff]
  %v179 = vld [vmem:[%s0 + $0x170] sm:$0xf]
  %v180 = vld [vmem:[%s0 + $0x174] sm:$0xff]
  %v181 = vld [vmem:[%s0 + $0x17c] sm:$0xf]
  %v182 = vld [vmem:[%s0 + $0x180] sm:$0xff]
  %v183 = vld [vmem:[%s0 + $0x188] sm:$0xf]
  %v184 = vld [vmem:[%s0 + $0x18c] sm:$0xff]
  %v185 = vld [vmem:[%s0 + $0x194] sm:$0xf]
  %v186 = vld [vmem:[%s0 + $0x198] sm:$0xff]
  %v187 = vld [vmem:[%s0 + $0x1a0] sm:$0xf]
  %v188 = vld [vmem:[%s0 + $0x1a4] sm:$0xff]
  %v189 = vld [vmem:[%s0 + $0x1ac] sm:$0xf]
  %v190 = vld [vmem:[%s0 + $0x1b0] sm:$0xff]
  %v191 = vld [vmem:[%s0 + $0x1b8] sm:$0xf]
  %v192 = vld [vmem:[%s0 + $0x1bc] sm:$0xff]
  %v193 = vld [vmem:[%s0 + $0x1c4] sm:$0xf]
  %v194 = vld [vmem:[%s0 + $0x1c8] sm:$0xff]
  %v195 = vld [vmem:[%s0 + $0x1d0] sm:$0xf]
  %v196 = vld [vmem:[%s0 + $0x1d4] sm:$0xff]
  %v197 = vld [vmem:[%s0 + $0x1dc] sm:$0xf]
  %v198 = vld [vmem:[%s0 + $0x1e0] sm:$0xff]
  %v199 = vld [vmem:[%s0 + $0x1e8] sm:$0xf]
  %v200 = vld [vmem:[%s0 + $0x1ec] sm:$0xff]
  %v201 = vld [vmem:[%s0 + $0x1f4] sm:$0xf]
  %v202 = vld [vmem:[%s0 + $0x1f8] sm:$0xff]
  %v203 = vld [vmem:[%s0 + $0x200] sm:$0xf]
  %v204 = vld [vmem:[%s0 + $0x204] sm:$0xff]
  %v205 = vld [vmem:[%s0 + $0x20c] sm:$0xf]
  %v206 = vld [vmem:[%s0 + $0x210] sm:$0xff]
  %v207 = vld [vmem:[%s0 + $0x218] sm:$0xf]
  %v208 = vld [vmem:[%s0 + $0x21c] sm:$0xff]
  %v209 = vld [vmem:[%s0 + $0x224] sm:$0xf]
  %v210 = vld [vmem:[%s0 + $0x228] sm:$0xff]
  %v211 = vld [vmem:[%s0 + $0x230] sm:$0xf]
  %v212 = vld [vmem:[%s0 + $0x234] sm:$0xff]
  %v213 = vld [vmem:[%s0 + $0x23c] sm:$0xf]
  %v214 = vld [vmem:[%s1] sm:$0xf]
  %v215 = vld [vmem:[%s1 + $0x4] sm:$0xf]
  %v216 = vld [vmem:[%s1 + $0x8] sm:$0xf]
  %v217 = vld [vmem:[%s1 + $0xc] sm:$0xf]
  %v218 = vld [vmem:[%s1 + $0x10] sm:$0xf]
  %v219 = vld [vmem:[%s1 + $0x14] sm:$0xf]
  %v220 = vld [vmem:[%s1 + $0x18] sm:$0xf]
  %v221 = vld [vmem:[%s1 + $0x1c] sm:$0xf]
  %v222 = vld [vmem:[%s1 + $0x20] sm:$0xf]
  %v223 = vld [vmem:[%s1 + $0x24] sm:$0xf]
  %v224 = vld [vmem:[%s1 + $0x28] sm:$0xf]
  %v225 = vld [vmem:[%s1 + $0x2c] sm:$0xf]
  %v226 = vld [vmem:[%s1 + $0x30] sm:$0xf]
  %v227 = vld [vmem:[%s1 + $0x34] sm:$0xf]
  %v228 = vld [vmem:[%s1 + $0x38] sm:$0xf]
  %v229 = vld [vmem:[%s1 + $0x3c] sm:$0xf]
  %v230 = vld [vmem:[%s1 + $0x40] sm:$0xf]
  %v231 = vld [vmem:[%s1 + $0x44] sm:$0xf]
  %v232 = vld [vmem:[%s1 + $0x48] sm:$0xf]
  %v233 = vld [vmem:[%s1 + $0x4c] sm:$0xf]
  %v234 = vld [vmem:[%s1 + $0x50] sm:$0xf]
  %v235 = vld [vmem:[%s1 + $0x54] sm:$0xf]
  %v236 = vld [vmem:[%s1 + $0x58] sm:$0xf]
  %v237 = vld [vmem:[%s1 + $0x5c] sm:$0xf]
  %v238 = vld [vmem:[%s1 + $0x60] sm:$0xf]
  %v239 = vld [vmem:[%s1 + $0x64] sm:$0xf]
  %v240 = vld [vmem:[%s1 + $0x68] sm:$0xf]
  %v241 = vld [vmem:[%s1 + $0x6c] sm:$0xf]
  %v242 = vld [vmem:[%s1 + $0x70] sm:$0xf]
  %v243 = vld [vmem:[%s1 + $0x74] sm:$0xf]
  %v244 = vld [vmem:[%s1 + $0x78] sm:$0xf]
  %v245 = vld [vmem:[%s1 + $0x7c] sm:$0xf]
  %v246 = vld [vmem:[%s1 + $0x80] sm:$0xf]
  %v247 = vld [vmem:[%s1 + $0x84] sm:$0xf]
  %v248 = vld [vmem:[%s1 + $0x88] sm:$0xf]
  %v249 = vld [vmem:[%s1 + $0x8c] sm:$0xf]
  %v250 = vld [vmem:[%s1 + $0x90] sm:$0xf]
  %v251 = vld [vmem:[%s1 + $0x94] sm:$0xf]
  %v252 = vld [vmem:[%s1 + $0x98] sm:$0xf]
  %v253 = vld [vmem:[%s1 + $0x9c] sm:$0xf]
  %v254 = vld [vmem:[%s1 + $0xa0] sm:$0xf]
  %v255 = vld [vmem:[%s1 + $0xa4] sm:$0xf]
  %v256 = vld [vmem:[%s1 + $0xa8] sm:$0xf]
  %v257 = vld [vmem:[%s1 + $0xac] sm:$0xf]
  %v258 = vld [vmem:[%s1 + $0xb0] sm:$0xf]
  %v259 = vld [vmem:[%s1 + $0xb4] sm:$0xf]
  %v260 = vld [vmem:[%s1 + $0xb8] sm:$0xf]
  %v261 = vld [vmem:[%s1 + $0xbc] sm:$0xf]
  %v358 = vunpack.c.l.b16 %v118
  %v359 = vunpack.c.h.b16 %v118
  %v360 = vunpack.c.l.b16 %v119
  %v361 = vunpack.c.l.b16 %v120
  %v362 = vunpack.c.h.b16 %v120
  %v363 = vunpack.c.l.b16 %v121
  %v364 = vunpack.c.l.b16 %v122
  %v365 = vunpack.c.h.b16 %v122
  %v366 = vunpack.c.l.b16 %v123
  %v367 = vunpack.c.l.b16 %v124
  %v368 = vunpack.c.h.b16 %v124
  %v369 = vunpack.c.l.b16 %v125
  %v370 = vunpack.c.l.b16 %v126
  %v371 = vunpack.c.h.b16 %v126
  %v372 = vunpack.c.l.b16 %v127
  %v373 = vunpack.c.l.b16 %v128
  %v374 = vunpack.c.h.b16 %v128
  %v375 = vunpack.c.l.b16 %v129
  %v376 = vunpack.c.l.b16 %v130
  %v377 = vunpack.c.h.b16 %v130
  %v378 = vunpack.c.l.b16 %v131
  %v379 = vunpack.c.l.b16 %v132
  %v380 = vunpack.c.h.b16 %v132
  %v381 = vunpack.c.l.b16 %v133
  %v382 = vunpack.c.l.b16 %v134
  %v383 = vunpack.c.h.b16 %v134
  %v384 = vunpack.c.l.b16 %v135
  %v385 = vunpack.c.l.b16 %v136
  %v386 = vunpack.c.h.b16 %v136
  %v387 = vunpack.c.l.b16 %v137
  %v388 = vunpack.c.l.b16 %v138
  %v389 = vunpack.c.h.b16 %v138
  %v390 = vunpack.c.l.b16 %v139
  %v391 = vunpack.c.l.b16 %v140
  %v392 = vunpack.c.h.b16 %v140
  %v393 = vunpack.c.l.b16 %v141
  %v394 = vunpack.c.l.b16 %v142
  %v395 = vunpack.c.h.b16 %v142
  %v396 = vunpack.c.l.b16 %v143
  %v397 = vunpack.c.l.b16 %v144
  %v398 = vunpack.c.h.b16 %v144
  %v399 = vunpack.c.l.b16 %v145
  %v400 = vunpack.c.l.b16 %v146
  %v401 = vunpack.c.h.b16 %v146
  %v402 = vunpack.c.l.b16 %v147
  %v403 = vunpack.c.l.b16 %v148
  %v404 = vunpack.c.h.b16 %v148
  %v405 = vunpack.c.l.b16 %v149
  %v406 = vunpack.c.l.b16 %v150
  %v407 = vunpack.c.h.b16 %v150
  %v408 = vunpack.c.l.b16 %v151
  %v409 = vunpack.c.l.b16 %v152
  %v410 = vunpack.c.h.b16 %v152
  %v411 = vunpack.c.l.b16 %v153
  %v412 = vunpack.c.l.b16 %v154
  %v413 = vunpack.c.h.b16 %v154
  %v414 = vunpack.c.l.b16 %v155
  %v415 = vunpack.c.l.b16 %v156
  %v416 = vunpack.c.h.b16 %v156
  %v417 = vunpack.c.l.b16 %v157
  %v418 = vunpack.c.l.b16 %v158
  %v419 = vunpack.c.h.b16 %v158
  %v420 = vunpack.c.l.b16 %v159
  %v421 = vunpack.c.l.b16 %v160
  %v422 = vunpack.c.h.b16 %v160
  %v423 = vunpack.c.l.b16 %v161
  %v424 = vunpack.c.l.b16 %v162
  %v425 = vunpack.c.h.b16 %v162
  %v426 = vunpack.c.l.b16 %v163
  %v427 = vunpack.c.l.b16 %v164
  %v428 = vunpack.c.h.b16 %v164
  %v429 = vunpack.c.l.b16 %v165
  %v430 = vunpack.c.l.b16 %v166
  %v431 = vunpack.c.h.b16 %v166
  %v432 = vunpack.c.l.b16 %v167
  %v433 = vunpack.c.l.b16 %v168
  %v434 = vunpack.c.h.b16 %v168
  %v435 = vunpack.c.l.b16 %v169
  %v436 = vunpack.c.l.b16 %v170
  %v437 = vunpack.c.h.b16 %v170
  %v438 = vunpack.c.l.b16 %v171
  %v439 = vunpack.c.l.b16 %v172
  %v440 = vunpack.c.h.b16 %v172
  %v441 = vunpack.c.l.b16 %v173
  %v442 = vunpack.c.l.b16 %v174
  %v443 = vunpack.c.h.b16 %v174
  %v444 = vunpack.c.l.b16 %v175
  %v445 = vunpack.c.l.b16 %v176
  %v446 = vunpack.c.h.b16 %v176
  %v447 = vunpack.c.l.b16 %v177
  %v448 = vunpack.c.l.b16 %v178
  %v449 = vunpack.c.h.b16 %v178
  %v450 = vunpack.c.l.b16 %v179
  %v451 = vunpack.c.l.b16 %v180
  %v452 = vunpack.c.h.b16 %v180
  %v453 = vunpack.c.l.b16 %v181
  %v454 = vunpack.c.l.b16 %v182
  %v455 = vunpack.c.h.b16 %v182
  %v456 = vunpack.c.l.b16 %v183
  %v457 = vunpack.c.l.b16 %v184
  %v458 = vunpack.c.h.b16 %v184
  %v459 = vunpack.c.l.b16 %v185
  %v460 = vunpack.c.l.b16 %v186
  %v461 = vunpack.c.h.b16 %v186
  %v462 = vunpack.c.l.b16 %v187
  %v463 = vunpack.c.l.b16 %v188
  %v464 = vunpack.c.h.b16 %v188
  %v465 = vunpack.c.l.b16 %v189
  %v466 = vunpack.c.l.b16 %v190
  %v467 = vunpack.c.h.b16 %v190
  %v468 = vunpack.c.l.b16 %v191
  %v469 = vunpack.c.l.b16 %v192
  %v470 = vunpack.c.h.b16 %v192
  %v471 = vunpack.c.l.b16 %v193
  %v472 = vunpack.c.l.b16 %v194
  %v473 = vunpack.c.h.b16 %v194
  %v474 = vunpack.c.l.b16 %v195
  %v475 = vunpack.c.l.b16 %v196
  %v476 = vunpack.c.h.b16 %v196
  %v477 = vunpack.c.l.b16 %v197
  %v478 = vunpack.c.l.b16 %v198
  %v479 = vunpack.c.h.b16 %v198
  %v480 = vunpack.c.l.b16 %v199
  %v481 = vunpack.c.l.b16 %v200
  %v482 = vunpack.c.h.b16 %v200
  %v483 = vunpack.c.l.b16 %v201
  %v484 = vunpack.c.l.b16 %v202
  %v485 = vunpack.c.h.b16 %v202
  %v486 = vunpack.c.l.b16 %v203
  %v487 = vunpack.c.l.b16 %v204
  %v488 = vunpack.c.h.b16 %v204
  %v489 = vunpack.c.l.b16 %v205
  %v490 = vunpack.c.l.b16 %v206
  %v491 = vunpack.c.h.b16 %v206
  %v492 = vunpack.c.l.b16 %v207
  %v493 = vunpack.c.l.b16 %v208
  %v494 = vunpack.c.h.b16 %v208
  %v495 = vunpack.c.l.b16 %v209
  %v496 = vunpack.c.l.b16 %v210
  %v497 = vunpack.c.h.b16 %v210
  %v498 = vunpack.c.l.b16 %v211
  %v499 = vunpack.c.l.b16 %v212
  %v500 = vunpack.c.h.b16 %v212
  %v501 = vunpack.c.l.b16 %v213
  %v502 = vpack.c.b16 %v361, %v358
  %v503 = vpack.c.b16 %v362, %v359
  %v504 = vpack.c.b16 %v363, %v360
  %v505 = vpack.c.b16 %v367, %v364
  %v506 = vpack.c.b16 %v368, %v365
  %v507 = vpack.c.b16 %v369, %v366
  %v508 = vpack.c.b16 %v373, %v370
  %v509 = vpack.c.b16 %v374, %v371
  %v510 = vpack.c.b16 %v375, %v372
  %v511 = vpack.c.b16 %v379, %v376
  %v512 = vpack.c.b16 %v380, %v377
  %v513 = vpack.c.b16 %v381, %v378
  %v514 = vpack.c.b16 %v385, %v382
  %v515 = vpack.c.b16 %v386, %v383
  %v516 = vpack.c.b16 %v387, %v384
  %v517 = vpack.c.b16 %v391, %v388
  %v518 = vpack.c.b16 %v392, %v389
  %v519 = vpack.c.b16 %v393, %v390
  %v520 = vpack.c.b16 %v397, %v394
  %v521 = vpack.c.b16 %v398, %v395
  %v522 = vpack.c.b16 %v399, %v396
  %v523 = vpack.c.b16 %v403, %v400
  %v524 = vpack.c.b16 %v404, %v401
  %v525 = vpack.c.b16 %v405, %v402
  %v526 = vpack.c.b16 %v409, %v406
  %v527 = vpack.c.b16 %v410, %v407
  %v528 = vpack.c.b16 %v411, %v408
  %v529 = vpack.c.b16 %v415, %v412
  %v530 = vpack.c.b16 %v416, %v413
  %v531 = vpack.c.b16 %v417, %v414
  %v532 = vpack.c.b16 %v421, %v418
  %v533 = vpack.c.b16 %v422, %v419
  %v534 = vpack.c.b16 %v423, %v420
  %v535 = vpack.c.b16 %v427, %v424
  %v536 = vpack.c.b16 %v428, %v425
  %v537 = vpack.c.b16 %v429, %v426
  %v538 = vpack.c.b16 %v433, %v430
  %v539 = vpack.c.b16 %v434, %v431
  %v540 = vpack.c.b16 %v435, %v432
  %v541 = vpack.c.b16 %v439, %v436
  %v542 = vpack.c.b16 %v440, %v437
  %v543 = vpack.c.b16 %v441, %v438
  %v544 = vpack.c.b16 %v445, %v442
  %v545 = vpack.c.b16 %v446, %v443
  %v546 = vpack.c.b16 %v447, %v444
  %v547 = vpack.c.b16 %v451, %v448
  %v548 = vpack.c.b16 %v452, %v449
  %v549 = vpack.c.b16 %v453, %v450
  %v550 = vpack.c.b16 %v457, %v454
  %v551 = vpack.c.b16 %v458, %v455
  %v552 = vpack.c.b16 %v459, %v456
  %v553 = vpack.c.b16 %v463, %v460
  %v554 = vpack.c.b16 %v464, %v461
  %v555 = vpack.c.b16 %v465, %v462
  %v556 = vpack.c.b16 %v469, %v466
  %v557 = vpack.c.b16 %v470, %v467
  %v558 = vpack.c.b16 %v471, %v468
  %v559 = vpack.c.b16 %v475, %v472
  %v560 = vpack.c.b16 %v476, %v473
  %v561 = vpack.c.b16 %v477, %v474
  %v562 = vpack.c.b16 %v481, %v478
  %v563 = vpack.c.b16 %v482, %v479
  %v564 = vpack.c.b16 %v483, %v480
  %v565 = vpack.c.b16 %v487, %v484
  %v566 = vpack.c.b16 %v488, %v485
  %v567 = vpack.c.b16 %v489, %v486
  %v568 = vpack.c.b16 %v493, %v490
  %v569 = vpack.c.b16 %v494, %v491
  %v570 = vpack.c.b16 %v495, %v492
  %v571 = vpack.c.b16 %v499, %v496
  %v572 = vpack.c.b16 %v500, %v497
  %v573 = vpack.c.b16 %v501, %v498
  %v694 = vunpack.c.l.b16 %v214
  %v695 = vunpack.c.l.b16 %v215
  %v696 = vunpack.c.l.b16 %v216
  %v697 = vunpack.c.l.b16 %v217
  %v698 = vunpack.c.l.b16 %v218
  %v699 = vunpack.c.l.b16 %v219
  %v700 = vunpack.c.l.b16 %v220
  %v701 = vunpack.c.l.b16 %v221
  %v702 = vunpack.c.l.b16 %v222
  %v703 = vunpack.c.l.b16 %v223
  %v704 = vunpack.c.l.b16 %v224
  %v705 = vunpack.c.l.b16 %v225
  %v706 = vunpack.c.l.b16 %v226
  %v707 = vunpack.c.l.b16 %v227
  %v708 = vunpack.c.l.b16 %v228
  %v709 = vunpack.c.l.b16 %v229
  %v710 = vunpack.c.l.b16 %v230
  %v711 = vunpack.c.l.b16 %v231
  %v712 = vunpack.c.l.b16 %v232
  %v713 = vunpack.c.l.b16 %v233
  %v714 = vunpack.c.l.b16 %v234
  %v715 = vunpack.c.l.b16 %v235
  %v716 = vunpack.c.l.b16 %v236
  %v717 = vunpack.c.l.b16 %v237
  %v718 = vunpack.c.l.b16 %v238
  %v719 = vunpack.c.l.b16 %v239
  %v720 = vunpack.c.l.b16 %v240
  %v721 = vunpack.c.l.b16 %v241
  %v722 = vunpack.c.l.b16 %v242
  %v723 = vunpack.c.l.b16 %v243
  %v724 = vunpack.c.l.b16 %v244
  %v725 = vunpack.c.l.b16 %v245
  %v726 = vunpack.c.l.b16 %v246
  %v727 = vunpack.c.l.b16 %v247
  %v728 = vunpack.c.l.b16 %v248
  %v729 = vunpack.c.l.b16 %v249
  %v730 = vunpack.c.l.b16 %v250
  %v731 = vunpack.c.l.b16 %v251
  %v732 = vunpack.c.l.b16 %v252
  %v733 = vunpack.c.l.b16 %v253
  %v734 = vunpack.c.l.b16 %v254
  %v735 = vunpack.c.l.b16 %v255
  %v736 = vunpack.c.l.b16 %v256
  %v737 = vunpack.c.l.b16 %v257
  %v738 = vunpack.c.l.b16 %v258
  %v739 = vunpack.c.l.b16 %v259
  %v740 = vunpack.c.l.b16 %v260
  %v741 = vunpack.c.l.b16 %v261
  %v742 = vpack.c.b16 %v695, %v694
  %v743 = vpack.c.b16 %v697, %v696
  %v744 = vpack.c.b16 %v699, %v698
  %v745 = vpack.c.b16 %v701, %v700
  %v746 = vpack.c.b16 %v703, %v702
  %v747 = vpack.c.b16 %v705, %v704
  %v748 = vpack.c.b16 %v707, %v706
  %v749 = vpack.c.b16 %v709, %v708
  %v750 = vpack.c.b16 %v711, %v710
  %v751 = vpack.c.b16 %v713, %v712
  %v752 = vpack.c.b16 %v715, %v714
  %v753 = vpack.c.b16 %v717, %v716
  %v754 = vpack.c.b16 %v719, %v718
  %v755 = vpack.c.b16 %v721, %v720
  %v756 = vpack.c.b16 %v723, %v722
  %v757 = vpack.c.b16 %v725, %v724
  %v758 = vpack.c.b16 %v727, %v726
  %v759 = vpack.c.b16 %v729, %v728
  %v760 = vpack.c.b16 %v731, %v730
  %v761 = vpack.c.b16 %v733, %v732
  %v762 = vpack.c.b16 %v735, %v734
  %v763 = vpack.c.b16 %v737, %v736
  %v764 = vpack.c.b16 %v739, %v738
  %v765 = vpack.c.b16 %v741, %v740
  %790 = vmatprep.subr.bf16.mxu0 0
  %791 = vmatpush1.bf16.msra.mxu0 %v742
  %792 = vmatprep.subr.bf16.mxu0 0
  %793 = vmatpush1.bf16.msra.mxu0 %v743
  %794 = vmatprep.subr.bf16.mxu0 0
  %795 = vmatpush1.bf16.msra.mxu0 %v744
  %796 = vmatprep.subr.bf16.mxu0 0
  %797 = vmatpush1.bf16.msra.mxu0 %v745
  %798 = vmatprep.subr.bf16.mxu0 0
  %799 = vmatpush1.bf16.msra.mxu0 %v746
  %800 = vmatprep.subr.bf16.mxu0 0
  %801 = vmatpush1.bf16.msra.mxu0 %v747
  %802 = vmatprep.subr.bf16.mxu0 0
  %803 = vmatpush1.bf16.msra.mxu0 %v748
  %804 = vmatprep.subr.bf16.mxu0 0
  %805 = vmatpush1.bf16.msra.mxu0 %v749
  %806 = vmatprep.subr.bf16.mxu0 0
  %807 = vmatpush1.bf16.msra.mxu0 %v750
  %808 = vmatprep.subr.bf16.mxu0 0
  %809 = vmatpush1.bf16.msra.mxu0 %v751
  %810 = vmatprep.subr.bf16.mxu0 0
  %811 = vmatpush1.bf16.msra.mxu0 %v752
  %812 = vmatprep.subr.bf16.mxu0 0
  %813 = vmatpush1.bf16.msra.mxu0 %v753
  %814 = vmatprep.subr.bf16.mxu0 0
  %815 = vmatpush1.bf16.msra.mxu0 %v754
  %816 = vmatprep.subr.bf16.mxu0 0
  %817 = vmatpush1.bf16.msra.mxu0 %v755
  %818 = vmatprep.subr.bf16.mxu0 0
  %819 = vmatpush1.bf16.msra.mxu0 %v756
  %820 = vmatprep.subr.bf16.mxu0 0
  %821 = vmatpush1.bf16.msra.mxu0 %v757
  %822 = vmatprep.mubr.bf16.mxu0 %v503
  %823 = vmatmul.mubr.bf16.gmra.mrb[0].mxu0 %v502
  %v824 = vpop.f32.mrb[0].mxu0
  %v825 = vadd.f32 0.0, %v824
  %v826 = vpop.f32.mrb[0].mxu0
  %v827 = vpop.f32.mrb[0].mxu0
  %v828 = vadd.f32 0.0, %v827
  %v829 = vpop.f32.mrb[0].mxu0
  %830 = vmatprep.mubr.bf16.mxu0 %v506
  %831 = vmatmul.mubr.bf16.gmra.mrb[0].mxu0 %v505
  %v832 = vpop.f32.mrb[0].mxu0
  %v833 = vadd.f32 0.0, %v832
  %v834 = vpop.f32.mrb[0].mxu0
  %v835 = vpop.f32.mrb[0].mxu0
  %v836 = vadd.f32 0.0, %v835
  %v837 = vpop.f32.mrb[0].mxu0
  %838 = vmatprep.mubr.bf16.mxu0 %v509
  %839 = vmatmul.mubr.bf16.gmra.mrb[0].mxu0 %v508
  %v840 = vpop.f32.mrb[0].mxu0
  %v841 = vadd.f32 0.0, %v840
  %v842 = vpop.f32.mrb[0].mxu0
  %v843 = vpop.f32.mrb[0].mxu0
  %v844 = vadd.f32 0.0, %v843
  %v845 = vpop.f32.mrb[0].mxu0
  %846 = vmatprep.mubr.bf16.mxu0 %v512
  %847 = vmatmul.mubr.bf16.gmra.mrb[0].mxu0 %v511
  %v848 = vpop.f32.mrb[0].mxu0
  %v849 = vadd.f32 0.0, %v848
  %v850 = vpop.f32.mrb[0].mxu0
  %v851 = vpop.f32.mrb[0].mxu0
  %v852 = vadd.f32 0.0, %v851
  %v853 = vpop.f32.mrb[0].mxu0
  %854 = vmatprep.mubr.bf16.mxu0 %v515
  %855 = vmatmul.mubr.bf16.gmra.mrb[0].mxu0 %v514
  %v856 = vpop.f32.mrb[0].mxu0
  %v857 = vadd.f32 0.0, %v856
  %v858 = vpop.f32.mrb[0].mxu0
  %v859 = vpop.f32.mrb[0].mxu0
  %v860 = vadd.f32 0.0, %v859
  %v861 = vpop.f32.mrb[0].mxu0
  %862 = vmatprep.mubr.bf16.mxu0 %v518
  %863 = vmatmul.mubr.bf16.gmra.mrb[0].mxu0 %v517
  %v864 = vpop.f32.mrb[0].mxu0
  %v865 = vadd.f32 0.0, %v864
  %v866 = vpop.f32.mrb[0].mxu0
  %v867 = vpop.f32.mrb[0].mxu0
  %v868 = vadd.f32 0.0, %v867
  %v869 = vpop.f32.mrb[0].mxu0
  %870 = vmatprep.mubr.bf16.mxu0 %v521
  %871 = vmatmul.mubr.bf16.gmra.mrb[0].mxu0 %v520
  %v872 = vpop.f32.mrb[0].mxu0
  %v873 = vadd.f32 0.0, %v872
  %v874 = vpop.f32.mrb[0].mxu0
  %v875 = vpop.f32.mrb[0].mxu0
  %v876 = vadd.f32 0.0, %v875
  %v877 = vpop.f32.mrb[0].mxu0
  %878 = vmatprep.mubr.bf16.mxu0 %v524
  %879 = vmatmul.mubr.bf16.gmra.mrb[0].mxu0 %v523
  %v880 = vpop.f32.mrb[0].mxu0
  %v881 = vadd.f32 0.0, %v880
  %v882 = vpop.f32.mrb[0].mxu0
  %v883 = vpop.f32.mrb[0].mxu0
  %v884 = vadd.f32 0.0, %v883
  %v885 = vpop.f32.mrb[0].mxu0
  %886 = vmatprep.mubr.bf16.mxu0 %v527
  %887 = vmatmul.mubr.bf16.gmra.mrb[0].mxu0 %v526
  %v888 = vpop.f32.mrb[0].mxu0
  %v889 = vadd.f32 0.0, %v888
  %v890 = vpop.f32.mrb[0].mxu0
  %v891 = vpop.f32.mrb[0].mxu0
  %v892 = vadd.f32 0.0, %v891
  %v893 = vpop.f32.mrb[0].mxu0
  %894 = vmatprep.mubr.bf16.mxu0 %v530
  %895 = vmatmul.mubr.bf16.gmra.mrb[0].mxu0 %v529
  %v896 = vpop.f32.mrb[0].mxu0
  %v897 = vadd.f32 0.0, %v896
  %v898 = vpop.f32.mrb[0].mxu0
  %v899 = vpop.f32.mrb[0].mxu0
  %v900 = vadd.f32 0.0, %v899
  %v901 = vpop.f32.mrb[0].mxu0
  %902 = vmatprep.mubr.bf16.mxu0 %v533
  %903 = vmatmul.mubr.bf16.gmra.mrb[0].mxu0 %v532
  %v904 = vpop.f32.mrb[0].mxu0
  %v905 = vadd.f32 0.0, %v904
  %v906 = vpop.f32.mrb[0].mxu0
  %v907 = vpop.f32.mrb[0].mxu0
  %v908 = vadd.f32 0.0, %v907
  %v909 = vpop.f32.mrb[0].mxu0
  %910 = vmatprep.mubr.bf16.mxu0 %v536
  %911 = vmatmul.mubr.bf16.gmra.mrb[0].mxu0 %v535
  %v912 = vpop.f32.mrb[0].mxu0
  %v913 = vadd.f32 0.0, %v912
  %v914 = vpop.f32.mrb[0].mxu0
  %v915 = vpop.f32.mrb[0].mxu0
  %v916 = vadd.f32 0.0, %v915
  %v917 = vpop.f32.mrb[0].mxu0
  %918 = vmatprep.mubr.bf16.mxu0 %v539
  %919 = vmatmul.mubr.bf16.gmra.mrb[0].mxu0 %v538
  %v920 = vpop.f32.mrb[0].mxu0
  %v921 = vadd.f32 0.0, %v920
  %v922 = vpop.f32.mrb[0].mxu0
  %v923 = vpop.f32.mrb[0].mxu0
  %v924 = vadd.f32 0.0, %v923
  %v925 = vpop.f32.mrb[0].mxu0
  %926 = vmatprep.mubr.bf16.mxu0 %v542
  %927 = vmatmul.mubr.bf16.gmra.mrb[0].mxu0 %v541
  %v928 = vpop.f32.mrb[0].mxu0
  %v929 = vadd.f32 0.0, %v928
  %v930 = vpop.f32.mrb[0].mxu0
  %v931 = vpop.f32.mrb[0].mxu0
  %v932 = vadd.f32 0.0, %v931
  %v933 = vpop.f32.mrb[0].mxu0
  %934 = vmatprep.mubr.bf16.mxu0 %v545
  %935 = vmatmul.mubr.bf16.gmra.mrb[0].mxu0 %v544
  %v936 = vpop.f32.mrb[0].mxu0
  %v937 = vadd.f32 0.0, %v936
  %v938 = vpop.f32.mrb[0].mxu0
  %v939 = vpop.f32.mrb[0].mxu0
  %v940 = vadd.f32 0.0, %v939
  %v941 = vpop.f32.mrb[0].mxu0
  %942 = vmatprep.mubr.bf16.mxu0 %v548
  %943 = vmatmul.mubr.bf16.gmra.mrb[0].mxu0 %v547
  %v944 = vpop.f32.mrb[0].mxu0
  %v945 = vadd.f32 0.0, %v944
  %v946 = vpop.f32.mrb[0].mxu0
  %v947 = vpop.f32.mrb[0].mxu0
  %v948 = vadd.f32 0.0, %v947
  %v949 = vpop.f32.mrb[0].mxu0
  %950 = vmatprep.mubr.bf16.mxu0 %v551
  %951 = vmatmul.mubr.bf16.gmra.mrb[0].mxu0 %v550
  %v952 = vpop.f32.mrb[0].mxu0
  %v953 = vadd.f32 0.0, %v952
  %v954 = vpop.f32.mrb[0].mxu0
  %v955 = vpop.f32.mrb[0].mxu0
  %v956 = vadd.f32 0.0, %v955
  %v957 = vpop.f32.mrb[0].mxu0
  %958 = vmatprep.mubr.bf16.mxu0 %v554
  %959 = vmatmul.mubr.bf16.gmra.mrb[0].mxu0 %v553
  %v960 = vpop.f32.mrb[0].mxu0
  %v961 = vadd.f32 0.0, %v960
  %v962 = vpop.f32.mrb[0].mxu0
  %v963 = vpop.f32.mrb[0].mxu0
  %v964 = vadd.f32 0.0, %v963
  %v965 = vpop.f32.mrb[0].mxu0
  %966 = vmatprep.mubr.bf16.mxu0 %v557
  %967 = vmatmul.mubr.bf16.gmra.mrb[0].mxu0 %v556
  %v968 = vpop.f32.mrb[0].mxu0
  %v969 = vadd.f32 0.0, %v968
  %v970 = vpop.f32.mrb[0].mxu0
  %v971 = vpop.f32.mrb[0].mxu0
  %v972 = vadd.f32 0.0, %v971
  %v973 = vpop.f32.mrb[0].mxu0
  %974 = vmatprep.mubr.bf16.mxu0 %v560
  %975 = vmatmul.mubr.bf16.gmra.mrb[0].mxu0 %v559
  %v976 = vpop.f32.mrb[0].mxu0
  %v977 = vadd.f32 0.0, %v976
  %v978 = vpop.f32.mrb[0].mxu0
  %v979 = vpop.f32.mrb[0].mxu0
  %v980 = vadd.f32 0.0, %v979
  %v981 = vpop.f32.mrb[0].mxu0
  %982 = vmatprep.mubr.bf16.mxu0 %v563
  %983 = vmatmul.mubr.bf16.gmra.mrb[0].mxu0 %v562
  %v984 = vpop.f32.mrb[0].mxu0
  %v985 = vadd.f32 0.0, %v984
  %v986 = vpop.f32.mrb[0].mxu0
  %v987 = vpop.f32.mrb[0].mxu0
  %v988 = vadd.f32 0.0, %v987
  %v989 = vpop.f32.mrb[0].mxu0
  %990 = vmatprep.mubr.bf16.mxu0 %v566
  %991 = vmatmul.mubr.bf16.gmra.mrb[0].mxu0 %v565
  %v992 = vpop.f32.mrb[0].mxu0
  %v993 = vadd.f32 0.0, %v992
  %v994 = vpop.f32.mrb[0].mxu0
  %v995 = vpop.f32.mrb[0].mxu0
  %v996 = vadd.f32 0.0, %v995
  %v997 = vpop.f32.mrb[0].mxu0
  %998 = vmatprep.mubr.bf16.mxu0 %v569
  %999 = vmatmul.mubr.bf16.gmra.mrb[0].mxu0 %v568
  %v1000 = vpop.f32.mrb[0].mxu0
  %v1001 = vadd.f32 0.0, %v1000
  %v1002 = vpop.f32.mrb[0].mxu0
  %v1003 = vpop.f32.mrb[0].mxu0
  %v1004 = vadd.f32 0.0, %v1003
  %v1005 = vpop.f32.mrb[0].mxu0
  %1006 = vmatprep.mubr.bf16.mxu0 %v572
  %1007 = vmatmul.mubr.bf16.gmra.mrb[0].mxu0 %v571
  %v1008 = vpop.f32.mrb[0].mxu0
  %v1009 = vadd.f32 0.0, %v1008
  %v1010 = vpop.f32.mrb[0].mxu0
  %v1011 = vpop.f32.mrb[0].mxu0
  %v1012 = vadd.f32 0.0, %v1011
  %v1013 = vpop.f32.mrb[0].mxu0
  %1014 = vdwg.mxu0
  %1015 = vmatprep.subr.bf16.mxu0 0
  %1016 = vmatpush1.bf16.msra.mxu0 %v758
  %1017 = vmatprep.subr.bf16.mxu0 0
  %1018 = vmatpush1.bf16.msra.mxu0 %v759
  %1019 = vmatprep.subr.bf16.mxu0 0
  %1020 = vmatpush1.bf16.msra.mxu0 %v760
  %1021 = vmatprep.subr.bf16.mxu0 0
  %1022 = vmatpush1.bf16.msra.mxu0 %v761
  %1023 = vmatprep.subr.bf16.mxu0 0
  %1024 = vmatpush1.bf16.msra.mxu0 %v762
  %1025 = vmatprep.subr.bf16.mxu0 0
  %1026 = vmatpush1.bf16.msra.mxu0 %v763
  %1027 = vmatprep.subr.bf16.mxu0 0
  %1028 = vmatpush1.bf16.msra.mxu0 %v764
  %1029 = vmatprep.subr.bf16.mxu0 0
  %1030 = vmatpush1.bf16.msra.mxu0 %v765
  %1031 = vmatprep.subr.bf16.mxu0 0
  %1032 = vmatpush1.bf16.msra.mxu0 0
  %1033 = vmatprep.subr.bf16.mxu0 0
  %1034 = vmatpush1.bf16.msra.mxu0 0
  %1035 = vmatprep.subr.bf16.mxu0 0
  %1036 = vmatpush1.bf16.msra.mxu0 0
  %1037 = vmatprep.subr.bf16.mxu0 0
  %1038 = vmatpush1.bf16.msra.mxu0 0
  %1039 = vmatprep.subr.bf16.mxu0 0
  %1040 = vmatpush1.bf16.msra.mxu0 0
  %1041 = vmatprep.subr.bf16.mxu0 0
  %1042 = vmatpush1.bf16.msra.mxu0 0
  %1043 = vmatprep.subr.bf16.mxu0 0
  %1044 = vmatpush1.bf16.msra.mxu0 0
  %1045 = vmatprep.subr.bf16.mxu0 0
  %1046 = vmatpush1.bf16.msra.mxu0 0
  %1047 = vmatprep.mubr.bf16.mxu0 0
  %1048 = vmatmul.mubr.bf16.gmra.mrb[0].mxu0 %v504
  %v1049 = vpop.f32.mrb[0].mxu0
  %v1050 = vadd.f32 %v825, %v1049
  %v1051 = vpop.f32.mrb[0].mxu0
  %v1052 = vpop.f32.mrb[0].mxu0
  %v1053 = vadd.f32 %v828, %v1052
  %v1054 = vpop.f32.mrb[0].mxu0
  %1055 = vmatprep.mubr.bf16.mxu0 0
  %1056 = vmatmul.mubr.bf16.gmra.mrb[0].mxu0 %v507
  %v1057 = vpop.f32.mrb[0].mxu0
  %v1058 = vadd.f32 %v833, %v1057
  %v1059 = vpop.f32.mrb[0].mxu0
  %v1060 = vpop.f32.mrb[0].mxu0
  %v1061 = vadd.f32 %v836, %v1060
  %v1062 = vpop.f32.mrb[0].mxu0
  %1063 = vmatprep.mubr.bf16.mxu0 0
  %1064 = vmatmul.mubr.bf16.gmra.mrb[0].mxu0 %v510
  %v1065 = vpop.f32.mrb[0].mxu0
  %v1066 = vadd.f32 %v841, %v1065
  %v1067 = vpop.f32.mrb[0].mxu0
  %v1068 = vpop.f32.mrb[0].mxu0
  %v1069 = vadd.f32 %v844, %v1068
  %v1070 = vpop.f32.mrb[0].mxu0
  %1071 = vmatprep.mubr.bf16.mxu0 0
  %1072 = vmatmul.mubr.bf16.gmra.mrb[0].mxu0 %v513
  %v1073 = vpop.f32.mrb[0].mxu0
  %v1074 = vadd.f32 %v849, %v1073
  %v1075 = vpop.f32.mrb[0].mxu0
  %v1076 = vpop.f32.mrb[0].mxu0
  %v1077 = vadd.f32 %v852, %v1076
  %v1078 = vpop.f32.mrb[0].mxu0
  %1079 = vmatprep.mubr.bf16.mxu0 0
  %1080 = vmatmul.mubr.bf16.gmra.mrb[0].mxu0 %v516
  %v1081 = vpop.f32.mrb[0].mxu0
  %v1082 = vadd.f32 %v857, %v1081
  %v1083 = vpop.f32.mrb[0].mxu0
  %v1084 = vpop.f32.mrb[0].mxu0
  %v1085 = vadd.f32 %v860, %v1084
  %v1086 = vpop.f32.mrb[0].mxu0
  %1087 = vmatprep.mubr.bf16.mxu0 0
  %1088 = vmatmul.mubr.bf16.gmra.mrb[0].mxu0 %v519
  %v1089 = vpop.f32.mrb[0].mxu0
  %v1090 = vadd.f32 %v865, %v1089
  %v1091 = vpop.f32.mrb[0].mxu0
  %v1092 = vpop.f32.mrb[0].mxu0
  %v1093 = vadd.f32 %v868, %v1092
  %v1094 = vpop.f32.mrb[0].mxu0
  %1095 = vmatprep.mubr.bf16.mxu0 0
  %1096 = vmatmul.mubr.bf16.gmra.mrb[0].mxu0 %v522
  %v1097 = vpop.f32.mrb[0].mxu0
  %v1098 = vadd.f32 %v873, %v1097
  %v1099 = vpop.f32.mrb[0].mxu0
  %v1100 = vpop.f32.mrb[0].mxu0
  %v1101 = vadd.f32 %v876, %v1100
  %v1102 = vpop.f32.mrb[0].mxu0
  %1103 = vmatprep.mubr.bf16.mxu0 0
  %1104 = vmatmul.mubr.bf16.gmra.mrb[0].mxu0 %v525
  %v1105 = vpop.f32.mrb[0].mxu0
  %v1106 = vadd.f32 %v881, %v1105
  %v1107 = vpop.f32.mrb[0].mxu0
  %v1108 = vpop.f32.mrb[0].mxu0
  %v1109 = vadd.f32 %v884, %v1108
  %v1110 = vpop.f32.mrb[0].mxu0
  %1111 = vmatprep.mubr.bf16.mxu0 0
  %1112 = vmatmul.mubr.bf16.gmra.mrb[0].mxu0 %v528
  %v1113 = vpop.f32.mrb[0].mxu0
  %v1114 = vadd.f32 %v889, %v1113
  %v1115 = vpop.f32.mrb[0].mxu0
  %v1116 = vpop.f32.mrb[0].mxu0
  %v1117 = vadd.f32 %v892, %v1116
  %v1118 = vpop.f32.mrb[0].mxu0
  %1119 = vmatprep.mubr.bf16.mxu0 0
  %1120 = vmatmul.mubr.bf16.gmra.mrb[0].mxu0 %v531
  %v1121 = vpop.f32.mrb[0].mxu0
  %v1122 = vadd.f32 %v897, %v1121
  %v1123 = vpop.f32.mrb[0].mxu0
  %v1124 = vpop.f32.mrb[0].mxu0
  %v1125 = vadd.f32 %v900, %v1124
  %v1126 = vpop.f32.mrb[0].mxu0
  %1127 = vmatprep.mubr.bf16.mxu0 0
  %1128 = vmatmul.mubr.bf16.gmra.mrb[0].mxu0 %v534
  %v1129 = vpop.f32.mrb[0].mxu0
  %v1130 = vadd.f32 %v905, %v1129
  %v1131 = vpop.f32.mrb[0].mxu0
  %v1132 = vpop.f32.mrb[0].mxu0
  %v1133 = vadd.f32 %v908, %v1132
  %v1134 = vpop.f32.mrb[0].mxu0
  %1135 = vmatprep.mubr.bf16.mxu0 0
  %1136 = vmatmul.mubr.bf16.gmra.mrb[0].mxu0 %v537
  %v1137 = vpop.f32.mrb[0].mxu0
  %v1138 = vadd.f32 %v913, %v1137
  %v1139 = vpop.f32.mrb[0].mxu0
  %v1140 = vpop.f32.mrb[0].mxu0
  %v1141 = vadd.f32 %v916, %v1140
  %v1142 = vpop.f32.mrb[0].mxu0
  %1143 = vmatprep.mubr.bf16.mxu0 0
  %1144 = vmatmul.mubr.bf16.gmra.mrb[0].mxu0 %v540
  %v1145 = vpop.f32.mrb[0].mxu0
  %v1146 = vadd.f32 %v921, %v1145
  %v1147 = vpop.f32.mrb[0].mxu0
  %v1148 = vpop.f32.mrb[0].mxu0
  %v1149 = vadd.f32 %v924, %v1148
  %v1150 = vpop.f32.mrb[0].mxu0
  %1151 = vmatprep.mubr.bf16.mxu0 0
  %1152 = vmatmul.mubr.bf16.gmra.mrb[0].mxu0 %v543
  %v1153 = vpop.f32.mrb[0].mxu0
  %v1154 = vadd.f32 %v929, %v1153
  %v1155 = vpop.f32.mrb[0].mxu0
  %v1156 = vpop.f32.mrb[0].mxu0
  %v1157 = vadd.f32 %v932, %v1156
  %v1158 = vpop.f32.mrb[0].mxu0
  %1159 = vmatprep.mubr.bf16.mxu0 0
  %1160 = vmatmul.mubr.bf16.gmra.mrb[0].mxu0 %v546
  %v1161 = vpop.f32.mrb[0].mxu0
  %v1162 = vadd.f32 %v937, %v1161
  %v1163 = vpop.f32.mrb[0].mxu0
  %v1164 = vpop.f32.mrb[0].mxu0
  %v1165 = vadd.f32 %v940, %v1164
  %v1166 = vpop.f32.mrb[0].mxu0
  %1167 = vmatprep.mubr.bf16.mxu0 0
  %1168 = vmatmul.mubr.bf16.gmra.mrb[0].mxu0 %v549
  %v1169 = vpop.f32.mrb[0].mxu0
  %v1170 = vadd.f32 %v945, %v1169
  %v1171 = vpop.f32.mrb[0].mxu0
  %v1172 = vpop.f32.mrb[0].mxu0
  %v1173 = vadd.f32 %v948, %v1172
  %v1174 = vpop.f32.mrb[0].mxu0
  %1175 = vmatprep.mubr.bf16.mxu0 0
  %1176 = vmatmul.mubr.bf16.gmra.mrb[0].mxu0 %v552
  %v1177 = vpop.f32.mrb[0].mxu0
  %v1178 = vadd.f32 %v953, %v1177
  %v1179 = vpop.f32.mrb[0].mxu0
  %v1180 = vpop.f32.mrb[0].mxu0
  %v1181 = vadd.f32 %v956, %v1180
  %v1182 = vpop.f32.mrb[0].mxu0
  %1183 = vmatprep.mubr.bf16.mxu0 0
  %1184 = vmatmul.mubr.bf16.gmra.mrb[0].mxu0 %v555
  %v1185 = vpop.f32.mrb[0].mxu0
  %v1186 = vadd.f32 %v961, %v1185
  %v1187 = vpop.f32.mrb[0].mxu0
  %v1188 = vpop.f32.mrb[0].mxu0
  %v1189 = vadd.f32 %v964, %v1188
  %v1190 = vpop.f32.mrb[0].mxu0
  %1191 = vmatprep.mubr.bf16.mxu0 0
  %1192 = vmatmul.mubr.bf16.gmra.mrb[0].mxu0 %v558
  %v1193 = vpop.f32.mrb[0].mxu0
  %v1194 = vadd.f32 %v969, %v1193
  %v1195 = vpop.f32.mrb[0].mxu0
  %v1196 = vpop.f32.mrb[0].mxu0
  %v1197 = vadd.f32 %v972, %v1196
  %v1198 = vpop.f32.mrb[0].mxu0
  %1199 = vmatprep.mubr.bf16.mxu0 0
  %1200 = vmatmul.mubr.bf16.gmra.mrb[0].mxu0 %v561
  %v1201 = vpop.f32.mrb[0].mxu0
  %v1202 = vadd.f32 %v977, %v1201
  %v1203 = vpop.f32.mrb[0].mxu0
  %v1204 = vpop.f32.mrb[0].mxu0
  %v1205 = vadd.f32 %v980, %v1204
  %v1206 = vpop.f32.mrb[0].mxu0
  %1207 = vmatprep.mubr.bf16.mxu0 0
  %1208 = vmatmul.mubr.bf16.gmra.mrb[0].mxu0 %v564
  %v1209 = vpop.f32.mrb[0].mxu0
  %v1210 = vadd.f32 %v985, %v1209
  %v1211 = vpop.f32.mrb[0].mxu0
  %v1212 = vpop.f32.mrb[0].mxu0
  %v1213 = vadd.f32 %v988, %v1212
  %v1214 = vpop.f32.mrb[0].mxu0
  %1215 = vmatprep.mubr.bf16.mxu0 0
  %1216 = vmatmul.mubr.bf16.gmra.mrb[0].mxu0 %v567
  %v1217 = vpop.f32.mrb[0].mxu0
  %v1218 = vadd.f32 %v993, %v1217
  %v1219 = vpop.f32.mrb[0].mxu0
  %v1220 = vpop.f32.mrb[0].mxu0
  %v1221 = vadd.f32 %v996, %v1220
  %v1222 = vpop.f32.mrb[0].mxu0
  %1223 = vmatprep.mubr.bf16.mxu0 0
  %1224 = vmatmul.mubr.bf16.gmra.mrb[0].mxu0 %v570
  %v1225 = vpop.f32.mrb[0].mxu0
  %v1226 = vadd.f32 %v1001, %v1225
  %v1227 = vpop.f32.mrb[0].mxu0
  %v1228 = vpop.f32.mrb[0].mxu0
  %v1229 = vadd.f32 %v1004, %v1228
  %v1230 = vpop.f32.mrb[0].mxu0
  %1231 = vmatprep.mubr.bf16.mxu0 0
  %1232 = vmatmul.mubr.bf16.gmra.mrb[0].mxu0 %v573
  %v1233 = vpop.f32.mrb[0].mxu0
  %v1234 = vadd.f32 %v1009, %v1233
  %v1235 = vpop.f32.mrb[0].mxu0
  %v1236 = vpop.f32.mrb[0].mxu0
  %v1237 = vadd.f32 %v1012, %v1236
  %v1238 = vpop.f32.mrb[0].mxu0
  %1239 = vdwg.mxu0
  %v1240 = vadd.f32 %v70, %v1050
  %v1241 = vadd.f32 %v71, %v1053
  %v1242 = vadd.f32 %v72, %v1058
  %v1243 = vadd.f32 %v73, %v1061
  %v1244 = vadd.f32 %v74, %v1066
  %v1245 = vadd.f32 %v75, %v1069
  %v1246 = vadd.f32 %v76, %v1074
  %v1247 = vadd.f32 %v77, %v1077
  %v1248 = vadd.f32 %v78, %v1082
  %v1249 = vadd.f32 %v79, %v1085
  %v1250 = vadd.f32 %v80, %v1090
  %v1251 = vadd.f32 %v81, %v1093
  %v1252 = vadd.f32 %v82, %v1098
  %v1253 = vadd.f32 %v83, %v1101
  %v1254 = vadd.f32 %v84, %v1106
  %v1255 = vadd.f32 %v85, %v1109
  %v1256 = vadd.f32 %v86, %v1114
  %v1257 = vadd.f32 %v87, %v1117
  %v1258 = vadd.f32 %v88, %v1122
  %v1259 = vadd.f32 %v89, %v1125
  %v1260 = vadd.f32 %v90, %v1130
  %v1261 = vadd.f32 %v91, %v1133
  %v1262 = vadd.f32 %v92, %v1138
  %v1263 = vadd.f32 %v93, %v1141
  %v1264 = vadd.f32 %v94, %v1146
  %v1265 = vadd.f32 %v95, %v1149
  %v1266 = vadd.f32 %v96, %v1154
  %v1267 = vadd.f32 %v97, %v1157
  %v1268 = vadd.f32 %v98, %v1162
  %v1269 = vadd.f32 %v99, %v1165
  %v1270 = vadd.f32 %v100, %v1170
  %v1271 = vadd.f32 %v101, %v1173
  %v1272 = vadd.f32 %v102, %v1178
  %v1273 = vadd.f32 %v103, %v1181
  %v1274 = vadd.f32 %v104, %v1186
  %v1275 = vadd.f32 %v105, %v1189
  %v1276 = vadd.f32 %v106, %v1194
  %v1277 = vadd.f32 %v107, %v1197
  %v1278 = vadd.f32 %v108, %v1202
  %v1279 = vadd.f32 %v109, %v1205
  %v1280 = vadd.f32 %v110, %v1210
  %v1281 = vadd.f32 %v111, %v1213
  %v1282 = vadd.f32 %v112, %v1218
  %v1283 = vadd.f32 %v113, %v1221
  %v1284 = vadd.f32 %v114, %v1226
  %v1285 = vadd.f32 %v115, %v1229
  %v1286 = vadd.f32 %v116, %v1234
  %v1287 = vadd.f32 %v117, %v1237
  %1288 = vst [vmem:[#allocation2] sm:$0xff] %v1240
  %1289 = vst [vmem:[#allocation2 + $0x8] sm:$0xff] %v1241
  %1290 = vst [vmem:[#allocation2 + $0x10] sm:$0xff] %v1242
  %1291 = vst [vmem:[#allocation2 + $0x18] sm:$0xff] %v1243
  %1292 = vst [vmem:[#allocation2 + $0x20] sm:$0xff] %v1244
  %1293 = vst [vmem:[#allocation2 + $0x28] sm:$0xff] %v1245
  %1294 = vst [vmem:[#allocation2 + $0x30] sm:$0xff] %v1246
  %1295 = vst [vmem:[#allocation2 + $0x38] sm:$0xff] %v1247
  %1296 = vst [vmem:[#allocation2 + $0x40] sm:$0xff] %v1248
  %1297 = vst [vmem:[#allocation2 + $0x48] sm:$0xff] %v1249
  %1298 = vst [vmem:[#allocation2 + $0x50] sm:$0xff] %v1250
  %1299 = vst [vmem:[#allocation2 + $0x58] sm:$0xff] %v1251
  %1300 = vst [vmem:[#allocation2 + $0x60] sm:$0xff] %v1252
  %1301 = vst [vmem:[#allocation2 + $0x68] sm:$0xff] %v1253
  %1302 = vst [vmem:[#allocation2 + $0x70] sm:$0xff] %v1254
  %1303 = vst [vmem:[#allocation2 + $0x78] sm:$0xff] %v1255
  %1304 = vst [vmem:[#allocation2 + $0x80] sm:$0xff] %v1256
  %1305 = vst [vmem:[#allocation2 + $0x88] sm:$0xff] %v1257
  %1306 = vst [vmem:[#allocation2 + $0x90] sm:$0xff] %v1258
  %1307 = vst [vmem:[#allocation2 + $0x98] sm:$0xff] %v1259
  %1308 = vst [vmem:[#allocation2 + $0xa0] sm:$0xff] %v1260
  %1309 = vst [vmem:[#allocation2 + $0xa8] sm:$0xff] %v1261
  %1310 = vst [vmem:[#allocation2 + $0xb0] sm:$0xff] %v1262
  %1311 = vst [vmem:[#allocation2 + $0xb8] sm:$0xff] %v1263
  %1312 = vst [vmem:[#allocation2 + $0xc0] sm:$0xff] %v1264
  %1313 = vst [vmem:[#allocation2 + $0xc8] sm:$0xff] %v1265
  %1314 = vst [vmem:[#allocation2 + $0xd0] sm:$0xff] %v1266
  %1315 = vst [vmem:[#allocation2 + $0xd8] sm:$0xff] %v1267
  %1316 = vst [vmem:[#allocation2 + $0xe0] sm:$0xff] %v1268
  %1317 = vst [vmem:[#allocation2 + $0xe8] sm:$0xff] %v1269
  %1318 = vst [vmem:[#allocation2 + $0xf0] sm:$0xff] %v1270
  %1319 = vst [vmem:[#allocation2 + $0xf8] sm:$0xff] %v1271
  %1320 = vst [vmem:[#allocation2 + $0x100] sm:$0xff] %v1272
  %1321 = vst [vmem:[#allocation2 + $0x108] sm:$0xff] %v1273
  %1322 = vst [vmem:[#allocation2 + $0x110] sm:$0xff] %v1274
  %1323 = vst [vmem:[#allocation2 + $0x118] sm:$0xff] %v1275
  %1324 = vst [vmem:[#allocation2 + $0x120] sm:$0xff] %v1276
  %1325 = vst [vmem:[#allocation2 + $0x128] sm:$0xff] %v1277
  %1326 = vst [vmem:[#allocation2 + $0x130] sm:$0xff] %v1278
  %1327 = vst [vmem:[#allocation2 + $0x138] sm:$0xff] %v1279
  %1328 = vst [vmem:[#allocation2 + $0x140] sm:$0xff] %v1280
  %1329 = vst [vmem:[#allocation2 + $0x148] sm:$0xff] %v1281
  %1330 = vst [vmem:[#allocation2 + $0x150] sm:$0xff] %v1282
  %1331 = vst [vmem:[#allocation2 + $0x158] sm:$0xff] %v1283
  %1332 = vst [vmem:[#allocation2 + $0x160] sm:$0xff] %v1284
  %1333 = vst [vmem:[#allocation2 + $0x168] sm:$0xff] %v1285
  %1334 = vst [vmem:[#allocation2 + $0x170] sm:$0xff] %v1286
  %1335 = vst [vmem:[#allocation2 + $0x178] sm:$0xff] %v1287
  // Predicated region
  $region22: #{simple_gnn_pallas.3} parent=0 // pred_check
    %p1336 = pneg %p18
  $region23: #{simple_gnn_pallas.3} parent=0 // pred_check_branch
    %1338 = sbr.rel (%p1336) target = $region25
  $region24: #{simple_gnn_pallas.3} parent=0 // pred_region
    %v1339 = vld [vmem:[#allocation2] sm:$0xff]
    %v1340 = vld [vmem:[#allocation2 + $0x8] sm:$0xff]
    %v1341 = vld [vmem:[#allocation2 + $0x10] sm:$0xff]
    %v1342 = vld [vmem:[#allocation2 + $0x18] sm:$0xff]
    %v1343 = vld [vmem:[#allocation2 + $0x20] sm:$0xff]
    %v1344 = vld [vmem:[#allocation2 + $0x28] sm:$0xff]
    %v1345 = vld [vmem:[#allocation2 + $0x30] sm:$0xff]
    %v1346 = vld [vmem:[#allocation2 + $0x38] sm:$0xff]
    %v1347 = vld [vmem:[#allocation2 + $0x40] sm:$0xff]
    %v1348 = vld [vmem:[#allocation2 + $0x48] sm:$0xff]
    %v1349 = vld [vmem:[#allocation2 + $0x50] sm:$0xff]
    %v1350 = vld [vmem:[#allocation2 + $0x58] sm:$0xff]
    %v1351 = vld [vmem:[#allocation2 + $0x60] sm:$0xff]
    %v1352 = vld [vmem:[#allocation2 + $0x68] sm:$0xff]
    %v1353 = vld [vmem:[#allocation2 + $0x70] sm:$0xff]
    %v1354 = vld [vmem:[#allocation2 + $0x78] sm:$0xff]
    %v1355 = vld [vmem:[#allocation2 + $0x80] sm:$0xff]
    %v1356 = vld [vmem:[#allocation2 + $0x88] sm:$0xff]
    %v1357 = vld [vmem:[#allocation2 + $0x90] sm:$0xff]
    %v1358 = vld [vmem:[#allocation2 + $0x98] sm:$0xff]
    %v1359 = vld [vmem:[#allocation2 + $0xa0] sm:$0xff]
    %v1360 = vld [vmem:[#allocation2 + $0xa8] sm:$0xff]
    %v1361 = vld [vmem:[#allocation2 + $0xb0] sm:$0xff]
    %v1362 = vld [vmem:[#allocation2 + $0xb8] sm:$0xff]
    %v1363 = vld [vmem:[#allocation2 + $0xc0] sm:$0xff]
    %v1364 = vld [vmem:[#allocation2 + $0xc8] sm:$0xff]
    %v1365 = vld [vmem:[#allocation2 + $0xd0] sm:$0xff]
    %v1366 = vld [vmem:[#allocation2 + $0xd8] sm:$0xff]
    %v1367 = vld [vmem:[#allocation2 + $0xe0] sm:$0xff]
    %v1368 = vld [vmem:[#allocation2 + $0xe8] sm:$0xff]
    %v1369 = vld [vmem:[#allocation2 + $0xf0] sm:$0xff]
    %v1370 = vld [vmem:[#allocation2 + $0xf8] sm:$0xff]
    %v1371 = vld [vmem:[#allocation2 + $0x100] sm:$0xff]
    %v1372 = vld [vmem:[#allocation2 + $0x108] sm:$0xff]
    %v1373 = vld [vmem:[#allocation2 + $0x110] sm:$0xff]
    %v1374 = vld [vmem:[#allocation2 + $0x118] sm:$0xff]
    %v1375 = vld [vmem:[#allocation2 + $0x120] sm:$0xff]
    %v1376 = vld [vmem:[#allocation2 + $0x128] sm:$0xff]
    %v1377 = vld [vmem:[#allocation2 + $0x130] sm:$0xff]
    %v1378 = vld [vmem:[#allocation2 + $0x138] sm:$0xff]
    %v1379 = vld [vmem:[#allocation2 + $0x140] sm:$0xff]
    %v1380 = vld [vmem:[#allocation2 + $0x148] sm:$0xff]
    %v1381 = vld [vmem:[#allocation2 + $0x150] sm:$0xff]
    %v1382 = vld [vmem:[#allocation2 + $0x158] sm:$0xff]
    %v1383 = vld [vmem:[#allocation2 + $0x160] sm:$0xff]
    %v1384 = vld [vmem:[#allocation2 + $0x168] sm:$0xff]
    %v1385 = vld [vmem:[#allocation2 + $0x170] sm:$0xff]
    %v1386 = vld [vmem:[#allocation2 + $0x178] sm:$0xff]
    %v1387 = vpack.c.bf16 %v1340, %v1339
    %v1388 = vpack.c.bf16 %v1342, %v1341
    %v1389 = vpack.c.bf16 %v1344, %v1343
    %v1390 = vpack.c.bf16 %v1346, %v1345
    %v1391 = vpack.c.bf16 %v1348, %v1347
    %v1392 = vpack.c.bf16 %v1350, %v1349
    %v1393 = vpack.c.bf16 %v1352, %v1351
    %v1394 = vpack.c.bf16 %v1354, %v1353
    %v1395 = vpack.c.bf16 %v1356, %v1355
    %v1396 = vpack.c.bf16 %v1358, %v1357
    %v1397 = vpack.c.bf16 %v1360, %v1359
    %v1398 = vpack.c.bf16 %v1362, %v1361
    %v1399 = vpack.c.bf16 %v1364, %v1363
    %v1400 = vpack.c.bf16 %v1366, %v1365
    %v1401 = vpack.c.bf16 %v1368, %v1367
    %v1402 = vpack.c.bf16 %v1370, %v1369
    %v1403 = vpack.c.bf16 %v1372, %v1371
    %v1404 = vpack.c.bf16 %v1374, %v1373
    %v1405 = vpack.c.bf16 %v1376, %v1375
    %v1406 = vpack.c.bf16 %v1378, %v1377
    %v1407 = vpack.c.bf16 %v1380, %v1379
    %v1408 = vpack.c.bf16 %v1382, %v1381
    %v1409 = vpack.c.bf16 %v1384, %v1383
    %v1410 = vpack.c.bf16 %v1386, %v1385
    %v1411 = vld [vmem:[%s2] sm:$0xf]
    %v1412 = vld [vmem:[%s2 + $0x4] sm:$0xf]
    %v1413 = vld [vmem:[%s2 + $0x8] sm:$0xf]
    %v1414 = vld [vmem:[%s2 + $0xc] sm:$0xf]
    %v1415 = vld [vmem:[%s2 + $0x10] sm:$0xf]
    %v1416 = vld [vmem:[%s2 + $0x14] sm:$0xf]
    %v1417 = vld [vmem:[%s2 + $0x18] sm:$0xf]
    %v1418 = vld [vmem:[%s2 + $0x1c] sm:$0xf]
    %v1419 = vld [vmem:[%s2 + $0x20] sm:$0xf]
    %v1420 = vld [vmem:[%s2 + $0x24] sm:$0xf]
    %v1421 = vld [vmem:[%s2 + $0x28] sm:$0xf]
    %v1422 = vld [vmem:[%s2 + $0x2c] sm:$0xf]
    %v1423 = vld [vmem:[%s2 + $0x30] sm:$0xf]
    %v1424 = vld [vmem:[%s2 + $0x34] sm:$0xf]
    %v1425 = vld [vmem:[%s2 + $0x38] sm:$0xf]
    %v1426 = vld [vmem:[%s2 + $0x3c] sm:$0xf]
    %v1427 = vld [vmem:[%s3] sm:$0x1]
    %v1429 = vlaneseq
    %v1430 = vshrl.u32 %v1429, 7
    %v1431 = vsub.s32 0, %v1430
    %v1432 = vrot.slane %v1427, %v1431
    %v1450 = vunpack.c.l.b16 %v1411
    %v1451 = vunpack.c.l.b16 %v1412
    %v1452 = vunpack.c.l.b16 %v1413
    %v1453 = vunpack.c.l.b16 %v1414
    %v1454 = vunpack.c.l.b16 %v1415
    %v1455 = vunpack.c.l.b16 %v1416
    %v1456 = vunpack.c.l.b16 %v1417
    %v1457 = vunpack.c.l.b16 %v1418
    %v1458 = vunpack.c.l.b16 %v1419
    %v1459 = vunpack.c.l.b16 %v1420
    %v1460 = vunpack.c.l.b16 %v1421
    %v1461 = vunpack.c.l.b16 %v1422
    %v1462 = vunpack.c.l.b16 %v1423
    %v1463 = vunpack.c.l.b16 %v1424
    %v1464 = vunpack.c.l.b16 %v1425
    %v1465 = vunpack.c.l.b16 %v1426
    %v1466 = vpack.c.b16 %v1451, %v1450
    %v1467 = vpack.c.b16 %v1453, %v1452
    %v1468 = vpack.c.b16 %v1455, %v1454
    %v1469 = vpack.c.b16 %v1457, %v1456
    %v1470 = vpack.c.b16 %v1459, %v1458
    %v1471 = vpack.c.b16 %v1461, %v1460
    %v1472 = vpack.c.b16 %v1463, %v1462
    %v1473 = vpack.c.b16 %v1465, %v1464
    %1482 = vmatprep.subr.bf16.mxu0 0
    %1483 = vmatpush1.bf16.msra.mxu0 %v1466
    %1484 = vmatprep.subr.bf16.mxu0 0
    %1485 = vmatpush1.bf16.msra.mxu0 %v1467
    %1486 = vmatprep.subr.bf16.mxu0 0
    %1487 = vmatpush1.bf16.msra.mxu0 %v1468
    %1488 = vmatprep.subr.bf16.mxu0 0
    %1489 = vmatpush1.bf16.msra.mxu0 %v1469
    %1490 = vmatprep.subr.bf16.mxu0 0
    %1491 = vmatpush1.bf16.msra.mxu0 %v1470
    %1492 = vmatprep.subr.bf16.mxu0 0
    %1493 = vmatpush1.bf16.msra.mxu0 %v1471
    %1494 = vmatprep.subr.bf16.mxu0 0
    %1495 = vmatpush1.bf16.msra.mxu0 %v1472
    %1496 = vmatprep.subr.bf16.mxu0 0
    %1497 = vmatpush1.bf16.msra.mxu0 %v1473
    %1498 = vmatprep.subr.bf16.mxu0 0
    %1499 = vmatpush1.bf16.msra.mxu0 0
    %1500 = vmatprep.subr.bf16.mxu0 0
    %1501 = vmatpush1.bf16.msra.mxu0 0
    %1502 = vmatprep.subr.bf16.mxu0 0
    %1503 = vmatpush1.bf16.msra.mxu0 0
    %1504 = vmatprep.subr.bf16.mxu0 0
    %1505 = vmatpush1.bf16.msra.mxu0 0
    %1506 = vmatprep.subr.bf16.mxu0 0
    %1507 = vmatpush1.bf16.msra.mxu0 0
    %1508 = vmatprep.subr.bf16.mxu0 0
    %1509 = vmatpush1.bf16.msra.mxu0 0
    %1510 = vmatprep.subr.bf16.mxu0 0
    %1511 = vmatpush1.bf16.msra.mxu0 0
    %1512 = vmatprep.subr.bf16.mxu0 0
    %1513 = vmatpush1.bf16.msra.mxu0 0
    %1514 = vmatprep.mubr.bf16.mxu0 0
    %1515 = vmatmul.mubr.bf16.gmra.mrb[0].mxu0 %v1387
    %v1516 = vpop.f32.mrb[0].mxu0
    %v1517 = vadd.f32 %v1432, %v1516
    %v1518 = vpop.f32.mrb[0].mxu0
    %v1519 = vpop.f32.mrb[0].mxu0
    %v1520 = vadd.f32 %v1432, %v1519
    %v1521 = vpop.f32.mrb[0].mxu0
    %1522 = vmatprep.mubr.bf16.mxu0 0
    %1523 = vmatmul.mubr.bf16.gmra.mrb[0].mxu0 %v1388
    %v1524 = vpop.f32.mrb[0].mxu0
    %v1525 = vadd.f32 %v1432, %v1524
    %v1526 = vpop.f32.mrb[0].mxu0
    %v1527 = vpop.f32.mrb[0].mxu0
    %v1528 = vadd.f32 %v1432, %v1527
    %v1529 = vpop.f32.mrb[0].mxu0
    %1530 = vmatprep.mubr.bf16.mxu0 0
    %1531 = vmatmul.mubr.bf16.gmra.mrb[0].mxu0 %v1389
    %v1532 = vpop.f32.mrb[0].mxu0
    %v1533 = vadd.f32 %v1432, %v1532
    %v1534 = vpop.f32.mrb[0].mxu0
    %v1535 = vpop.f32.mrb[0].mxu0
    %v1536 = vadd.f32 %v1432, %v1535
    %v1537 = vpop.f32.mrb[0].mxu0
    %1538 = vmatprep.mubr.bf16.mxu0 0
    %1539 = vmatmul.mubr.bf16.gmra.mrb[0].mxu0 %v1390
    %v1540 = vpop.f32.mrb[0].mxu0
    %v1541 = vadd.f32 %v1432, %v1540
    %v1542 = vpop.f32.mrb[0].mxu0
    %v1543 = vpop.f32.mrb[0].mxu0
    %v1544 = vadd.f32 %v1432, %v1543
    %v1545 = vpop.f32.mrb[0].mxu0
    %1546 = vmatprep.mubr.bf16.mxu0 0
    %1547 = vmatmul.mubr.bf16.gmra.mrb[0].mxu0 %v1391
    %v1548 = vpop.f32.mrb[0].mxu0
    %v1549 = vadd.f32 %v1432, %v1548
    %v1550 = vpop.f32.mrb[0].mxu0
    %v1551 = vpop.f32.mrb[0].mxu0
    %v1552 = vadd.f32 %v1432, %v1551
    %v1553 = vpop.f32.mrb[0].mxu0
    %1554 = vmatprep.mubr.bf16.mxu0 0
    %1555 = vmatmul.mubr.bf16.gmra.mrb[0].mxu0 %v1392
    %v1556 = vpop.f32.mrb[0].mxu0
    %v1557 = vadd.f32 %v1432, %v1556
    %v1558 = vpop.f32.mrb[0].mxu0
    %v1559 = vpop.f32.mrb[0].mxu0
    %v1560 = vadd.f32 %v1432, %v1559
    %v1561 = vpop.f32.mrb[0].mxu0
    %1562 = vmatprep.mubr.bf16.mxu0 0
    %1563 = vmatmul.mubr.bf16.gmra.mrb[0].mxu0 %v1393
    %v1564 = vpop.f32.mrb[0].mxu0
    %v1565 = vadd.f32 %v1432, %v1564
    %v1566 = vpop.f32.mrb[0].mxu0
    %v1567 = vpop.f32.mrb[0].mxu0
    %v1568 = vadd.f32 %v1432, %v1567
    %v1569 = vpop.f32.mrb[0].mxu0
    %1570 = vmatprep.mubr.bf16.mxu0 0
    %1571 = vmatmul.mubr.bf16.gmra.mrb[0].mxu0 %v1394
    %v1572 = vpop.f32.mrb[0].mxu0
    %v1573 = vadd.f32 %v1432, %v1572
    %v1574 = vpop.f32.mrb[0].mxu0
    %v1575 = vpop.f32.mrb[0].mxu0
    %v1576 = vadd.f32 %v1432, %v1575
    %v1577 = vpop.f32.mrb[0].mxu0
    %1578 = vmatprep.mubr.bf16.mxu0 0
    %1579 = vmatmul.mubr.bf16.gmra.mrb[0].mxu0 %v1395
    %v1580 = vpop.f32.mrb[0].mxu0
    %v1581 = vadd.f32 %v1432, %v1580
    %v1582 = vpop.f32.mrb[0].mxu0
    %v1583 = vpop.f32.mrb[0].mxu0
    %v1584 = vadd.f32 %v1432, %v1583
    %v1585 = vpop.f32.mrb[0].mxu0
    %1586 = vmatprep.mubr.bf16.mxu0 0
    %1587 = vmatmul.mubr.bf16.gmra.mrb[0].mxu0 %v1396
    %v1588 = vpop.f32.mrb[0].mxu0
    %v1589 = vadd.f32 %v1432, %v1588
    %v1590 = vpop.f32.mrb[0].mxu0
    %v1591 = vpop.f32.mrb[0].mxu0
    %v1592 = vadd.f32 %v1432, %v1591
    %v1593 = vpop.f32.mrb[0].mxu0
    %1594 = vmatprep.mubr.bf16.mxu0 0
    %1595 = vmatmul.mubr.bf16.gmra.mrb[0].mxu0 %v1397
    %v1596 = vpop.f32.mrb[0].mxu0
    %v1597 = vadd.f32 %v1432, %v1596
    %v1598 = vpop.f32.mrb[0].mxu0
    %v1599 = vpop.f32.mrb[0].mxu0
    %v1600 = vadd.f32 %v1432, %v1599
    %v1601 = vpop.f32.mrb[0].mxu0
    %1602 = vmatprep.mubr.bf16.mxu0 0
    %1603 = vmatmul.mubr.bf16.gmra.mrb[0].mxu0 %v1398
    %v1604 = vpop.f32.mrb[0].mxu0
    %v1605 = vadd.f32 %v1432, %v1604
    %v1606 = vpop.f32.mrb[0].mxu0
    %v1607 = vpop.f32.mrb[0].mxu0
    %v1608 = vadd.f32 %v1432, %v1607
    %v1609 = vpop.f32.mrb[0].mxu0
    %1610 = vmatprep.mubr.bf16.mxu0 0
    %1611 = vmatmul.mubr.bf16.gmra.mrb[0].mxu0 %v1399
    %v1612 = vpop.f32.mrb[0].mxu0
    %v1613 = vadd.f32 %v1432, %v1612
    %v1614 = vpop.f32.mrb[0].mxu0
    %v1615 = vpop.f32.mrb[0].mxu0
    %v1616 = vadd.f32 %v1432, %v1615
    %v1617 = vpop.f32.mrb[0].mxu0
    %1618 = vmatprep.mubr.bf16.mxu0 0
    %1619 = vmatmul.mubr.bf16.gmra.mrb[0].mxu0 %v1400
    %v1620 = vpop.f32.mrb[0].mxu0
    %v1621 = vadd.f32 %v1432, %v1620
    %v1622 = vpop.f32.mrb[0].mxu0
    %v1623 = vpop.f32.mrb[0].mxu0
    %v1624 = vadd.f32 %v1432, %v1623
    %v1625 = vpop.f32.mrb[0].mxu0
    %1626 = vmatprep.mubr.bf16.mxu0 0
    %1627 = vmatmul.mubr.bf16.gmra.mrb[0].mxu0 %v1401
    %v1628 = vpop.f32.mrb[0].mxu0
    %v1629 = vadd.f32 %v1432, %v1628
    %v1630 = vpop.f32.mrb[0].mxu0
    %v1631 = vpop.f32.mrb[0].mxu0
    %v1632 = vadd.f32 %v1432, %v1631
    %v1633 = vpop.f32.mrb[0].mxu0
    %1634 = vmatprep.mubr.bf16.mxu0 0
    %1635 = vmatmul.mubr.bf16.gmra.mrb[0].mxu0 %v1402
    %v1636 = vpop.f32.mrb[0].mxu0
    %v1637 = vadd.f32 %v1432, %v1636
    %v1638 = vpop.f32.mrb[0].mxu0
    %v1639 = vpop.f32.mrb[0].mxu0
    %v1640 = vadd.f32 %v1432, %v1639
    %v1641 = vpop.f32.mrb[0].mxu0
    %1642 = vmatprep.mubr.bf16.mxu0 0
    %1643 = vmatmul.mubr.bf16.gmra.mrb[0].mxu0 %v1403
    %v1644 = vpop.f32.mrb[0].mxu0
    %v1645 = vadd.f32 %v1432, %v1644
    %v1646 = vpop.f32.mrb[0].mxu0
    %v1647 = vpop.f32.mrb[0].mxu0
    %v1648 = vadd.f32 %v1432, %v1647
    %v1649 = vpop.f32.mrb[0].mxu0
    %1650 = vmatprep.mubr.bf16.mxu0 0
    %1651 = vmatmul.mubr.bf16.gmra.mrb[0].mxu0 %v1404
    %v1652 = vpop.f32.mrb[0].mxu0
    %v1653 = vadd.f32 %v1432, %v1652
    %v1654 = vpop.f32.mrb[0].mxu0
    %v1655 = vpop.f32.mrb[0].mxu0
    %v1656 = vadd.f32 %v1432, %v1655
    %v1657 = vpop.f32.mrb[0].mxu0
    %1658 = vmatprep.mubr.bf16.mxu0 0
    %1659 = vmatmul.mubr.bf16.gmra.mrb[0].mxu0 %v1405
    %v1660 = vpop.f32.mrb[0].mxu0
    %v1661 = vadd.f32 %v1432, %v1660
    %v1662 = vpop.f32.mrb[0].mxu0
    %v1663 = vpop.f32.mrb[0].mxu0
    %v1664 = vadd.f32 %v1432, %v1663
    %v1665 = vpop.f32.mrb[0].mxu0
    %1666 = vmatprep.mubr.bf16.mxu0 0
    %1667 = vmatmul.mubr.bf16.gmra.mrb[0].mxu0 %v1406
    %v1668 = vpop.f32.mrb[0].mxu0
    %v1669 = vadd.f32 %v1432, %v1668
    %v1670 = vpop.f32.mrb[0].mxu0
    %v1671 = vpop.f32.mrb[0].mxu0
    %v1672 = vadd.f32 %v1432, %v1671
    %v1673 = vpop.f32.mrb[0].mxu0
    %1674 = vmatprep.mubr.bf16.mxu0 0
    %1675 = vmatmul.mubr.bf16.gmra.mrb[0].mxu0 %v1407
    %v1676 = vpop.f32.mrb[0].mxu0
    %v1677 = vadd.f32 %v1432, %v1676
    %v1678 = vpop.f32.mrb[0].mxu0
    %v1679 = vpop.f32.mrb[0].mxu0
    %v1680 = vadd.f32 %v1432, %v1679
    %v1681 = vpop.f32.mrb[0].mxu0
    %1682 = vmatprep.mubr.bf16.mxu0 0
    %1683 = vmatmul.mubr.bf16.gmra.mrb[0].mxu0 %v1408
    %v1684 = vpop.f32.mrb[0].mxu0
    %v1685 = vadd.f32 %v1432, %v1684
    %v1686 = vpop.f32.mrb[0].mxu0
    %v1687 = vpop.f32.mrb[0].mxu0
    %v1688 = vadd.f32 %v1432, %v1687
    %v1689 = vpop.f32.mrb[0].mxu0
    %1690 = vmatprep.mubr.bf16.mxu0 0
    %1691 = vmatmul.mubr.bf16.gmra.mrb[0].mxu0 %v1409
    %v1692 = vpop.f32.mrb[0].mxu0
    %v1693 = vadd.f32 %v1432, %v1692
    %v1694 = vpop.f32.mrb[0].mxu0
    %v1695 = vpop.f32.mrb[0].mxu0
    %v1696 = vadd.f32 %v1432, %v1695
    %v1697 = vpop.f32.mrb[0].mxu0
    %1698 = vmatprep.mubr.bf16.mxu0 0
    %1699 = vmatmul.mubr.bf16.gmra.mrb[0].mxu0 %v1410
    %v1700 = vpop.f32.mrb[0].mxu0
    %v1701 = vadd.f32 %v1432, %v1700
    %v1702 = vpop.f32.mrb[0].mxu0
    %v1703 = vpop.f32.mrb[0].mxu0
    %v1704 = vadd.f32 %v1432, %v1703
    %v1705 = vpop.f32.mrb[0].mxu0
    %1706 = vdwg.mxu0
    %v1707 = vmax.f32 %v1517, 0.0
    %v1708 = vmax.f32 %v1520, 0.0
    %v1709 = vmax.f32 %v1525, 0.0
    %v1710 = vmax.f32 %v1528, 0.0
    %v1711 = vmax.f32 %v1533, 0.0
    %v1712 = vmax.f32 %v1536, 0.0
    %v1713 = vmax.f32 %v1541, 0.0
    %v1714 = vmax.f32 %v1544, 0.0
    %v1715 = vmax.f32 %v1549, 0.0
    %v1716 = vmax.f32 %v1552, 0.0
    %v1717 = vmax.f32 %v1557, 0.0
    %v1718 = vmax.f32 %v1560, 0.0
    %v1719 = vmax.f32 %v1565, 0.0
    %v1720 = vmax.f32 %v1568, 0.0
    %v1721 = vmax.f32 %v1573, 0.0
    %v1722 = vmax.f32 %v1576, 0.0
    %v1723 = vmax.f32 %v1581, 0.0
    %v1724 = vmax.f32 %v1584, 0.0
    %v1725 = vmax.f32 %v1589, 0.0
    %v1726 = vmax.f32 %v1592, 0.0
    %v1727 = vmax.f32 %v1597, 0.0
    %v1728 = vmax.f32 %v1600, 0.0
    %v1729 = vmax.f32 %v1605, 0.0
    %v1730 = vmax.f32 %v1608, 0.0
    %v1731 = vmax.f32 %v1613, 0.0
    %v1732 = vmax.f32 %v1616, 0.0
    %v1733 = vmax.f32 %v1621, 0.0
    %v1734 = vmax.f32 %v1624, 0.0
    %v1735 = vmax.f32 %v1629, 0.0
    %v1736 = vmax.f32 %v1632, 0.0
    %v1737 = vmax.f32 %v1637, 0.0
    %v1738 = vmax.f32 %v1640, 0.0
    %v1739 = vmax.f32 %v1645, 0.0
    %v1740 = vmax.f32 %v1648, 0.0
    %v1741 = vmax.f32 %v1653, 0.0
    %v1742 = vmax.f32 %v1656, 0.0
    %v1743 = vmax.f32 %v1661, 0.0
    %v1744 = vmax.f32 %v1664, 0.0
    %v1745 = vmax.f32 %v1669, 0.0
    %v1746 = vmax.f32 %v1672, 0.0
    %v1747 = vmax.f32 %v1677, 0.0
    %v1748 = vmax.f32 %v1680, 0.0
    %v1749 = vmax.f32 %v1685, 0.0
    %v1750 = vmax.f32 %v1688, 0.0
    %v1751 = vmax.f32 %v1693, 0.0
    %v1752 = vmax.f32 %v1696, 0.0
    %v1753 = vmax.f32 %v1701, 0.0
    %v1754 = vmax.f32 %v1704, 0.0
    %v1755 = vpack.c.bf16 %v1708, %v1707
    %v1756 = vpack.c.bf16 %v1710, %v1709
    %v1757 = vpack.c.bf16 %v1712, %v1711
    %v1758 = vpack.c.bf16 %v1714, %v1713
    %v1759 = vpack.c.bf16 %v1716, %v1715
    %v1760 = vpack.c.bf16 %v1718, %v1717
    %v1761 = vpack.c.bf16 %v1720, %v1719
    %v1762 = vpack.c.bf16 %v1722, %v1721
    %v1763 = vpack.c.bf16 %v1724, %v1723
    %v1764 = vpack.c.bf16 %v1726, %v1725
    %v1765 = vpack.c.bf16 %v1728, %v1727
    %v1766 = vpack.c.bf16 %v1730, %v1729
    %v1767 = vpack.c.bf16 %v1732, %v1731
    %v1768 = vpack.c.bf16 %v1734, %v1733
    %v1769 = vpack.c.bf16 %v1736, %v1735
    %v1770 = vpack.c.bf16 %v1738, %v1737
    %v1771 = vpack.c.bf16 %v1740, %v1739
    %v1772 = vpack.c.bf16 %v1742, %v1741
    %v1773 = vpack.c.bf16 %v1744, %v1743
    %v1774 = vpack.c.bf16 %v1746, %v1745
    %v1775 = vpack.c.bf16 %v1748, %v1747
    %v1776 = vpack.c.bf16 %v1750, %v1749
    %v1777 = vpack.c.bf16 %v1752, %v1751
    %v1778 = vpack.c.bf16 %v1754, %v1753
    %1779 = vst [vmem:[%s4] sm:$0xff] %v1755
    %1780 = vst [vmem:[%s4 + $0x8] sm:$0xff] %v1756
    %1781 = vst [vmem:[%s4 + $0x10] sm:$0xff] %v1757
    %1782 = vst [vmem:[%s4 + $0x18] sm:$0xff] %v1758
    %1783 = vst [vmem:[%s4 + $0x20] sm:$0xff] %v1759
    %1784 = vst [vmem:[%s4 + $0x28] sm:$0xff] %v1760
    %1785 = vst [vmem:[%s4 + $0x30] sm:$0xff] %v1761
    %1786 = vst [vmem:[%s4 + $0x38] sm:$0xff] %v1762
    %1787 = vst [vmem:[%s4 + $0x40] sm:$0xff] %v1763
    %1788 = vst [vmem:[%s4 + $0x48] sm:$0xff] %v1764
    %1789 = vst [vmem:[%s4 + $0x50] sm:$0xff] %v1765
    %1790 = vst [vmem:[%s4 + $0x58] sm:$0xff] %v1766
    %1791 = vst [vmem:[%s4 + $0x60] sm:$0xff] %v1767
    %1792 = vst [vmem:[%s4 + $0x68] sm:$0xff] %v1768
    %1793 = vst [vmem:[%s4 + $0x70] sm:$0xff] %v1769
    %1794 = vst [vmem:[%s4 + $0x78] sm:$0xff] %v1770
    %1795 = vst [vmem:[%s4 + $0x80] sm:$0xff] %v1771
    %1796 = vst [vmem:[%s4 + $0x88] sm:$0xff] %v1772
    %1797 = vst [vmem:[%s4 + $0x90] sm:$0xff] %v1773
    %1798 = vst [vmem:[%s4 + $0x98] sm:$0xff] %v1774
    %1799 = vst [vmem:[%s4 + $0xa0] sm:$0xff] %v1775
    %1800 = vst [vmem:[%s4 + $0xa8] sm:$0xff] %v1776
    %1801 = vst [vmem:[%s4 + $0xb0] sm:$0xff] %v1777
    %1802 = vst [vmem:[%s4 + $0xb8] sm:$0xff] %v1778
  $region25: #{simple_gnn_pallas.3} parent=0 // pred_fallthru
    _
  // Predicated region
  $region26: #{simple_gnn_pallas.3} parent=0 // pred_check
    _
  $region27: #{simple_gnn_pallas.3} parent=0 // pred_check_branch
    %1804 = sbr.rel (0) target = $region29
  $region28: #{simple_gnn_pallas.3} parent=0 // pred_region
    _
  $region29: #{simple_gnn_pallas.3} parent=0 // pred_fallthru
    _
  // Predicated region
  $region30: #{simple_gnn_pallas.3} parent=0 // pred_check
    _
  $region31: #{simple_gnn_pallas.3} parent=0 // pred_check_branch
    %1806 = sbr.rel (0) target = $region33
  $region32: #{simple_gnn_pallas.3} parent=0 // pred_region
    _
  $region33: #{simple_gnn_pallas.3} parent=0 // pred_fallthru
    _

// kernel: simple_gnn_pallas.2
$region0: #{simple_gnn_pallas.2}
  #allocation0 [shape = 'u32[]', space=smem, size = 0x4, offset = 0x4, fixed_abs, tag = 'smem constant byte address 0x4 - core index']
  #allocation1 [shape = 'u32[144,128]{1,0:T(1,128)}', space=vmem, size = 0x12000, scoped, tag = 'internal scratch']
  #allocation2 [shape = 'f32[384,128]{1,0:T(8,128)}', space=vmem, size = 0x30000, scoped, tag = 'scratch operand']
  %s0 = inlined_call_operand.vmem [shape: bf16[384,384], index: 0, kind: input, shape index: {}]
  %s1 = inlined_call_operand.vmem [shape: bf16[384,128], index: 1, kind: input, shape index: {}]
  %s2 = inlined_call_operand.vmem [shape: bf16[128,128], index: 2, kind: input, shape index: {}]
  %s3 = inlined_call_operand.vmem [shape: f32[1,128], index: 3, kind: input, shape index: {}]
  %s4 = inlined_call_operand.vmem [shape: bf16[384,128], index: 4, kind: output, shape index: {}]
  %s5 = sld [smem:[#allocation0]]
  $region34: #{simple_gnn_pallas.2} parent=0
    _
  %s7 = ssub.s32 1, %s5
  %s8 = scalar_select 0, %s7, %s5
  // Predicated region
  $region2: #{simple_gnn_pallas.2} parent=0 // pred_check
    _
  $region3: #{simple_gnn_pallas.2} parent=0 // pred_check_branch
    %10 = sbr.rel (0) target = $region5
  $region4: #{simple_gnn_pallas.2} parent=0 // pred_region
    _
  $region5: #{simple_gnn_pallas.2} parent=0 // pred_fallthru
    _
  // Predicated region
  $region6: #{simple_gnn_pallas.2} parent=0 // pred_check
    _
  $region7: #{simple_gnn_pallas.2} parent=0 // pred_check_branch
    %12 = sbr.rel (0) target = $region9
  $region8: #{simple_gnn_pallas.2} parent=0 // pred_region
    _
  $region9: #{simple_gnn_pallas.2} parent=0 // pred_fallthru
    _
  // Predicated region
  $region10: #{simple_gnn_pallas.2} parent=0 // pred_check
    _
  $region11: #{simple_gnn_pallas.2} parent=0 // pred_check_branch
    %14 = sbr.rel (0) target = $region13
  $region12: #{simple_gnn_pallas.2} parent=0 // pred_region
    _
  $region13: #{simple_gnn_pallas.2} parent=0 // pred_fallthru
    _
  // Predicated region
  $region14: #{simple_gnn_pallas.2} parent=0 // pred_check
    _
  $region15: #{simple_gnn_pallas.2} parent=0 // pred_check_branch
    %16 = sbr.rel (0) target = $region17
  $region16: #{simple_gnn_pallas.2} parent=0 // pred_region
    _
  $region17: #{simple_gnn_pallas.2} parent=0 // pred_fallthru
    _
  %p18 = scmp.eq.s32.totalorder 0, 0
  // Predicated region
  $region18: #{simple_gnn_pallas.2} parent=0 // pred_check
    %p19 = pneg %p18
  $region19: #{simple_gnn_pallas.2} parent=0 // pred_check_branch
    %21 = sbr.rel (%p19) target = $region21
  $region20: #{simple_gnn_pallas.2} parent=0 // pred_region
    %22 = vst [vmem:[#allocation2] sm:$0xff] 0.0
    %23 = vst [vmem:[#allocation2 + $0x8] sm:$0xff] 0.0
    %24 = vst [vmem:[#allocation2 + $0x10] sm:$0xff] 0.0
    %25 = vst [vmem:[#allocation2 + $0x18] sm:$0xff] 0.0
    %26 = vst [vmem:[#allocation2 + $0x20] sm:$0xff] 0.0
    %27 = vst [vmem:[#allocation2 + $0x28] sm:$0xff] 0.0
    %28 = vst [vmem:[#allocation2 + $0x30] sm:$0xff] 0.0
    %29 = vst [vmem:[#allocation2 + $0x38] sm:$0xff] 0.0
    %30 = vst [vmem:[#allocation2 + $0x40] sm:$0xff] 0.0
    %31 = vst [vmem:[#allocation2 + $0x48] sm:$0xff] 0.0
    %32 = vst [vmem:[#allocation2 + $0x50] sm:$0xff] 0.0
    %33 = vst [vmem:[#allocation2 + $0x58] sm:$0xff] 0.0
    %34 = vst [vmem:[#allocation2 + $0x60] sm:$0xff] 0.0
    %35 = vst [vmem:[#allocation2 + $0x68] sm:$0xff] 0.0
    %36 = vst [vmem:[#allocation2 + $0x70] sm:$0xff] 0.0
    %37 = vst [vmem:[#allocation2 + $0x78] sm:$0xff] 0.0
    %38 = vst [vmem:[#allocation2 + $0x80] sm:$0xff] 0.0
    %39 = vst [vmem:[#allocation2 + $0x88] sm:$0xff] 0.0
    %40 = vst [vmem:[#allocation2 + $0x90] sm:$0xff] 0.0
    %41 = vst [vmem:[#allocation2 + $0x98] sm:$0xff] 0.0
    %42 = vst [vmem:[#allocation2 + $0xa0] sm:$0xff] 0.0
    %43 = vst [vmem:[#allocation2 + $0xa8] sm:$0xff] 0.0
    %44 = vst [vmem:[#allocation2 + $0xb0] sm:$0xff] 0.0
    %45 = vst [vmem:[#allocation2 + $0xb8] sm:$0xff] 0.0
    %46 = vst [vmem:[#allocation2 + $0xc0] sm:$0xff] 0.0
    %47 = vst [vmem:[#allocation2 + $0xc8] sm:$0xff] 0.0
    %48 = vst [vmem:[#allocation2 + $0xd0] sm:$0xff] 0.0
    %49 = vst [vmem:[#allocation2 + $0xd8] sm:$0xff] 0.0
    %50 = vst [vmem:[#allocation2 + $0xe0] sm:$0xff] 0.0
    %51 = vst [vmem:[#allocation2 + $0xe8] sm:$0xff] 0.0
    %52 = vst [vmem:[#allocation2 + $0xf0] sm:$0xff] 0.0
    %53 = vst [vmem:[#allocation2 + $0xf8] sm:$0xff] 0.0
    %54 = vst [vmem:[#allocation2 + $0x100] sm:$0xff] 0.0
    %55 = vst [vmem:[#allocation2 + $0x108] sm:$0xff] 0.0
    %56 = vst [vmem:[#allocation2 + $0x110] sm:$0xff] 0.0
    %57 = vst [vmem:[#allocation2 + $0x118] sm:$0xff] 0.0
    %58 = vst [vmem:[#allocation2 + $0x120] sm:$0xff] 0.0
    %59 = vst [vmem:[#allocation2 + $0x128] sm:$0xff] 0.0
    %60 = vst [vmem:[#allocation2 + $0x130] sm:$0xff] 0.0
    %61 = vst [vmem:[#allocation2 + $0x138] sm:$0xff] 0.0
    %62 = vst [vmem:[#allocation2 + $0x140] sm:$0xff] 0.0
    %63 = vst [vmem:[#allocation2 + $0x148] sm:$0xff] 0.0
    %64 = vst [vmem:[#allocation2 + $0x150] sm:$0xff] 0.0
    %65 = vst [vmem:[#allocation2 + $0x158] sm:$0xff] 0.0
    %66 = vst [vmem:[#allocation2 + $0x160] sm:$0xff] 0.0
    %67 = vst [vmem:[#allocation2 + $0x168] sm:$0xff] 0.0
    %68 = vst [vmem:[#allocation2 + $0x170] sm:$0xff] 0.0
    %69 = vst [vmem:[#allocation2 + $0x178] sm:$0xff] 0.0
  $region21: #{simple_gnn_pallas.2} parent=0 // pred_fallthru
    _
  %v70 = vld [vmem:[#allocation2] sm:$0xff]
  %v71 = vld [vmem:[#allocation2 + $0x8] sm:$0xff]
  %v72 = vld [vmem:[#allocation2 + $0x10] sm:$0xff]
  %v73 = vld [vmem:[#allocation2 + $0x18] sm:$0xff]
  %v74 = vld [vmem:[#allocation2 + $0x20] sm:$0xff]
  %v75 = vld [vmem:[#allocation2 + $0x28] sm:$0xff]
  %v76 = vld [vmem:[#allocation2 + $0x30] sm:$0xff]
  %v77 = vld [vmem:[#allocation2 + $0x38] sm:$0xff]
  %v78 = vld [vmem:[#allocation2 + $0x40] sm:$0xff]
  %v79 = vld [vmem:[#allocation2 + $0x48] sm:$0xff]
  %v80 = vld [vmem:[#allocation2 + $0x50] sm:$0xff]
  %v81 = vld [vmem:[#allocation2 + $0x58] sm:$0xff]
  %v82 = vld [vmem:[#allocation2 + $0x60] sm:$0xff]
  %v83 = vld [vmem:[#allocation2 + $0x68] sm:$0xff]
  %v84 = vld [vmem:[#allocation2 + $0x70] sm:$0xff]
  %v85 = vld [vmem:[#allocation2 + $0x78] sm:$0xff]
  %v86 = vld [vmem:[#allocation2 + $0x80] sm:$0xff]
  %v87 = vld [vmem:[#allocation2 + $0x88] sm:$0xff]
  %v88 = vld [vmem:[#allocation2 + $0x90] sm:$0xff]
  %v89 = vld [vmem:[#allocation2 + $0x98] sm:$0xff]
  %v90 = vld [vmem:[#allocation2 + $0xa0] sm:$0xff]
  %v91 = vld [vmem:[#allocation2 + $0xa8] sm:$0xff]
  %v92 = vld [vmem:[#allocation2 + $0xb0] sm:$0xff]
  %v93 = vld [vmem:[#allocation2 + $0xb8] sm:$0xff]
  %v94 = vld [vmem:[#allocation2 + $0xc0] sm:$0xff]
  %v95 = vld [vmem:[#allocation2 + $0xc8] sm:$0xff]
  %v96 = vld [vmem:[#allocation2 + $0xd0] sm:$0xff]
  %v97 = vld [vmem:[#allocation2 + $0xd8] sm:$0xff]
  %v98 = vld [vmem:[#allocation2 + $0xe0] sm:$0xff]
  %v99 = vld [vmem:[#allocation2 + $0xe8] sm:$0xff]
  %v100 = vld [vmem:[#allocation2 + $0xf0] sm:$0xff]
  %v101 = vld [vmem:[#allocation2 + $0xf8] sm:$0xff]
  %v102 = vld [vmem:[#allocation2 + $0x100] sm:$0xff]
  %v103 = vld [vmem:[#allocation2 + $0x108] sm:$0xff]
  %v104 = vld [vmem:[#allocation2 + $0x110] sm:$0xff]
  %v105 = vld [vmem:[#allocation2 + $0x118] sm:$0xff]
  %v106 = vld [vmem:[#allocation2 + $0x120] sm:$0xff]
  %v107 = vld [vmem:[#allocation2 + $0x128] sm:$0xff]
  %v108 = vld [vmem:[#allocation2 + $0x130] sm:$0xff]
  %v109 = vld [vmem:[#allocation2 + $0x138] sm:$0xff]
  %v110 = vld [vmem:[#allocation2 + $0x140] sm:$0xff]
  %v111 = vld [vmem:[#allocation2 + $0x148] sm:$0xff]
  %v112 = vld [vmem:[#allocation2 + $0x150] sm:$0xff]
  %v113 = vld [vmem:[#allocation2 + $0x158] sm:$0xff]
  %v114 = vld [vmem:[#allocation2 + $0x160] sm:$0xff]
  %v115 = vld [vmem:[#allocation2 + $0x168] sm:$0xff]
  %v116 = vld [vmem:[#allocation2 + $0x170] sm:$0xff]
  %v117 = vld [vmem:[#allocation2 + $0x178] sm:$0xff]
  %v118 = vld [vmem:[%s0] sm:$0xff]
  %v119 = vld [vmem:[%s0 + $0x8] sm:$0xf]
  %v120 = vld [vmem:[%s0 + $0xc] sm:$0xff]
  %v121 = vld [vmem:[%s0 + $0x14] sm:$0xf]
  %v122 = vld [vmem:[%s0 + $0x18] sm:$0xff]
  %v123 = vld [vmem:[%s0 + $0x20] sm:$0xf]
  %v124 = vld [vmem:[%s0 + $0x24] sm:$0xff]
  %v125 = vld [vmem:[%s0 + $0x2c] sm:$0xf]
  %v126 = vld [vmem:[%s0 + $0x30] sm:$0xff]
  %v127 = vld [vmem:[%s0 + $0x38] sm:$0xf]
  %v128 = vld [vmem:[%s0 + $0x3c] sm:$0xff]
  %v129 = vld [vmem:[%s0 + $0x44] sm:$0xf]
  %v130 = vld [vmem:[%s0 + $0x48] sm:$0xff]
  %v131 = vld [vmem:[%s0 + $0x50] sm:$0xf]
  %v132 = vld [vmem:[%s0 + $0x54] sm:$0xff]
  %v133 = vld [vmem:[%s0 + $0x5c] sm:$0xf]
  %v134 = vld [vmem:[%s0 + $0x60] sm:$0xff]
  %v135 = vld [vmem:[%s0 + $0x68] sm:$0xf]
  %v136 = vld [vmem:[%s0 + $0x6c] sm:$0xff]
  %v137 = vld [vmem:[%s0 + $0x74] sm:$0xf]
  %v138 = vld [vmem:[%s0 + $0x78] sm:$0xff]
  %v139 = vld [vmem:[%s0 + $0x80] sm:$0xf]
  %v140 = vld [vmem:[%s0 + $0x84] sm:$0xff]
  %v141 = vld [vmem:[%s0 + $0x8c] sm:$0xf]
  %v142 = vld [vmem:[%s0 + $0x90] sm:$0xff]
  %v143 = vld [vmem:[%s0 + $0x98] sm:$0xf]
  %v144 = vld [vmem:[%s0 + $0x9c] sm:$0xff]
  %v145 = vld [vmem:[%s0 + $0xa4] sm:$0xf]
  %v146 = vld [vmem:[%s0 + $0xa8] sm:$0xff]
  %v147 = vld [vmem:[%s0 + $0xb0] sm:$0xf]
  %v148 = vld [vmem:[%s0 + $0xb4] sm:$0xff]
  %v149 = vld [vmem:[%s0 + $0xbc] sm:$0xf]
  %v150 = vld [vmem:[%s0 + $0xc0] sm:$0xff]
  %v151 = vld [vmem:[%s0 + $0xc8] sm:$0xf]
  %v152 = vld [vmem:[%s0 + $0xcc] sm:$0xff]
  %v153 = vld [vmem:[%s0 + $0xd4] sm:$0xf]
  %v154 = vld [vmem:[%s0 + $0xd8] sm:$0xff]
  %v155 = vld [vmem:[%s0 + $0xe0] sm:$0xf]
  %v156 = vld [vmem:[%s0 + $0xe4] sm:$0xff]
  %v157 = vld [vmem:[%s0 + $0xec] sm:$0xf]
  %v158 = vld [vmem:[%s0 + $0xf0] sm:$0xff]
  %v159 = vld [vmem:[%s0 + $0xf8] sm:$0xf]
  %v160 = vld [vmem:[%s0 + $0xfc] sm:$0xff]
  %v161 = vld [vmem:[%s0 + $0x104] sm:$0xf]
  %v162 = vld [vmem:[%s0 + $0x108] sm:$0xff]
  %v163 = vld [vmem:[%s0 + $0x110] sm:$0xf]
  %v164 = vld [vmem:[%s0 + $0x114] sm:$0xff]
  %v165 = vld [vmem:[%s0 + $0x11c] sm:$0xf]
  %v166 = vld [vmem:[%s0 + $0x120] sm:$0xff]
  %v167 = vld [vmem:[%s0 + $0x128] sm:$0xf]
  %v168 = vld [vmem:[%s0 + $0x12c] sm:$0xff]
  %v169 = vld [vmem:[%s0 + $0x134] sm:$0xf]
  %v170 = vld [vmem:[%s0 + $0x138] sm:$0xff]
  %v171 = vld [vmem:[%s0 + $0x140] sm:$0xf]
  %v172 = vld [vmem:[%s0 + $0x144] sm:$0xff]
  %v173 = vld [vmem:[%s0 + $0x14c] sm:$0xf]
  %v174 = vld [vmem:[%s0 + $0x150] sm:$0xff]
  %v175 = vld [vmem:[%s0 + $0x158] sm:$0xf]
  %v176 = vld [vmem:[%s0 + $0x15c] sm:$0xff]
  %v177 = vld [vmem:[%s0 + $0x164] sm:$0xf]
  %v178 = vld [vmem:[%s0 + $0x168] sm:$0xff]
  %v179 = vld [vmem:[%s0 + $0x170] sm:$0xf]
  %v180 = vld [vmem:[%s0 + $0x174] sm:$0xff]
  %v181 = vld [vmem:[%s0 + $0x17c] sm:$0xf]
  %v182 = vld [vmem:[%s0 + $0x180] sm:$0xff]
  %v183 = vld [vmem:[%s0 + $0x188] sm:$0xf]
  %v184 = vld [vmem:[%s0 + $0x18c] sm:$0xff]
  %v185 = vld [vmem:[%s0 + $0x194] sm:$0xf]
  %v186 = vld [vmem:[%s0 + $0x198] sm:$0xff]
  %v187 = vld [vmem:[%s0 + $0x1a0] sm:$0xf]
  %v188 = vld [vmem:[%s0 + $0x1a4] sm:$0xff]
  %v189 = vld [vmem:[%s0 + $0x1ac] sm:$0xf]
  %v190 = vld [vmem:[%s0 + $0x1b0] sm:$0xff]
  %v191 = vld [vmem:[%s0 + $0x1b8] sm:$0xf]
  %v192 = vld [vmem:[%s0 + $0x1bc] sm:$0xff]
  %v193 = vld [vmem:[%s0 + $0x1c4] sm:$0xf]
  %v194 = vld [vmem:[%s0 + $0x1c8] sm:$0xff]
  %v195 = vld [vmem:[%s0 + $0x1d0] sm:$0xf]
  %v196 = vld [vmem:[%s0 + $0x1d4] sm:$0xff]
  %v197 = vld [vmem:[%s0 + $0x1dc] sm:$0xf]
  %v198 = vld [vmem:[%s0 + $0x1e0] sm:$0xff]
  %v199 = vld [vmem:[%s0 + $0x1e8] sm:$0xf]
  %v200 = vld [vmem:[%s0 + $0x1ec] sm:$0xff]
  %v201 = vld [vmem:[%s0 + $0x1f4] sm:$0xf]
  %v202 = vld [vmem:[%s0 + $0x1f8] sm:$0xff]
  %v203 = vld [vmem:[%s0 + $0x200] sm:$0xf]
  %v204 = vld [vmem:[%s0 + $0x204] sm:$0xff]
  %v205 = vld [vmem:[%s0 + $0x20c] sm:$0xf]
  %v206 = vld [vmem:[%s0 + $0x210] sm:$0xff]
  %v207 = vld [vmem:[%s0 + $0x218] sm:$0xf]
  %v208 = vld [vmem:[%s0 + $0x21c] sm:$0xff]
  %v209 = vld [vmem:[%s0 + $0x224] sm:$0xf]
  %v210 = vld [vmem:[%s0 + $0x228] sm:$0xff]
  %v211 = vld [vmem:[%s0 + $0x230] sm:$0xf]
  %v212 = vld [vmem:[%s0 + $0x234] sm:$0xff]
  %v213 = vld [vmem:[%s0 + $0x23c] sm:$0xf]
  %v214 = vld [vmem:[%s1] sm:$0xf]
  %v215 = vld [vmem:[%s1 + $0x4] sm:$0xf]
  %v216 = vld [vmem:[%s1 + $0x8] sm:$0xf]
  %v217 = vld [vmem:[%s1 + $0xc] sm:$0xf]
  %v218 = vld [vmem:[%s1 + $0x10] sm:$0xf]
  %v219 = vld [vmem:[%s1 + $0x14] sm:$0xf]
  %v220 = vld [vmem:[%s1 + $0x18] sm:$0xf]
  %v221 = vld [vmem:[%s1 + $0x1c] sm:$0xf]
  %v222 = vld [vmem:[%s1 + $0x20] sm:$0xf]
  %v223 = vld [vmem:[%s1 + $0x24] sm:$0xf]
  %v224 = vld [vmem:[%s1 + $0x28] sm:$0xf]
  %v225 = vld [vmem:[%s1 + $0x2c] sm:$0xf]
  %v226 = vld [vmem:[%s1 + $0x30] sm:$0xf]
  %v227 = vld [vmem:[%s1 + $0x34] sm:$0xf]
  %v228 = vld [vmem:[%s1 + $0x38] sm:$0xf]
  %v229 = vld [vmem:[%s1 + $0x3c] sm:$0xf]
  %v230 = vld [vmem:[%s1 + $0x40] sm:$0xf]
  %v231 = vld [vmem:[%s1 + $0x44] sm:$0xf]
  %v232 = vld [vmem:[%s1 + $0x48] sm:$0xf]
  %v233 = vld [vmem:[%s1 + $0x4c] sm:$0xf]
  %v234 = vld [vmem:[%s1 + $0x50] sm:$0xf]
  %v235 = vld [vmem:[%s1 + $0x54] sm:$0xf]
  %v236 = vld [vmem:[%s1 + $0x58] sm:$0xf]
  %v237 = vld [vmem:[%s1 + $0x5c] sm:$0xf]
  %v238 = vld [vmem:[%s1 + $0x60] sm:$0xf]
  %v239 = vld [vmem:[%s1 + $0x64] sm:$0xf]
  %v240 = vld [vmem:[%s1 + $0x68] sm:$0xf]
  %v241 = vld [vmem:[%s1 + $0x6c] sm:$0xf]
  %v242 = vld [vmem:[%s1 + $0x70] sm:$0xf]
  %v243 = vld [vmem:[%s1 + $0x74] sm:$0xf]
  %v244 = vld [vmem:[%s1 + $0x78] sm:$0xf]
  %v245 = vld [vmem:[%s1 + $0x7c] sm:$0xf]
  %v246 = vld [vmem:[%s1 + $0x80] sm:$0xf]
  %v247 = vld [vmem:[%s1 + $0x84] sm:$0xf]
  %v248 = vld [vmem:[%s1 + $0x88] sm:$0xf]
  %v249 = vld [vmem:[%s1 + $0x8c] sm:$0xf]
  %v250 = vld [vmem:[%s1 + $0x90] sm:$0xf]
  %v251 = vld [vmem:[%s1 + $0x94] sm:$0xf]
  %v252 = vld [vmem:[%s1 + $0x98] sm:$0xf]
  %v253 = vld [vmem:[%s1 + $0x9c] sm:$0xf]
  %v254 = vld [vmem:[%s1 + $0xa0] sm:$0xf]
  %v255 = vld [vmem:[%s1 + $0xa4] sm:$0xf]
  %v256 = vld [vmem:[%s1 + $0xa8] sm:$0xf]
  %v257 = vld [vmem:[%s1 + $0xac] sm:$0xf]
  %v258 = vld [vmem:[%s1 + $0xb0] sm:$0xf]
  %v259 = vld [vmem:[%s1 + $0xb4] sm:$0xf]
  %v260 = vld [vmem:[%s1 + $0xb8] sm:$0xf]
  %v261 = vld [vmem:[%s1 + $0xbc] sm:$0xf]
  %v358 = vunpack.c.l.b16 %v118
  %v359 = vunpack.c.h.b16 %v118
  %v360 = vunpack.c.l.b16 %v119
  %v361 = vunpack.c.l.b16 %v120
  %v362 = vunpack.c.h.b16 %v120
  %v363 = vunpack.c.l.b16 %v121
  %v364 = vunpack.c.l.b16 %v122
  %v365 = vunpack.c.h.b16 %v122
  %v366 = vunpack.c.l.b16 %v123
  %v367 = vunpack.c.l.b16 %v124
  %v368 = vunpack.c.h.b16 %v124
  %v369 = vunpack.c.l.b16 %v125
  %v370 = vunpack.c.l.b16 %v126
  %v371 = vunpack.c.h.b16 %v126
  %v372 = vunpack.c.l.b16 %v127
  %v373 = vunpack.c.l.b16 %v128
  %v374 = vunpack.c.h.b16 %v128
  %v375 = vunpack.c.l.b16 %v129
  %v376 = vunpack.c.l.b16 %v130
  %v377 = vunpack.c.h.b16 %v130
  %v378 = vunpack.c.l.b16 %v131
  %v379 = vunpack.c.l.b16 %v132
  %v380 = vunpack.c.h.b16 %v132
  %v381 = vunpack.c.l.b16 %v133
  %v382 = vunpack.c.l.b16 %v134
  %v383 = vunpack.c.h.b16 %v134
  %v384 = vunpack.c.l.b16 %v135
  %v385 = vunpack.c.l.b16 %v136
  %v386 = vunpack.c.h.b16 %v136
  %v387 = vunpack.c.l.b16 %v137
  %v388 = vunpack.c.l.b16 %v138
  %v389 = vunpack.c.h.b16 %v138
  %v390 = vunpack.c.l.b16 %v139
  %v391 = vunpack.c.l.b16 %v140
  %v392 = vunpack.c.h.b16 %v140
  %v393 = vunpack.c.l.b16 %v141
  %v394 = vunpack.c.l.b16 %v142
  %v395 = vunpack.c.h.b16 %v142
  %v396 = vunpack.c.l.b16 %v143
  %v397 = vunpack.c.l.b16 %v144
  %v398 = vunpack.c.h.b16 %v144
  %v399 = vunpack.c.l.b16 %v145
  %v400 = vunpack.c.l.b16 %v146
  %v401 = vunpack.c.h.b16 %v146
  %v402 = vunpack.c.l.b16 %v147
  %v403 = vunpack.c.l.b16 %v148
  %v404 = vunpack.c.h.b16 %v148
  %v405 = vunpack.c.l.b16 %v149
  %v406 = vunpack.c.l.b16 %v150
  %v407 = vunpack.c.h.b16 %v150
  %v408 = vunpack.c.l.b16 %v151
  %v409 = vunpack.c.l.b16 %v152
  %v410 = vunpack.c.h.b16 %v152
  %v411 = vunpack.c.l.b16 %v153
  %v412 = vunpack.c.l.b16 %v154
  %v413 = vunpack.c.h.b16 %v154
  %v414 = vunpack.c.l.b16 %v155
  %v415 = vunpack.c.l.b16 %v156
  %v416 = vunpack.c.h.b16 %v156
  %v417 = vunpack.c.l.b16 %v157
  %v418 = vunpack.c.l.b16 %v158
  %v419 = vunpack.c.h.b16 %v158
  %v420 = vunpack.c.l.b16 %v159
  %v421 = vunpack.c.l.b16 %v160
  %v422 = vunpack.c.h.b16 %v160
  %v423 = vunpack.c.l.b16 %v161
  %v424 = vunpack.c.l.b16 %v162
  %v425 = vunpack.c.h.b16 %v162
  %v426 = vunpack.c.l.b16 %v163
  %v427 = vunpack.c.l.b16 %v164
  %v428 = vunpack.c.h.b16 %v164
  %v429 = vunpack.c.l.b16 %v165
  %v430 = vunpack.c.l.b16 %v166
  %v431 = vunpack.c.h.b16 %v166
  %v432 = vunpack.c.l.b16 %v167
  %v433 = vunpack.c.l.b16 %v168
  %v434 = vunpack.c.h.b16 %v168
  %v435 = vunpack.c.l.b16 %v169
  %v436 = vunpack.c.l.b16 %v170
  %v437 = vunpack.c.h.b16 %v170
  %v438 = vunpack.c.l.b16 %v171
  %v439 = vunpack.c.l.b16 %v172
  %v440 = vunpack.c.h.b16 %v172
  %v441 = vunpack.c.l.b16 %v173
  %v442 = vunpack.c.l.b16 %v174
  %v443 = vunpack.c.h.b16 %v174
  %v444 = vunpack.c.l.b16 %v175
  %v445 = vunpack.c.l.b16 %v176
  %v446 = vunpack.c.h.b16 %v176
  %v447 = vunpack.c.l.b16 %v177
  %v448 = vunpack.c.l.b16 %v178
  %v449 = vunpack.c.h.b16 %v178
  %v450 = vunpack.c.l.b16 %v179
  %v451 = vunpack.c.l.b16 %v180
  %v452 = vunpack.c.h.b16 %v180
  %v453 = vunpack.c.l.b16 %v181
  %v454 = vunpack.c.l.b16 %v182
  %v455 = vunpack.c.h.b16 %v182
  %v456 = vunpack.c.l.b16 %v183
  %v457 = vunpack.c.l.b16 %v184
  %v458 = vunpack.c.h.b16 %v184
  %v459 = vunpack.c.l.b16 %v185
  %v460 = vunpack.c.l.b16 %v186
  %v461 = vunpack.c.h.b16 %v186
  %v462 = vunpack.c.l.b16 %v187
  %v463 = vunpack.c.l.b16 %v188
  %v464 = vunpack.c.h.b16 %v188
  %v465 = vunpack.c.l.b16 %v189
  %v466 = vunpack.c.l.b16 %v190
  %v467 = vunpack.c.h.b16 %v190
  %v468 = vunpack.c.l.b16 %v191
  %v469 = vunpack.c.l.b16 %v192
  %v470 = vunpack.c.h.b16 %v192
  %v471 = vunpack.c.l.b16 %v193
  %v472 = vunpack.c.l.b16 %v194
  %v473 = vunpack.c.h.b16 %v194
  %v474 = vunpack.c.l.b16 %v195
  %v475 = vunpack.c.l.b16 %v196
  %v476 = vunpack.c.h.b16 %v196
  %v477 = vunpack.c.l.b16 %v197
  %v478 = vunpack.c.l.b16 %v198
  %v479 = vunpack.c.h.b16 %v198
  %v480 = vunpack.c.l.b16 %v199
  %v481 = vunpack.c.l.b16 %v200
  %v482 = vunpack.c.h.b16 %v200
  %v483 = vunpack.c.l.b16 %v201
  %v484 = vunpack.c.l.b16 %v202
  %v485 = vunpack.c.h.b16 %v202
  %v486 = vunpack.c.l.b16 %v203
  %v487 = vunpack.c.l.b16 %v204
  %v488 = vunpack.c.h.b16 %v204
  %v489 = vunpack.c.l.b16 %v205
  %v490 = vunpack.c.l.b16 %v206
  %v491 = vunpack.c.h.b16 %v206
  %v492 = vunpack.c.l.b16 %v207
  %v493 = vunpack.c.l.b16 %v208
  %v494 = vunpack.c.h.b16 %v208
  %v495 = vunpack.c.l.b16 %v209
  %v496 = vunpack.c.l.b16 %v210
  %v497 = vunpack.c.h.b16 %v210
  %v498 = vunpack.c.l.b16 %v211
  %v499 = vunpack.c.l.b16 %v212
  %v500 = vunpack.c.h.b16 %v212
  %v501 = vunpack.c.l.b16 %v213
  %v502 = vpack.c.b16 %v361, %v358
  %v503 = vpack.c.b16 %v362, %v359
  %v504 = vpack.c.b16 %v363, %v360
  %v505 = vpack.c.b16 %v367, %v364
  %v506 = vpack.c.b16 %v368, %v365
  %v507 = vpack.c.b16 %v369, %v366
  %v508 = vpack.c.b16 %v373, %v370
  %v509 = vpack.c.b16 %v374, %v371
  %v510 = vpack.c.b16 %v375, %v372
  %v511 = vpack.c.b16 %v379, %v376
  %v512 = vpack.c.b16 %v380, %v377
  %v513 = vpack.c.b16 %v381, %v378
  %v514 = vpack.c.b16 %v385, %v382
  %v515 = vpack.c.b16 %v386, %v383
  %v516 = vpack.c.b16 %v387, %v384
  %v517 = vpack.c.b16 %v391, %v388
  %v518 = vpack.c.b16 %v392, %v389
  %v519 = vpack.c.b16 %v393, %v390
  %v520 = vpack.c.b16 %v397, %v394
  %v521 = vpack.c.b16 %v398, %v395
  %v522 = vpack.c.b16 %v399, %v396
  %v523 = vpack.c.b16 %v403, %v400
  %v524 = vpack.c.b16 %v404, %v401
  %v525 = vpack.c.b16 %v405, %v402
  %v526 = vpack.c.b16 %v409, %v406
  %v527 = vpack.c.b16 %v410, %v407
  %v528 = vpack.c.b16 %v411, %v408
  %v529 = vpack.c.b16 %v415, %v412
  %v530 = vpack.c.b16 %v416, %v413
  %v531 = vpack.c.b16 %v417, %v414
  %v532 = vpack.c.b16 %v421, %v418
  %v533 = vpack.c.b16 %v422, %v419
  %v534 = vpack.c.b16 %v423, %v420
  %v535 = vpack.c.b16 %v427, %v424
  %v536 = vpack.c.b16 %v428, %v425
  %v537 = vpack.c.b16 %v429, %v426
  %v538 = vpack.c.b16 %v433, %v430
  %v539 = vpack.c.b16 %v434, %v431
  %v540 = vpack.c.b16 %v435, %v432
  %v541 = vpack.c.b16 %v439, %v436
  %v542 = vpack.c.b16 %v440, %v437
  %v543 = vpack.c.b16 %v441, %v438
  %v544 = vpack.c.b16 %v445, %v442
  %v545 = vpack.c.b16 %v446, %v443
  %v546 = vpack.c.b16 %v447, %v444
  %v547 = vpack.c.b16 %v451, %v448
  %v548 = vpack.c.b16 %v452, %v449
  %v549 = vpack.c.b16 %v453, %v450
  %v550 = vpack.c.b16 %v457, %v454
  %v551 = vpack.c.b16 %v458, %v455
  %v552 = vpack.c.b16 %v459, %v456
  %v553 = vpack.c.b16 %v463, %v460
  %v554 = vpack.c.b16 %v464, %v461
  %v555 = vpack.c.b16 %v465, %v462
  %v556 = vpack.c.b16 %v469, %v466
  %v557 = vpack.c.b16 %v470, %v467
  %v558 = vpack.c.b16 %v471, %v468
  %v559 = vpack.c.b16 %v475, %v472
  %v560 = vpack.c.b16 %v476, %v473
  %v561 = vpack.c.b16 %v477, %v474
  %v562 = vpack.c.b16 %v481, %v478
  %v563 = vpack.c.b16 %v482, %v479
  %v564 = vpack.c.b16 %v483, %v480
  %v565 = vpack.c.b16 %v487, %v484
  %v566 = vpack.c.b16 %v488, %v485
  %v567 = vpack.c.b16 %v489, %v486
  %v568 = vpack.c.b16 %v493, %v490
  %v569 = vpack.c.b16 %v494, %v491
  %v570 = vpack.c.b16 %v495, %v492
  %v571 = vpack.c.b16 %v499, %v496
  %v572 = vpack.c.b16 %v500, %v497
  %v573 = vpack.c.b16 %v501, %v498
  %v694 = vunpack.c.l.b16 %v214
  %v695 = vunpack.c.l.b16 %v215
  %v696 = vunpack.c.l.b16 %v216
  %v697 = vunpack.c.l.b16 %v217
  %v698 = vunpack.c.l.b16 %v218
  %v699 = vunpack.c.l.b16 %v219
  %v700 = vunpack.c.l.b16 %v220
  %v701 = vunpack.c.l.b16 %v221
  %v702 = vunpack.c.l.b16 %v222
  %v703 = vunpack.c.l.b16 %v223
  %v704 = vunpack.c.l.b16 %v224
  %v705 = vunpack.c.l.b16 %v225
  %v706 = vunpack.c.l.b16 %v226
  %v707 = vunpack.c.l.b16 %v227
  %v708 = vunpack.c.l.b16 %v228
  %v709 = vunpack.c.l.b16 %v229
  %v710 = vunpack.c.l.b16 %v230
  %v711 = vunpack.c.l.b16 %v231
  %v712 = vunpack.c.l.b16 %v232
  %v713 = vunpack.c.l.b16 %v233
  %v714 = vunpack.c.l.b16 %v234
  %v715 = vunpack.c.l.b16 %v235
  %v716 = vunpack.c.l.b16 %v236
  %v717 = vunpack.c.l.b16 %v237
  %v718 = vunpack.c.l.b16 %v238
  %v719 = vunpack.c.l.b16 %v239
  %v720 = vunpack.c.l.b16 %v240
  %v721 = vunpack.c.l.b16 %v241
  %v722 = vunpack.c.l.b16 %v242
  %v723 = vunpack.c.l.b16 %v243
  %v724 = vunpack.c.l.b16 %v244
  %v725 = vunpack.c.l.b16 %v245
  %v726 = vunpack.c.l.b16 %v246
  %v727 = vunpack.c.l.b16 %v247
  %v728 = vunpack.c.l.b16 %v248
  %v729 = vunpack.c.l.b16 %v249
  %v730 = vunpack.c.l.b16 %v250
  %v731 = vunpack.c.l.b16 %v251
  %v732 = vunpack.c.l.b16 %v252
  %v733 = vunpack.c.l.b16 %v253
  %v734 = vunpack.c.l.b16 %v254
  %v735 = vunpack.c.l.b16 %v255
  %v736 = vunpack.c.l.b16 %v256
  %v737 = vunpack.c.l.b16 %v257
  %v738 = vunpack.c.l.b16 %v258
  %v739 = vunpack.c.l.b16 %v259
  %v740 = vunpack.c.l.b16 %v260
  %v741 = vunpack.c.l.b16 %v261
  %v742 = vpack.c.b16 %v695, %v694
  %v743 = vpack.c.b16 %v697, %v696
  %v744 = vpack.c.b16 %v699, %v698
  %v745 = vpack.c.b16 %v701, %v700
  %v746 = vpack.c.b16 %v703, %v702
  %v747 = vpack.c.b16 %v705, %v704
  %v748 = vpack.c.b16 %v707, %v706
  %v749 = vpack.c.b16 %v709, %v708
  %v750 = vpack.c.b16 %v711, %v710
  %v751 = vpack.c.b16 %v713, %v712
  %v752 = vpack.c.b16 %v715, %v714
  %v753 = vpack.c.b16 %v717, %v716
  %v754 = vpack.c.b16 %v719, %v718
  %v755 = vpack.c.b16 %v721, %v720
  %v756 = vpack.c.b16 %v723, %v722
  %v757 = vpack.c.b16 %v725, %v724
  %v758 = vpack.c.b16 %v727, %v726
  %v759 = vpack.c.b16 %v729, %v728
  %v760 = vpack.c.b16 %v731, %v730
  %v761 = vpack.c.b16 %v733, %v732
  %v762 = vpack.c.b16 %v735, %v734
  %v763 = vpack.c.b16 %v737, %v736
  %v764 = vpack.c.b16 %v739, %v738
  %v765 = vpack.c.b16 %v741, %v740
  %790 = vmatprep.subr.bf16.mxu0 0
  %791 = vmatpush1.bf16.msra.mxu0 %v742
  %792 = vmatprep.subr.bf16.mxu0 0
  %793 = vmatpush1.bf16.msra.mxu0 %v743
  %794 = vmatprep.subr.bf16.mxu0 0
  %795 = vmatpush1.bf16.msra.mxu0 %v744
  %796 = vmatprep.subr.bf16.mxu0 0
  %797 = vmatpush1.bf16.msra.mxu0 %v745
  %798 = vmatprep.subr.bf16.mxu0 0
  %799 = vmatpush1.bf16.msra.mxu0 %v746
  %800 = vmatprep.subr.bf16.mxu0 0
  %801 = vmatpush1.bf16.msra.mxu0 %v747
  %802 = vmatprep.subr.bf16.mxu0 0
  %803 = vmatpush1.bf16.msra.mxu0 %v748
  %804 = vmatprep.subr.bf16.mxu0 0
  %805 = vmatpush1.bf16.msra.mxu0 %v749
  %806 = vmatprep.subr.bf16.mxu0 0
  %807 = vmatpush1.bf16.msra.mxu0 %v750
  %808 = vmatprep.subr.bf16.mxu0 0
  %809 = vmatpush1.bf16.msra.mxu0 %v751
  %810 = vmatprep.subr.bf16.mxu0 0
  %811 = vmatpush1.bf16.msra.mxu0 %v752
  %812 = vmatprep.subr.bf16.mxu0 0
  %813 = vmatpush1.bf16.msra.mxu0 %v753
  %814 = vmatprep.subr.bf16.mxu0 0
  %815 = vmatpush1.bf16.msra.mxu0 %v754
  %816 = vmatprep.subr.bf16.mxu0 0
  %817 = vmatpush1.bf16.msra.mxu0 %v755
  %818 = vmatprep.subr.bf16.mxu0 0
  %819 = vmatpush1.bf16.msra.mxu0 %v756
  %820 = vmatprep.subr.bf16.mxu0 0
  %821 = vmatpush1.bf16.msra.mxu0 %v757
  %822 = vmatprep.mubr.bf16.mxu0 %v503
  %823 = vmatmul.mubr.bf16.gmra.mrb[0].mxu0 %v502
  %v824 = vpop.f32.mrb[0].mxu0
  %v825 = vadd.f32 0.0, %v824
  %v826 = vpop.f32.mrb[0].mxu0
  %v827 = vpop.f32.mrb[0].mxu0
  %v828 = vadd.f32 0.0, %v827
  %v829 = vpop.f32.mrb[0].mxu0
  %830 = vmatprep.mubr.bf16.mxu0 %v506
  %831 = vmatmul.mubr.bf16.gmra.mrb[0].mxu0 %v505
  %v832 = vpop.f32.mrb[0].mxu0
  %v833 = vadd.f32 0.0, %v832
  %v834 = vpop.f32.mrb[0].mxu0
  %v835 = vpop.f32.mrb[0].mxu0
  %v836 = vadd.f32 0.0, %v835
  %v837 = vpop.f32.mrb[0].mxu0
  %838 = vmatprep.mubr.bf16.mxu0 %v509
  %839 = vmatmul.mubr.bf16.gmra.mrb[0].mxu0 %v508
  %v840 = vpop.f32.mrb[0].mxu0
  %v841 = vadd.f32 0.0, %v840
  %v842 = vpop.f32.mrb[0].mxu0
  %v843 = vpop.f32.mrb[0].mxu0
  %v844 = vadd.f32 0.0, %v843
  %v845 = vpop.f32.mrb[0].mxu0
  %846 = vmatprep.mubr.bf16.mxu0 %v512
  %847 = vmatmul.mubr.bf16.gmra.mrb[0].mxu0 %v511
  %v848 = vpop.f32.mrb[0].mxu0
  %v849 = vadd.f32 0.0, %v848
  %v850 = vpop.f32.mrb[0].mxu0
  %v851 = vpop.f32.mrb[0].mxu0
  %v852 = vadd.f32 0.0, %v851
  %v853 = vpop.f32.mrb[0].mxu0
  %854 = vmatprep.mubr.bf16.mxu0 %v515
  %855 = vmatmul.mubr.bf16.gmra.mrb[0].mxu0 %v514
  %v856 = vpop.f32.mrb[0].mxu0
  %v857 = vadd.f32 0.0, %v856
  %v858 = vpop.f32.mrb[0].mxu0
  %v859 = vpop.f32.mrb[0].mxu0
  %v860 = vadd.f32 0.0, %v859
  %v861 = vpop.f32.mrb[0].mxu0
  %862 = vmatprep.mubr.bf16.mxu0 %v518
  %863 = vmatmul.mubr.bf16.gmra.mrb[0].mxu0 %v517
  %v864 = vpop.f32.mrb[0].mxu0
  %v865 = vadd.f32 0.0, %v864
  %v866 = vpop.f32.mrb[0].mxu0
  %v867 = vpop.f32.mrb[0].mxu0
  %v868 = vadd.f32 0.0, %v867
  %v869 = vpop.f32.mrb[0].mxu0
  %870 = vmatprep.mubr.bf16.mxu0 %v521
  %871 = vmatmul.mubr.bf16.gmra.mrb[0].mxu0 %v520
  %v872 = vpop.f32.mrb[0].mxu0
  %v873 = vadd.f32 0.0, %v872
  %v874 = vpop.f32.mrb[0].mxu0
  %v875 = vpop.f32.mrb[0].mxu0
  %v876 = vadd.f32 0.0, %v875
  %v877 = vpop.f32.mrb[0].mxu0
  %878 = vmatprep.mubr.bf16.mxu0 %v524
  %879 = vmatmul.mubr.bf16.gmra.mrb[0].mxu0 %v523
  %v880 = vpop.f32.mrb[0].mxu0
  %v881 = vadd.f32 0.0, %v880
  %v882 = vpop.f32.mrb[0].mxu0
  %v883 = vpop.f32.mrb[0].mxu0
  %v884 = vadd.f32 0.0, %v883
  %v885 = vpop.f32.mrb[0].mxu0
  %886 = vmatprep.mubr.bf16.mxu0 %v527
  %887 = vmatmul.mubr.bf16.gmra.mrb[0].mxu0 %v526
  %v888 = vpop.f32.mrb[0].mxu0
  %v889 = vadd.f32 0.0, %v888
  %v890 = vpop.f32.mrb[0].mxu0
  %v891 = vpop.f32.mrb[0].mxu0
  %v892 = vadd.f32 0.0, %v891
  %v893 = vpop.f32.mrb[0].mxu0
  %894 = vmatprep.mubr.bf16.mxu0 %v530
  %895 = vmatmul.mubr.bf16.gmra.mrb[0].mxu0 %v529
  %v896 = vpop.f32.mrb[0].mxu0
  %v897 = vadd.f32 0.0, %v896
  %v898 = vpop.f32.mrb[0].mxu0
  %v899 = vpop.f32.mrb[0].mxu0
  %v900 = vadd.f32 0.0, %v899
  %v901 = vpop.f32.mrb[0].mxu0
  %902 = vmatprep.mubr.bf16.mxu0 %v533
  %903 = vmatmul.mubr.bf16.gmra.mrb[0].mxu0 %v532
  %v904 = vpop.f32.mrb[0].mxu0
  %v905 = vadd.f32 0.0, %v904
  %v906 = vpop.f32.mrb[0].mxu0
  %v907 = vpop.f32.mrb[0].mxu0
  %v908 = vadd.f32 0.0, %v907
  %v909 = vpop.f32.mrb[0].mxu0
  %910 = vmatprep.mubr.bf16.mxu0 %v536
  %911 = vmatmul.mubr.bf16.gmra.mrb[0].mxu0 %v535
  %v912 = vpop.f32.mrb[0].mxu0
  %v913 = vadd.f32 0.0, %v912
  %v914 = vpop.f32.mrb[0].mxu0
  %v915 = vpop.f32.mrb[0].mxu0
  %v916 = vadd.f32 0.0, %v915
  %v917 = vpop.f32.mrb[0].mxu0
  %918 = vmatprep.mubr.bf16.mxu0 %v539
  %919 = vmatmul.mubr.bf16.gmra.mrb[0].mxu0 %v538
  %v920 = vpop.f32.mrb[0].mxu0
  %v921 = vadd.f32 0.0, %v920
  %v922 = vpop.f32.mrb[0].mxu0
  %v923 = vpop.f32.mrb[0].mxu0
  %v924 = vadd.f32 0.0, %v923
  %v925 = vpop.f32.mrb[0].mxu0
  %926 = vmatprep.mubr.bf16.mxu0 %v542
  %927 = vmatmul.mubr.bf16.gmra.mrb[0].mxu0 %v541
  %v928 = vpop.f32.mrb[0].mxu0
  %v929 = vadd.f32 0.0, %v928
  %v930 = vpop.f32.mrb[0].mxu0
  %v931 = vpop.f32.mrb[0].mxu0
  %v932 = vadd.f32 0.0, %v931
  %v933 = vpop.f32.mrb[0].mxu0
  %934 = vmatprep.mubr.bf16.mxu0 %v545
  %935 = vmatmul.mubr.bf16.gmra.mrb[0].mxu0 %v544
  %v936 = vpop.f32.mrb[0].mxu0
  %v937 = vadd.f32 0.0, %v936
  %v938 = vpop.f32.mrb[0].mxu0
  %v939 = vpop.f32.mrb[0].mxu0
  %v940 = vadd.f32 0.0, %v939
  %v941 = vpop.f32.mrb[0].mxu0
  %942 = vmatprep.mubr.bf16.mxu0 %v548
  %943 = vmatmul.mubr.bf16.gmra.mrb[0].mxu0 %v547
  %v944 = vpop.f32.mrb[0].mxu0
  %v945 = vadd.f32 0.0, %v944
  %v946 = vpop.f32.mrb[0].mxu0
  %v947 = vpop.f32.mrb[0].mxu0
  %v948 = vadd.f32 0.0, %v947
  %v949 = vpop.f32.mrb[0].mxu0
  %950 = vmatprep.mubr.bf16.mxu0 %v551
  %951 = vmatmul.mubr.bf16.gmra.mrb[0].mxu0 %v550
  %v952 = vpop.f32.mrb[0].mxu0
  %v953 = vadd.f32 0.0, %v952
  %v954 = vpop.f32.mrb[0].mxu0
  %v955 = vpop.f32.mrb[0].mxu0
  %v956 = vadd.f32 0.0, %v955
  %v957 = vpop.f32.mrb[0].mxu0
  %958 = vmatprep.mubr.bf16.mxu0 %v554
  %959 = vmatmul.mubr.bf16.gmra.mrb[0].mxu0 %v553
  %v960 = vpop.f32.mrb[0].mxu0
  %v961 = vadd.f32 0.0, %v960
  %v962 = vpop.f32.mrb[0].mxu0
  %v963 = vpop.f32.mrb[0].mxu0
  %v964 = vadd.f32 0.0, %v963
  %v965 = vpop.f32.mrb[0].mxu0
  %966 = vmatprep.mubr.bf16.mxu0 %v557
  %967 = vmatmul.mubr.bf16.gmra.mrb[0].mxu0 %v556
  %v968 = vpop.f32.mrb[0].mxu0
  %v969 = vadd.f32 0.0, %v968
  %v970 = vpop.f32.mrb[0].mxu0
  %v971 = vpop.f32.mrb[0].mxu0
  %v972 = vadd.f32 0.0, %v971
  %v973 = vpop.f32.mrb[0].mxu0
  %974 = vmatprep.mubr.bf16.mxu0 %v560
  %975 = vmatmul.mubr.bf16.gmra.mrb[0].mxu0 %v559
  %v976 = vpop.f32.mrb[0].mxu0
  %v977 = vadd.f32 0.0, %v976
  %v978 = vpop.f32.mrb[0].mxu0
  %v979 = vpop.f32.mrb[0].mxu0
  %v980 = vadd.f32 0.0, %v979
  %v981 = vpop.f32.mrb[0].mxu0
  %982 = vmatprep.mubr.bf16.mxu0 %v563
  %983 = vmatmul.mubr.bf16.gmra.mrb[0].mxu0 %v562
  %v984 = vpop.f32.mrb[0].mxu0
  %v985 = vadd.f32 0.0, %v984
  %v986 = vpop.f32.mrb[0].mxu0
  %v987 = vpop.f32.mrb[0].mxu0
  %v988 = vadd.f32 0.0, %v987
  %v989 = vpop.f32.mrb[0].mxu0
  %990 = vmatprep.mubr.bf16.mxu0 %v566
  %991 = vmatmul.mubr.bf16.gmra.mrb[0].mxu0 %v565
  %v992 = vpop.f32.mrb[0].mxu0
  %v993 = vadd.f32 0.0, %v992
  %v994 = vpop.f32.mrb[0].mxu0
  %v995 = vpop.f32.mrb[0].mxu0
  %v996 = vadd.f32 0.0, %v995
  %v997 = vpop.f32.mrb[0].mxu0
  %998 = vmatprep.mubr.bf16.mxu0 %v569
  %999 = vmatmul.mubr.bf16.gmra.mrb[0].mxu0 %v568
  %v1000 = vpop.f32.mrb[0].mxu0
  %v1001 = vadd.f32 0.0, %v1000
  %v1002 = vpop.f32.mrb[0].mxu0
  %v1003 = vpop.f32.mrb[0].mxu0
  %v1004 = vadd.f32 0.0, %v1003
  %v1005 = vpop.f32.mrb[0].mxu0
  %1006 = vmatprep.mubr.bf16.mxu0 %v572
  %1007 = vmatmul.mubr.bf16.gmra.mrb[0].mxu0 %v571
  %v1008 = vpop.f32.mrb[0].mxu0
  %v1009 = vadd.f32 0.0, %v1008
  %v1010 = vpop.f32.mrb[0].mxu0
  %v1011 = vpop.f32.mrb[0].mxu0
  %v1012 = vadd.f32 0.0, %v1011
  %v1013 = vpop.f32.mrb[0].mxu0
  %1014 = vdwg.mxu0
  %1015 = vmatprep.subr.bf16.mxu0 0
  %1016 = vmatpush1.bf16.msra.mxu0 %v758
  %1017 = vmatprep.subr.bf16.mxu0 0
  %1018 = vmatpush1.bf16.msra.mxu0 %v759
  %1019 = vmatprep.subr.bf16.mxu0 0
  %1020 = vmatpush1.bf16.msra.mxu0 %v760
  %1021 = vmatprep.subr.bf16.mxu0 0
  %1022 = vmatpush1.bf16.msra.mxu0 %v761
  %1023 = vmatprep.subr.bf16.mxu0 0
  %1024 = vmatpush1.bf16.msra.mxu0 %v762
  %1025 = vmatprep.subr.bf16.mxu0 0
  %1026 = vmatpush1.bf16.msra.mxu0 %v763
  %1027 = vmatprep.subr.bf16.mxu0 0
  %1028 = vmatpush1.bf16.msra.mxu0 %v764
  %1029 = vmatprep.subr.bf16.mxu0 0
  %1030 = vmatpush1.bf16.msra.mxu0 %v765
  %1031 = vmatprep.subr.bf16.mxu0 0
  %1032 = vmatpush1.bf16.msra.mxu0 0
  %1033 = vmatprep.subr.bf16.mxu0 0
  %1034 = vmatpush1.bf16.msra.mxu0 0
  %1035 = vmatprep.subr.bf16.mxu0 0
  %1036 = vmatpush1.bf16.msra.mxu0 0
  %1037 = vmatprep.subr.bf16.mxu0 0
  %1038 = vmatpush1.bf16.msra.mxu0 0
  %1039 = vmatprep.subr.bf16.mxu0 0
  %1040 = vmatpush1.bf16.msra.mxu0 0
  %1041 = vmatprep.subr.bf16.mxu0 0
  %1042 = vmatpush1.bf16.msra.mxu0 0
  %1043 = vmatprep.subr.bf16.mxu0 0
  %1044 = vmatpush1.bf16.msra.mxu0 0
  %1045 = vmatprep.subr.bf16.mxu0 0
  %1046 = vmatpush1.bf16.msra.mxu0 0
  %1047 = vmatprep.mubr.bf16.mxu0 0
  %1048 = vmatmul.mubr.bf16.gmra.mrb[0].mxu0 %v504
  %v1049 = vpop.f32.mrb[0].mxu0
  %v1050 = vadd.f32 %v825, %v1049
  %v1051 = vpop.f32.mrb[0].mxu0
  %v1052 = vpop.f32.mrb[0].mxu0
  %v1053 = vadd.f32 %v828, %v1052
  %v1054 = vpop.f32.mrb[0].mxu0
  %1055 = vmatprep.mubr.bf16.mxu0 0
  %1056 = vmatmul.mubr.bf16.gmra.mrb[0].mxu0 %v507
  %v1057 = vpop.f32.mrb[0].mxu0
  %v1058 = vadd.f32 %v833, %v1057
  %v1059 = vpop.f32.mrb[0].mxu0
  %v1060 = vpop.f32.mrb[0].mxu0
  %v1061 = vadd.f32 %v836, %v1060
  %v1062 = vpop.f32.mrb[0].mxu0
  %1063 = vmatprep.mubr.bf16.mxu0 0
  %1064 = vmatmul.mubr.bf16.gmra.mrb[0].mxu0 %v510
  %v1065 = vpop.f32.mrb[0].mxu0
  %v1066 = vadd.f32 %v841, %v1065
  %v1067 = vpop.f32.mrb[0].mxu0
  %v1068 = vpop.f32.mrb[0].mxu0
  %v1069 = vadd.f32 %v844, %v1068
  %v1070 = vpop.f32.mrb[0].mxu0
  %1071 = vmatprep.mubr.bf16.mxu0 0
  %1072 = vmatmul.mubr.bf16.gmra.mrb[0].mxu0 %v513
  %v1073 = vpop.f32.mrb[0].mxu0
  %v1074 = vadd.f32 %v849, %v1073
  %v1075 = vpop.f32.mrb[0].mxu0
  %v1076 = vpop.f32.mrb[0].mxu0
  %v1077 = vadd.f32 %v852, %v1076
  %v1078 = vpop.f32.mrb[0].mxu0
  %1079 = vmatprep.mubr.bf16.mxu0 0
  %1080 = vmatmul.mubr.bf16.gmra.mrb[0].mxu0 %v516
  %v1081 = vpop.f32.mrb[0].mxu0
  %v1082 = vadd.f32 %v857, %v1081
  %v1083 = vpop.f32.mrb[0].mxu0
  %v1084 = vpop.f32.mrb[0].mxu0
  %v1085 = vadd.f32 %v860, %v1084
  %v1086 = vpop.f32.mrb[0].mxu0
  %1087 = vmatprep.mubr.bf16.mxu0 0
  %1088 = vmatmul.mubr.bf16.gmra.mrb[0].mxu0 %v519
  %v1089 = vpop.f32.mrb[0].mxu0
  %v1090 = vadd.f32 %v865, %v1089
  %v1091 = vpop.f32.mrb[0].mxu0
  %v1092 = vpop.f32.mrb[0].mxu0
  %v1093 = vadd.f32 %v868, %v1092
  %v1094 = vpop.f32.mrb[0].mxu0
  %1095 = vmatprep.mubr.bf16.mxu0 0
  %1096 = vmatmul.mubr.bf16.gmra.mrb[0].mxu0 %v522
  %v1097 = vpop.f32.mrb[0].mxu0
  %v1098 = vadd.f32 %v873, %v1097
  %v1099 = vpop.f32.mrb[0].mxu0
  %v1100 = vpop.f32.mrb[0].mxu0
  %v1101 = vadd.f32 %v876, %v1100
  %v1102 = vpop.f32.mrb[0].mxu0
  %1103 = vmatprep.mubr.bf16.mxu0 0
  %1104 = vmatmul.mubr.bf16.gmra.mrb[0].mxu0 %v525
  %v1105 = vpop.f32.mrb[0].mxu0
  %v1106 = vadd.f32 %v881, %v1105
  %v1107 = vpop.f32.mrb[0].mxu0
  %v1108 = vpop.f32.mrb[0].mxu0
  %v1109 = vadd.f32 %v884, %v1108
  %v1110 = vpop.f32.mrb[0].mxu0
  %1111 = vmatprep.mubr.bf16.mxu0 0
  %1112 = vmatmul.mubr.bf16.gmra.mrb[0].mxu0 %v528
  %v1113 = vpop.f32.mrb[0].mxu0
  %v1114 = vadd.f32 %v889, %v1113
  %v1115 = vpop.f32.mrb[0].mxu0
  %v1116 = vpop.f32.mrb[0].mxu0
  %v1117 = vadd.f32 %v892, %v1116
  %v1118 = vpop.f32.mrb[0].mxu0
  %1119 = vmatprep.mubr.bf16.mxu0 0
  %1120 = vmatmul.mubr.bf16.gmra.mrb[0].mxu0 %v531
  %v1121 = vpop.f32.mrb[0].mxu0
  %v1122 = vadd.f32 %v897, %v1121
  %v1123 = vpop.f32.mrb[0].mxu0
  %v1124 = vpop.f32.mrb[0].mxu0
  %v1125 = vadd.f32 %v900, %v1124
  %v1126 = vpop.f32.mrb[0].mxu0
  %1127 = vmatprep.mubr.bf16.mxu0 0
  %1128 = vmatmul.mubr.bf16.gmra.mrb[0].mxu0 %v534
  %v1129 = vpop.f32.mrb[0].mxu0
  %v1130 = vadd.f32 %v905, %v1129
  %v1131 = vpop.f32.mrb[0].mxu0
  %v1132 = vpop.f32.mrb[0].mxu0
  %v1133 = vadd.f32 %v908, %v1132
  %v1134 = vpop.f32.mrb[0].mxu0
  %1135 = vmatprep.mubr.bf16.mxu0 0
  %1136 = vmatmul.mubr.bf16.gmra.mrb[0].mxu0 %v537
  %v1137 = vpop.f32.mrb[0].mxu0
  %v1138 = vadd.f32 %v913, %v1137
  %v1139 = vpop.f32.mrb[0].mxu0
  %v1140 = vpop.f32.mrb[0].mxu0
  %v1141 = vadd.f32 %v916, %v1140
  %v1142 = vpop.f32.mrb[0].mxu0
  %1143 = vmatprep.mubr.bf16.mxu0 0
  %1144 = vmatmul.mubr.bf16.gmra.mrb[0].mxu0 %v540
  %v1145 = vpop.f32.mrb[0].mxu0
  %v1146 = vadd.f32 %v921, %v1145
  %v1147 = vpop.f32.mrb[0].mxu0
  %v1148 = vpop.f32.mrb[0].mxu0
  %v1149 = vadd.f32 %v924, %v1148
  %v1150 = vpop.f32.mrb[0].mxu0
  %1151 = vmatprep.mubr.bf16.mxu0 0
  %1152 = vmatmul.mubr.bf16.gmra.mrb[0].mxu0 %v543
  %v1153 = vpop.f32.mrb[0].mxu0
  %v1154 = vadd.f32 %v929, %v1153
  %v1155 = vpop.f32.mrb[0].mxu0
  %v1156 = vpop.f32.mrb[0].mxu0
  %v1157 = vadd.f32 %v932, %v1156
  %v1158 = vpop.f32.mrb[0].mxu0
  %1159 = vmatprep.mubr.bf16.mxu0 0
  %1160 = vmatmul.mubr.bf16.gmra.mrb[0].mxu0 %v546
  %v1161 = vpop.f32.mrb[0].mxu0
  %v1162 = vadd.f32 %v937, %v1161
  %v1163 = vpop.f32.mrb[0].mxu0
  %v1164 = vpop.f32.mrb[0].mxu0
  %v1165 = vadd.f32 %v940, %v1164
  %v1166 = vpop.f32.mrb[0].mxu0
  %1167 = vmatprep.mubr.bf16.mxu0 0
  %1168 = vmatmul.mubr.bf16.gmra.mrb[0].mxu0 %v549
  %v1169 = vpop.f32.mrb[0].mxu0
  %v1170 = vadd.f32 %v945, %v1169
  %v1171 = vpop.f32.mrb[0].mxu0
  %v1172 = vpop.f32.mrb[0].mxu0
  %v1173 = vadd.f32 %v948, %v1172
  %v1174 = vpop.f32.mrb[0].mxu0
  %1175 = vmatprep.mubr.bf16.mxu0 0
  %1176 = vmatmul.mubr.bf16.gmra.mrb[0].mxu0 %v552
  %v1177 = vpop.f32.mrb[0].mxu0
  %v1178 = vadd.f32 %v953, %v1177
  %v1179 = vpop.f32.mrb[0].mxu0
  %v1180 = vpop.f32.mrb[0].mxu0
  %v1181 = vadd.f32 %v956, %v1180
  %v1182 = vpop.f32.mrb[0].mxu0
  %1183 = vmatprep.mubr.bf16.mxu0 0
  %1184 = vmatmul.mubr.bf16.gmra.mrb[0].mxu0 %v555
  %v1185 = vpop.f32.mrb[0].mxu0
  %v1186 = vadd.f32 %v961, %v1185
  %v1187 = vpop.f32.mrb[0].mxu0
  %v1188 = vpop.f32.mrb[0].mxu0
  %v1189 = vadd.f32 %v964, %v1188
  %v1190 = vpop.f32.mrb[0].mxu0
  %1191 = vmatprep.mubr.bf16.mxu0 0
  %1192 = vmatmul.mubr.bf16.gmra.mrb[0].mxu0 %v558
  %v1193 = vpop.f32.mrb[0].mxu0
  %v1194 = vadd.f32 %v969, %v1193
  %v1195 = vpop.f32.mrb[0].mxu0
  %v1196 = vpop.f32.mrb[0].mxu0
  %v1197 = vadd.f32 %v972, %v1196
  %v1198 = vpop.f32.mrb[0].mxu0
  %1199 = vmatprep.mubr.bf16.mxu0 0
  %1200 = vmatmul.mubr.bf16.gmra.mrb[0].mxu0 %v561
  %v1201 = vpop.f32.mrb[0].mxu0
  %v1202 = vadd.f32 %v977, %v1201
  %v1203 = vpop.f32.mrb[0].mxu0
  %v1204 = vpop.f32.mrb[0].mxu0
  %v1205 = vadd.f32 %v980, %v1204
  %v1206 = vpop.f32.mrb[0].mxu0
  %1207 = vmatprep.mubr.bf16.mxu0 0
  %1208 = vmatmul.mubr.bf16.gmra.mrb[0].mxu0 %v564
  %v1209 = vpop.f32.mrb[0].mxu0
  %v1210 = vadd.f32 %v985, %v1209
  %v1211 = vpop.f32.mrb[0].mxu0
  %v1212 = vpop.f32.mrb[0].mxu0
  %v1213 = vadd.f32 %v988, %v1212
  %v1214 = vpop.f32.mrb[0].mxu0
  %1215 = vmatprep.mubr.bf16.mxu0 0
  %1216 = vmatmul.mubr.bf16.gmra.mrb[0].mxu0 %v567
  %v1217 = vpop.f32.mrb[0].mxu0
  %v1218 = vadd.f32 %v993, %v1217
  %v1219 = vpop.f32.mrb[0].mxu0
  %v1220 = vpop.f32.mrb[0].mxu0
  %v1221 = vadd.f32 %v996, %v1220
  %v1222 = vpop.f32.mrb[0].mxu0
  %1223 = vmatprep.mubr.bf16.mxu0 0
  %1224 = vmatmul.mubr.bf16.gmra.mrb[0].mxu0 %v570
  %v1225 = vpop.f32.mrb[0].mxu0
  %v1226 = vadd.f32 %v1001, %v1225
  %v1227 = vpop.f32.mrb[0].mxu0
  %v1228 = vpop.f32.mrb[0].mxu0
  %v1229 = vadd.f32 %v1004, %v1228
  %v1230 = vpop.f32.mrb[0].mxu0
  %1231 = vmatprep.mubr.bf16.mxu0 0
  %1232 = vmatmul.mubr.bf16.gmra.mrb[0].mxu0 %v573
  %v1233 = vpop.f32.mrb[0].mxu0
  %v1234 = vadd.f32 %v1009, %v1233
  %v1235 = vpop.f32.mrb[0].mxu0
  %v1236 = vpop.f32.mrb[0].mxu0
  %v1237 = vadd.f32 %v1012, %v1236
  %v1238 = vpop.f32.mrb[0].mxu0
  %1239 = vdwg.mxu0
  %v1240 = vadd.f32 %v70, %v1050
  %v1241 = vadd.f32 %v71, %v1053
  %v1242 = vadd.f32 %v72, %v1058
  %v1243 = vadd.f32 %v73, %v1061
  %v1244 = vadd.f32 %v74, %v1066
  %v1245 = vadd.f32 %v75, %v1069
  %v1246 = vadd.f32 %v76, %v1074
  %v1247 = vadd.f32 %v77, %v1077
  %v1248 = vadd.f32 %v78, %v1082
  %v1249 = vadd.f32 %v79, %v1085
  %v1250 = vadd.f32 %v80, %v1090
  %v1251 = vadd.f32 %v81, %v1093
  %v1252 = vadd.f32 %v82, %v1098
  %v1253 = vadd.f32 %v83, %v1101
  %v1254 = vadd.f32 %v84, %v1106
  %v1255 = vadd.f32 %v85, %v1109
  %v1256 = vadd.f32 %v86, %v1114
  %v1257 = vadd.f32 %v87, %v1117
  %v1258 = vadd.f32 %v88, %v1122
  %v1259 = vadd.f32 %v89, %v1125
  %v1260 = vadd.f32 %v90, %v1130
  %v1261 = vadd.f32 %v91, %v1133
  %v1262 = vadd.f32 %v92, %v1138
  %v1263 = vadd.f32 %v93, %v1141
  %v1264 = vadd.f32 %v94, %v1146
  %v1265 = vadd.f32 %v95, %v1149
  %v1266 = vadd.f32 %v96, %v1154
  %v1267 = vadd.f32 %v97, %v1157
  %v1268 = vadd.f32 %v98, %v1162
  %v1269 = vadd.f32 %v99, %v1165
  %v1270 = vadd.f32 %v100, %v1170
  %v1271 = vadd.f32 %v101, %v1173
  %v1272 = vadd.f32 %v102, %v1178
  %v1273 = vadd.f32 %v103, %v1181
  %v1274 = vadd.f32 %v104, %v1186
  %v1275 = vadd.f32 %v105, %v1189
  %v1276 = vadd.f32 %v106, %v1194
  %v1277 = vadd.f32 %v107, %v1197
  %v1278 = vadd.f32 %v108, %v1202
  %v1279 = vadd.f32 %v109, %v1205
  %v1280 = vadd.f32 %v110, %v1210
  %v1281 = vadd.f32 %v111, %v1213
  %v1282 = vadd.f32 %v112, %v1218
  %v1283 = vadd.f32 %v113, %v1221
  %v1284 = vadd.f32 %v114, %v1226
  %v1285 = vadd.f32 %v115, %v1229
  %v1286 = vadd.f32 %v116, %v1234
  %v1287 = vadd.f32 %v117, %v1237
  %1288 = vst [vmem:[#allocation2] sm:$0xff] %v1240
  %1289 = vst [vmem:[#allocation2 + $0x8] sm:$0xff] %v1241
  %1290 = vst [vmem:[#allocation2 + $0x10] sm:$0xff] %v1242
  %1291 = vst [vmem:[#allocation2 + $0x18] sm:$0xff] %v1243
  %1292 = vst [vmem:[#allocation2 + $0x20] sm:$0xff] %v1244
  %1293 = vst [vmem:[#allocation2 + $0x28] sm:$0xff] %v1245
  %1294 = vst [vmem:[#allocation2 + $0x30] sm:$0xff] %v1246
  %1295 = vst [vmem:[#allocation2 + $0x38] sm:$0xff] %v1247
  %1296 = vst [vmem:[#allocation2 + $0x40] sm:$0xff] %v1248
  %1297 = vst [vmem:[#allocation2 + $0x48] sm:$0xff] %v1249
  %1298 = vst [vmem:[#allocation2 + $0x50] sm:$0xff] %v1250
  %1299 = vst [vmem:[#allocation2 + $0x58] sm:$0xff] %v1251
  %1300 = vst [vmem:[#allocation2 + $0x60] sm:$0xff] %v1252
  %1301 = vst [vmem:[#allocation2 + $0x68] sm:$0xff] %v1253
  %1302 = vst [vmem:[#allocation2 + $0x70] sm:$0xff] %v1254
  %1303 = vst [vmem:[#allocation2 + $0x78] sm:$0xff] %v1255
  %1304 = vst [vmem:[#allocation2 + $0x80] sm:$0xff] %v1256
  %1305 = vst [vmem:[#allocation2 + $0x88] sm:$0xff] %v1257
  %1306 = vst [vmem:[#allocation2 + $0x90] sm:$0xff] %v1258
  %1307 = vst [vmem:[#allocation2 + $0x98] sm:$0xff] %v1259
  %1308 = vst [vmem:[#allocation2 + $0xa0] sm:$0xff] %v1260
  %1309 = vst [vmem:[#allocation2 + $0xa8] sm:$0xff] %v1261
  %1310 = vst [vmem:[#allocation2 + $0xb0] sm:$0xff] %v1262
  %1311 = vst [vmem:[#allocation2 + $0xb8] sm:$0xff] %v1263
  %1312 = vst [vmem:[#allocation2 + $0xc0] sm:$0xff] %v1264
  %1313 = vst [vmem:[#allocation2 + $0xc8] sm:$0xff] %v1265
  %1314 = vst [vmem:[#allocation2 + $0xd0] sm:$0xff] %v1266
  %1315 = vst [vmem:[#allocation2 + $0xd8] sm:$0xff] %v1267
  %1316 = vst [vmem:[#allocation2 + $0xe0] sm:$0xff] %v1268
  %1317 = vst [vmem:[#allocation2 + $0xe8] sm:$0xff] %v1269
  %1318 = vst [vmem:[#allocation2 + $0xf0] sm:$0xff] %v1270
  %1319 = vst [vmem:[#allocation2 + $0xf8] sm:$0xff] %v1271
  %1320 = vst [vmem:[#allocation2 + $0x100] sm:$0xff] %v1272
  %1321 = vst [vmem:[#allocation2 + $0x108] sm:$0xff] %v1273
  %1322 = vst [vmem:[#allocation2 + $0x110] sm:$0xff] %v1274
  %1323 = vst [vmem:[#allocation2 + $0x118] sm:$0xff] %v1275
  %1324 = vst [vmem:[#allocation2 + $0x120] sm:$0xff] %v1276
  %1325 = vst [vmem:[#allocation2 + $0x128] sm:$0xff] %v1277
  %1326 = vst [vmem:[#allocation2 + $0x130] sm:$0xff] %v1278
  %1327 = vst [vmem:[#allocation2 + $0x138] sm:$0xff] %v1279
  %1328 = vst [vmem:[#allocation2 + $0x140] sm:$0xff] %v1280
  %1329 = vst [vmem:[#allocation2 + $0x148] sm:$0xff] %v1281
  %1330 = vst [vmem:[#allocation2 + $0x150] sm:$0xff] %v1282
  %1331 = vst [vmem:[#allocation2 + $0x158] sm:$0xff] %v1283
  %1332 = vst [vmem:[#allocation2 + $0x160] sm:$0xff] %v1284
  %1333 = vst [vmem:[#allocation2 + $0x168] sm:$0xff] %v1285
  %1334 = vst [vmem:[#allocation2 + $0x170] sm:$0xff] %v1286
  %1335 = vst [vmem:[#allocation2 + $0x178] sm:$0xff] %v1287
  // Predicated region
  $region22: #{simple_gnn_pallas.2} parent=0 // pred_check
    %p1336 = pneg %p18
  $region23: #{simple_gnn_pallas.2} parent=0 // pred_check_branch
    %1338 = sbr.rel (%p1336) target = $region25
  $region24: #{simple_gnn_pallas.2} parent=0 // pred_region
    %v1339 = vld [vmem:[#allocation2] sm:$0xff]
    %v1340 = vld [vmem:[#allocation2 + $0x8] sm:$0xff]
    %v1341 = vld [vmem:[#allocation2 + $0x10] sm:$0xff]
    %v1342 = vld [vmem:[#allocation2 + $0x18] sm:$0xff]
    %v1343 = vld [vmem:[#allocation2 + $0x20] sm:$0xff]
    %v1344 = vld [vmem:[#allocation2 + $0x28] sm:$0xff]
    %v1345 = vld [vmem:[#allocation2 + $0x30] sm:$0xff]
    %v1346 = vld [vmem:[#allocation2 + $0x38] sm:$0xff]
    %v1347 = vld [vmem:[#allocation2 + $0x40] sm:$0xff]
    %v1348 = vld [vmem:[#allocation2 + $0x48] sm:$0xff]
    %v1349 = vld [vmem:[#allocation2 + $0x50] sm:$0xff]
    %v1350 = vld [vmem:[#allocation2 + $0x58] sm:$0xff]
    %v1351 = vld [vmem:[#allocation2 + $0x60] sm:$0xff]
    %v1352 = vld [vmem:[#allocation2 + $0x68] sm:$0xff]
    %v1353 = vld [vmem:[#allocation2 + $0x70] sm:$0xff]
    %v1354 = vld [vmem:[#allocation2 + $0x78] sm:$0xff]
    %v1355 = vld [vmem:[#allocation2 + $0x80] sm:$0xff]
    %v1356 = vld [vmem:[#allocation2 + $0x88] sm:$0xff]
    %v1357 = vld [vmem:[#allocation2 + $0x90] sm:$0xff]
    %v1358 = vld [vmem:[#allocation2 + $0x98] sm:$0xff]
    %v1359 = vld [vmem:[#allocation2 + $0xa0] sm:$0xff]
    %v1360 = vld [vmem:[#allocation2 + $0xa8] sm:$0xff]
    %v1361 = vld [vmem:[#allocation2 + $0xb0] sm:$0xff]
    %v1362 = vld [vmem:[#allocation2 + $0xb8] sm:$0xff]
    %v1363 = vld [vmem:[#allocation2 + $0xc0] sm:$0xff]
    %v1364 = vld [vmem:[#allocation2 + $0xc8] sm:$0xff]
    %v1365 = vld [vmem:[#allocation2 + $0xd0] sm:$0xff]
    %v1366 = vld [vmem:[#allocation2 + $0xd8] sm:$0xff]
    %v1367 = vld [vmem:[#allocation2 + $0xe0] sm:$0xff]
    %v1368 = vld [vmem:[#allocation2 + $0xe8] sm:$0xff]
    %v1369 = vld [vmem:[#allocation2 + $0xf0] sm:$0xff]
    %v1370 = vld [vmem:[#allocation2 + $0xf8] sm:$0xff]
    %v1371 = vld [vmem:[#allocation2 + $0x100] sm:$0xff]
    %v1372 = vld [vmem:[#allocation2 + $0x108] sm:$0xff]
    %v1373 = vld [vmem:[#allocation2 + $0x110] sm:$0xff]
    %v1374 = vld [vmem:[#allocation2 + $0x118] sm:$0xff]
    %v1375 = vld [vmem:[#allocation2 + $0x120] sm:$0xff]
    %v1376 = vld [vmem:[#allocation2 + $0x128] sm:$0xff]
    %v1377 = vld [vmem:[#allocation2 + $0x130] sm:$0xff]
    %v1378 = vld [vmem:[#allocation2 + $0x138] sm:$0xff]
    %v1379 = vld [vmem:[#allocation2 + $0x140] sm:$0xff]
    %v1380 = vld [vmem:[#allocation2 + $0x148] sm:$0xff]
    %v1381 = vld [vmem:[#allocation2 + $0x150] sm:$0xff]
    %v1382 = vld [vmem:[#allocation2 + $0x158] sm:$0xff]
    %v1383 = vld [vmem:[#allocation2 + $0x160] sm:$0xff]
    %v1384 = vld [vmem:[#allocation2 + $0x168] sm:$0xff]
    %v1385 = vld [vmem:[#allocation2 + $0x170] sm:$0xff]
    %v1386 = vld [vmem:[#allocation2 + $0x178] sm:$0xff]
    %v1387 = vpack.c.bf16 %v1340, %v1339
    %v1388 = vpack.c.bf16 %v1342, %v1341
    %v1389 = vpack.c.bf16 %v1344, %v1343
    %v1390 = vpack.c.bf16 %v1346, %v1345
    %v1391 = vpack.c.bf16 %v1348, %v1347
    %v1392 = vpack.c.bf16 %v1350, %v1349
    %v1393 = vpack.c.bf16 %v1352, %v1351
    %v1394 = vpack.c.bf16 %v1354, %v1353
    %v1395 = vpack.c.bf16 %v1356, %v1355
    %v1396 = vpack.c.bf16 %v1358, %v1357
    %v1397 = vpack.c.bf16 %v1360, %v1359
    %v1398 = vpack.c.bf16 %v1362, %v1361
    %v1399 = vpack.c.bf16 %v1364, %v1363
    %v1400 = vpack.c.bf16 %v1366, %v1365
    %v1401 = vpack.c.bf16 %v1368, %v1367
    %v1402 = vpack.c.bf16 %v1370, %v1369
    %v1403 = vpack.c.bf16 %v1372, %v1371
    %v1404 = vpack.c.bf16 %v1374, %v1373
    %v1405 = vpack.c.bf16 %v1376, %v1375
    %v1406 = vpack.c.bf16 %v1378, %v1377
    %v1407 = vpack.c.bf16 %v1380, %v1379
    %v1408 = vpack.c.bf16 %v1382, %v1381
    %v1409 = vpack.c.bf16 %v1384, %v1383
    %v1410 = vpack.c.bf16 %v1386, %v1385
    %v1411 = vld [vmem:[%s2] sm:$0xf]
    %v1412 = vld [vmem:[%s2 + $0x4] sm:$0xf]
    %v1413 = vld [vmem:[%s2 + $0x8] sm:$0xf]
    %v1414 = vld [vmem:[%s2 + $0xc] sm:$0xf]
    %v1415 = vld [vmem:[%s2 + $0x10] sm:$0xf]
    %v1416 = vld [vmem:[%s2 + $0x14] sm:$0xf]
    %v1417 = vld [vmem:[%s2 + $0x18] sm:$0xf]
    %v1418 = vld [vmem:[%s2 + $0x1c] sm:$0xf]
    %v1419 = vld [vmem:[%s2 + $0x20] sm:$0xf]
    %v1420 = vld [vmem:[%s2 + $0x24] sm:$0xf]
    %v1421 = vld [vmem:[%s2 + $0x28] sm:$0xf]
    %v1422 = vld [vmem:[%s2 + $0x2c] sm:$0xf]
    %v1423 = vld [vmem:[%s2 + $0x30] sm:$0xf]
    %v1424 = vld [vmem:[%s2 + $0x34] sm:$0xf]
    %v1425 = vld [vmem:[%s2 + $0x38] sm:$0xf]
    %v1426 = vld [vmem:[%s2 + $0x3c] sm:$0xf]
    %v1427 = vld [vmem:[%s3] sm:$0x1]
    %v1429 = vlaneseq
    %v1430 = vshrl.u32 %v1429, 7
    %v1431 = vsub.s32 0, %v1430
    %v1432 = vrot.slane %v1427, %v1431
    %v1450 = vunpack.c.l.b16 %v1411
    %v1451 = vunpack.c.l.b16 %v1412
    %v1452 = vunpack.c.l.b16 %v1413
    %v1453 = vunpack.c.l.b16 %v1414
    %v1454 = vunpack.c.l.b16 %v1415
    %v1455 = vunpack.c.l.b16 %v1416
    %v1456 = vunpack.c.l.b16 %v1417
    %v1457 = vunpack.c.l.b16 %v1418
    %v1458 = vunpack.c.l.b16 %v1419
    %v1459 = vunpack.c.l.b16 %v1420
    %v1460 = vunpack.c.l.b16 %v1421
    %v1461 = vunpack.c.l.b16 %v1422
    %v1462 = vunpack.c.l.b16 %v1423
    %v1463 = vunpack.c.l.b16 %v1424
    %v1464 = vunpack.c.l.b16 %v1425
    %v1465 = vunpack.c.l.b16 %v1426
    %v1466 = vpack.c.b16 %v1451, %v1450
    %v1467 = vpack.c.b16 %v1453, %v1452
    %v1468 = vpack.c.b16 %v1455, %v1454
    %v1469 = vpack.c.b16 %v1457, %v1456
    %v1470 = vpack.c.b16 %v1459, %v1458
    %v1471 = vpack.c.b16 %v1461, %v1460
    %v1472 = vpack.c.b16 %v1463, %v1462
    %v1473 = vpack.c.b16 %v1465, %v1464
    %1482 = vmatprep.subr.bf16.mxu0 0
    %1483 = vmatpush1.bf16.msra.mxu0 %v1466
    %1484 = vmatprep.subr.bf16.mxu0 0
    %1485 = vmatpush1.bf16.msra.mxu0 %v1467
    %1486 = vmatprep.subr.bf16.mxu0 0
    %1487 = vmatpush1.bf16.msra.mxu0 %v1468
    %1488 = vmatprep.subr.bf16.mxu0 0
    %1489 = vmatpush1.bf16.msra.mxu0 %v1469
    %1490 = vmatprep.subr.bf16.mxu0 0
    %1491 = vmatpush1.bf16.msra.mxu0 %v1470
    %1492 = vmatprep.subr.bf16.mxu0 0
    %1493 = vmatpush1.bf16.msra.mxu0 %v1471
    %1494 = vmatprep.subr.bf16.mxu0 0
    %1495 = vmatpush1.bf16.msra.mxu0 %v1472
    %1496 = vmatprep.subr.bf16.mxu0 0
    %1497 = vmatpush1.bf16.msra.mxu0 %v1473
    %1498 = vmatprep.subr.bf16.mxu0 0
    %1499 = vmatpush1.bf16.msra.mxu0 0
    %1500 = vmatprep.subr.bf16.mxu0 0
    %1501 = vmatpush1.bf16.msra.mxu0 0
    %1502 = vmatprep.subr.bf16.mxu0 0
    %1503 = vmatpush1.bf16.msra.mxu0 0
    %1504 = vmatprep.subr.bf16.mxu0 0
    %1505 = vmatpush1.bf16.msra.mxu0 0
    %1506 = vmatprep.subr.bf16.mxu0 0
    %1507 = vmatpush1.bf16.msra.mxu0 0
    %1508 = vmatprep.subr.bf16.mxu0 0
    %1509 = vmatpush1.bf16.msra.mxu0 0
    %1510 = vmatprep.subr.bf16.mxu0 0
    %1511 = vmatpush1.bf16.msra.mxu0 0
    %1512 = vmatprep.subr.bf16.mxu0 0
    %1513 = vmatpush1.bf16.msra.mxu0 0
    %1514 = vmatprep.mubr.bf16.mxu0 0
    %1515 = vmatmul.mubr.bf16.gmra.mrb[0].mxu0 %v1387
    %v1516 = vpop.f32.mrb[0].mxu0
    %v1517 = vadd.f32 %v1432, %v1516
    %v1518 = vpop.f32.mrb[0].mxu0
    %v1519 = vpop.f32.mrb[0].mxu0
    %v1520 = vadd.f32 %v1432, %v1519
    %v1521 = vpop.f32.mrb[0].mxu0
    %1522 = vmatprep.mubr.bf16.mxu0 0
    %1523 = vmatmul.mubr.bf16.gmra.mrb[0].mxu0 %v1388
    %v1524 = vpop.f32.mrb[0].mxu0
    %v1525 = vadd.f32 %v1432, %v1524
    %v1526 = vpop.f32.mrb[0].mxu0
    %v1527 = vpop.f32.mrb[0].mxu0
    %v1528 = vadd.f32 %v1432, %v1527
    %v1529 = vpop.f32.mrb[0].mxu0
    %1530 = vmatprep.mubr.bf16.mxu0 0
    %1531 = vmatmul.mubr.bf16.gmra.mrb[0].mxu0 %v1389
    %v1532 = vpop.f32.mrb[0].mxu0
    %v1533 = vadd.f32 %v1432, %v1532
    %v1534 = vpop.f32.mrb[0].mxu0
    %v1535 = vpop.f32.mrb[0].mxu0
    %v1536 = vadd.f32 %v1432, %v1535
    %v1537 = vpop.f32.mrb[0].mxu0
    %1538 = vmatprep.mubr.bf16.mxu0 0
    %1539 = vmatmul.mubr.bf16.gmra.mrb[0].mxu0 %v1390
    %v1540 = vpop.f32.mrb[0].mxu0
    %v1541 = vadd.f32 %v1432, %v1540
    %v1542 = vpop.f32.mrb[0].mxu0
    %v1543 = vpop.f32.mrb[0].mxu0
    %v1544 = vadd.f32 %v1432, %v1543
    %v1545 = vpop.f32.mrb[0].mxu0
    %1546 = vmatprep.mubr.bf16.mxu0 0
    %1547 = vmatmul.mubr.bf16.gmra.mrb[0].mxu0 %v1391
    %v1548 = vpop.f32.mrb[0].mxu0
    %v1549 = vadd.f32 %v1432, %v1548
    %v1550 = vpop.f32.mrb[0].mxu0
    %v1551 = vpop.f32.mrb[0].mxu0
    %v1552 = vadd.f32 %v1432, %v1551
    %v1553 = vpop.f32.mrb[0].mxu0
    %1554 = vmatprep.mubr.bf16.mxu0 0
    %1555 = vmatmul.mubr.bf16.gmra.mrb[0].mxu0 %v1392
    %v1556 = vpop.f32.mrb[0].mxu0
    %v1557 = vadd.f32 %v1432, %v1556
    %v1558 = vpop.f32.mrb[0].mxu0
    %v1559 = vpop.f32.mrb[0].mxu0
    %v1560 = vadd.f32 %v1432, %v1559
    %v1561 = vpop.f32.mrb[0].mxu0
    %1562 = vmatprep.mubr.bf16.mxu0 0
    %1563 = vmatmul.mubr.bf16.gmra.mrb[0].mxu0 %v1393
    %v1564 = vpop.f32.mrb[0].mxu0
    %v1565 = vadd.f32 %v1432, %v1564
    %v1566 = vpop.f32.mrb[0].mxu0
    %v1567 = vpop.f32.mrb[0].mxu0
    %v1568 = vadd.f32 %v1432, %v1567
    %v1569 = vpop.f32.mrb[0].mxu0
    %1570 = vmatprep.mubr.bf16.mxu0 0
    %1571 = vmatmul.mubr.bf16.gmra.mrb[0].mxu0 %v1394
    %v1572 = vpop.f32.mrb[0].mxu0
    %v1573 = vadd.f32 %v1432, %v1572
    %v1574 = vpop.f32.mrb[0].mxu0
    %v1575 = vpop.f32.mrb[0].mxu0
    %v1576 = vadd.f32 %v1432, %v1575
    %v1577 = vpop.f32.mrb[0].mxu0
    %1578 = vmatprep.mubr.bf16.mxu0 0
    %1579 = vmatmul.mubr.bf16.gmra.mrb[0].mxu0 %v1395
    %v1580 = vpop.f32.mrb[0].mxu0
    %v1581 = vadd.f32 %v1432, %v1580
    %v1582 = vpop.f32.mrb[0].mxu0
    %v1583 = vpop.f32.mrb[0].mxu0
    %v1584 = vadd.f32 %v1432, %v1583
    %v1585 = vpop.f32.mrb[0].mxu0
    %1586 = vmatprep.mubr.bf16.mxu0 0
    %1587 = vmatmul.mubr.bf16.gmra.mrb[0].mxu0 %v1396
    %v1588 = vpop.f32.mrb[0].mxu0
    %v1589 = vadd.f32 %v1432, %v1588
    %v1590 = vpop.f32.mrb[0].mxu0
    %v1591 = vpop.f32.mrb[0].mxu0
    %v1592 = vadd.f32 %v1432, %v1591
    %v1593 = vpop.f32.mrb[0].mxu0
    %1594 = vmatprep.mubr.bf16.mxu0 0
    %1595 = vmatmul.mubr.bf16.gmra.mrb[0].mxu0 %v1397
    %v1596 = vpop.f32.mrb[0].mxu0
    %v1597 = vadd.f32 %v1432, %v1596
    %v1598 = vpop.f32.mrb[0].mxu0
    %v1599 = vpop.f32.mrb[0].mxu0
    %v1600 = vadd.f32 %v1432, %v1599
    %v1601 = vpop.f32.mrb[0].mxu0
    %1602 = vmatprep.mubr.bf16.mxu0 0
    %1603 = vmatmul.mubr.bf16.gmra.mrb[0].mxu0 %v1398
    %v1604 = vpop.f32.mrb[0].mxu0
    %v1605 = vadd.f32 %v1432, %v1604
    %v1606 = vpop.f32.mrb[0].mxu0
    %v1607 = vpop.f32.mrb[0].mxu0
    %v1608 = vadd.f32 %v1432, %v1607
    %v1609 = vpop.f32.mrb[0].mxu0
    %1610 = vmatprep.mubr.bf16.mxu0 0
    %1611 = vmatmul.mubr.bf16.gmra.mrb[0].mxu0 %v1399
    %v1612 = vpop.f32.mrb[0].mxu0
    %v1613 = vadd.f32 %v1432, %v1612
    %v1614 = vpop.f32.mrb[0].mxu0
    %v1615 = vpop.f32.mrb[0].mxu0
    %v1616 = vadd.f32 %v1432, %v1615
    %v1617 = vpop.f32.mrb[0].mxu0
    %1618 = vmatprep.mubr.bf16.mxu0 0
    %1619 = vmatmul.mubr.bf16.gmra.mrb[0].mxu0 %v1400
    %v1620 = vpop.f32.mrb[0].mxu0
    %v1621 = vadd.f32 %v1432, %v1620
    %v1622 = vpop.f32.mrb[0].mxu0
    %v1623 = vpop.f32.mrb[0].mxu0
    %v1624 = vadd.f32 %v1432, %v1623
    %v1625 = vpop.f32.mrb[0].mxu0
    %1626 = vmatprep.mubr.bf16.mxu0 0
    %1627 = vmatmul.mubr.bf16.gmra.mrb[0].mxu0 %v1401
    %v1628 = vpop.f32.mrb[0].mxu0
    %v1629 = vadd.f32 %v1432, %v1628
    %v1630 = vpop.f32.mrb[0].mxu0
    %v1631 = vpop.f32.mrb[0].mxu0
    %v1632 = vadd.f32 %v1432, %v1631
    %v1633 = vpop.f32.mrb[0].mxu0
    %1634 = vmatprep.mubr.bf16.mxu0 0
    %1635 = vmatmul.mubr.bf16.gmra.mrb[0].mxu0 %v1402
    %v1636 = vpop.f32.mrb[0].mxu0
    %v1637 = vadd.f32 %v1432, %v1636
    %v1638 = vpop.f32.mrb[0].mxu0
    %v1639 = vpop.f32.mrb[0].mxu0
    %v1640 = vadd.f32 %v1432, %v1639
    %v1641 = vpop.f32.mrb[0].mxu0
    %1642 = vmatprep.mubr.bf16.mxu0 0
    %1643 = vmatmul.mubr.bf16.gmra.mrb[0].mxu0 %v1403
    %v1644 = vpop.f32.mrb[0].mxu0
    %v1645 = vadd.f32 %v1432, %v1644
    %v1646 = vpop.f32.mrb[0].mxu0
    %v1647 = vpop.f32.mrb[0].mxu0
    %v1648 = vadd.f32 %v1432, %v1647
    %v1649 = vpop.f32.mrb[0].mxu0
    %1650 = vmatprep.mubr.bf16.mxu0 0
    %1651 = vmatmul.mubr.bf16.gmra.mrb[0].mxu0 %v1404
    %v1652 = vpop.f32.mrb[0].mxu0
    %v1653 = vadd.f32 %v1432, %v1652
    %v1654 = vpop.f32.mrb[0].mxu0
    %v1655 = vpop.f32.mrb[0].mxu0
    %v1656 = vadd.f32 %v1432, %v1655
    %v1657 = vpop.f32.mrb[0].mxu0
    %1658 = vmatprep.mubr.bf16.mxu0 0
    %1659 = vmatmul.mubr.bf16.gmra.mrb[0].mxu0 %v1405
    %v1660 = vpop.f32.mrb[0].mxu0
    %v1661 = vadd.f32 %v1432, %v1660
    %v1662 = vpop.f32.mrb[0].mxu0
    %v1663 = vpop.f32.mrb[0].mxu0
    %v1664 = vadd.f32 %v1432, %v1663
    %v1665 = vpop.f32.mrb[0].mxu0
    %1666 = vmatprep.mubr.bf16.mxu0 0
    %1667 = vmatmul.mubr.bf16.gmra.mrb[0].mxu0 %v1406
    %v1668 = vpop.f32.mrb[0].mxu0
    %v1669 = vadd.f32 %v1432, %v1668
    %v1670 = vpop.f32.mrb[0].mxu0
    %v1671 = vpop.f32.mrb[0].mxu0
    %v1672 = vadd.f32 %v1432, %v1671
    %v1673 = vpop.f32.mrb[0].mxu0
    %1674 = vmatprep.mubr.bf16.mxu0 0
    %1675 = vmatmul.mubr.bf16.gmra.mrb[0].mxu0 %v1407
    %v1676 = vpop.f32.mrb[0].mxu0
    %v1677 = vadd.f32 %v1432, %v1676
    %v1678 = vpop.f32.mrb[0].mxu0
    %v1679 = vpop.f32.mrb[0].mxu0
    %v1680 = vadd.f32 %v1432, %v1679
    %v1681 = vpop.f32.mrb[0].mxu0
    %1682 = vmatprep.mubr.bf16.mxu0 0
    %1683 = vmatmul.mubr.bf16.gmra.mrb[0].mxu0 %v1408
    %v1684 = vpop.f32.mrb[0].mxu0
    %v1685 = vadd.f32 %v1432, %v1684
    %v1686 = vpop.f32.mrb[0].mxu0
    %v1687 = vpop.f32.mrb[0].mxu0
    %v1688 = vadd.f32 %v1432, %v1687
    %v1689 = vpop.f32.mrb[0].mxu0
    %1690 = vmatprep.mubr.bf16.mxu0 0
    %1691 = vmatmul.mubr.bf16.gmra.mrb[0].mxu0 %v1409
    %v1692 = vpop.f32.mrb[0].mxu0
    %v1693 = vadd.f32 %v1432, %v1692
    %v1694 = vpop.f32.mrb[0].mxu0
    %v1695 = vpop.f32.mrb[0].mxu0
    %v1696 = vadd.f32 %v1432, %v1695
    %v1697 = vpop.f32.mrb[0].mxu0
    %1698 = vmatprep.mubr.bf16.mxu0 0
    %1699 = vmatmul.mubr.bf16.gmra.mrb[0].mxu0 %v1410
    %v1700 = vpop.f32.mrb[0].mxu0
    %v1701 = vadd.f32 %v1432, %v1700
    %v1702 = vpop.f32.mrb[0].mxu0
    %v1703 = vpop.f32.mrb[0].mxu0
    %v1704 = vadd.f32 %v1432, %v1703
    %v1705 = vpop.f32.mrb[0].mxu0
    %1706 = vdwg.mxu0
    %v1707 = vmax.f32 %v1517, 0.0
    %v1708 = vmax.f32 %v1520, 0.0
    %v1709 = vmax.f32 %v1525, 0.0
    %v1710 = vmax.f32 %v1528, 0.0
    %v1711 = vmax.f32 %v1533, 0.0
    %v1712 = vmax.f32 %v1536, 0.0
    %v1713 = vmax.f32 %v1541, 0.0
    %v1714 = vmax.f32 %v1544, 0.0
    %v1715 = vmax.f32 %v1549, 0.0
    %v1716 = vmax.f32 %v1552, 0.0
    %v1717 = vmax.f32 %v1557, 0.0
    %v1718 = vmax.f32 %v1560, 0.0
    %v1719 = vmax.f32 %v1565, 0.0
    %v1720 = vmax.f32 %v1568, 0.0
    %v1721 = vmax.f32 %v1573, 0.0
    %v1722 = vmax.f32 %v1576, 0.0
    %v1723 = vmax.f32 %v1581, 0.0
    %v1724 = vmax.f32 %v1584, 0.0
    %v1725 = vmax.f32 %v1589, 0.0
    %v1726 = vmax.f32 %v1592, 0.0
    %v1727 = vmax.f32 %v1597, 0.0
    %v1728 = vmax.f32 %v1600, 0.0
    %v1729 = vmax.f32 %v1605, 0.0
    %v1730 = vmax.f32 %v1608, 0.0
    %v1731 = vmax.f32 %v1613, 0.0
    %v1732 = vmax.f32 %v1616, 0.0
    %v1733 = vmax.f32 %v1621, 0.0
    %v1734 = vmax.f32 %v1624, 0.0
    %v1735 = vmax.f32 %v1629, 0.0
    %v1736 = vmax.f32 %v1632, 0.0
    %v1737 = vmax.f32 %v1637, 0.0
    %v1738 = vmax.f32 %v1640, 0.0
    %v1739 = vmax.f32 %v1645, 0.0
    %v1740 = vmax.f32 %v1648, 0.0
    %v1741 = vmax.f32 %v1653, 0.0
    %v1742 = vmax.f32 %v1656, 0.0
    %v1743 = vmax.f32 %v1661, 0.0
    %v1744 = vmax.f32 %v1664, 0.0
    %v1745 = vmax.f32 %v1669, 0.0
    %v1746 = vmax.f32 %v1672, 0.0
    %v1747 = vmax.f32 %v1677, 0.0
    %v1748 = vmax.f32 %v1680, 0.0
    %v1749 = vmax.f32 %v1685, 0.0
    %v1750 = vmax.f32 %v1688, 0.0
    %v1751 = vmax.f32 %v1693, 0.0
    %v1752 = vmax.f32 %v1696, 0.0
    %v1753 = vmax.f32 %v1701, 0.0
    %v1754 = vmax.f32 %v1704, 0.0
    %v1755 = vpack.c.bf16 %v1708, %v1707
    %v1756 = vpack.c.bf16 %v1710, %v1709
    %v1757 = vpack.c.bf16 %v1712, %v1711
    %v1758 = vpack.c.bf16 %v1714, %v1713
    %v1759 = vpack.c.bf16 %v1716, %v1715
    %v1760 = vpack.c.bf16 %v1718, %v1717
    %v1761 = vpack.c.bf16 %v1720, %v1719
    %v1762 = vpack.c.bf16 %v1722, %v1721
    %v1763 = vpack.c.bf16 %v1724, %v1723
    %v1764 = vpack.c.bf16 %v1726, %v1725
    %v1765 = vpack.c.bf16 %v1728, %v1727
    %v1766 = vpack.c.bf16 %v1730, %v1729
    %v1767 = vpack.c.bf16 %v1732, %v1731
    %v1768 = vpack.c.bf16 %v1734, %v1733
    %v1769 = vpack.c.bf16 %v1736, %v1735
    %v1770 = vpack.c.bf16 %v1738, %v1737
    %v1771 = vpack.c.bf16 %v1740, %v1739
    %v1772 = vpack.c.bf16 %v1742, %v1741
    %v1773 = vpack.c.bf16 %v1744, %v1743
    %v1774 = vpack.c.bf16 %v1746, %v1745
    %v1775 = vpack.c.bf16 %v1748, %v1747
    %v1776 = vpack.c.bf16 %v1750, %v1749
    %v1777 = vpack.c.bf16 %v1752, %v1751
    %v1778 = vpack.c.bf16 %v1754, %v1753
    %v1803 = vunpack.c.l.b16 %v1755
    %v1804 = vunpack.c.h.b16 %v1755
    %v1805 = vunpack.c.l.b16 %v1756
    %v1806 = vunpack.c.h.b16 %v1756
    %v1807 = vunpack.c.l.b16 %v1757
    %v1808 = vunpack.c.h.b16 %v1757
    %v1809 = vunpack.c.l.b16 %v1758
    %v1810 = vunpack.c.h.b16 %v1758
    %v1811 = vunpack.c.l.b16 %v1759
    %v1812 = vunpack.c.h.b16 %v1759
    %v1813 = vunpack.c.l.b16 %v1760
    %v1814 = vunpack.c.h.b16 %v1760
    %v1815 = vunpack.c.l.b16 %v1761
    %v1816 = vunpack.c.h.b16 %v1761
    %v1817 = vunpack.c.l.b16 %v1762
    %v1818 = vunpack.c.h.b16 %v1762
    %v1819 = vunpack.c.l.b16 %v1763
    %v1820 = vunpack.c.h.b16 %v1763
    %v1821 = vunpack.c.l.b16 %v1764
    %v1822 = vunpack.c.h.b16 %v1764
    %v1823 = vunpack.c.l.b16 %v1765
    %v1824 = vunpack.c.h.b16 %v1765
    %v1825 = vunpack.c.l.b16 %v1766
    %v1826 = vunpack.c.h.b16 %v1766
    %v1827 = vunpack.c.l.b16 %v1767
    %v1828 = vunpack.c.h.b16 %v1767
    %v1829 = vunpack.c.l.b16 %v1768
    %v1830 = vunpack.c.h.b16 %v1768
    %v1831 = vunpack.c.l.b16 %v1769
    %v1832 = vunpack.c.h.b16 %v1769
    %v1833 = vunpack.c.l.b16 %v1770
    %v1834 = vunpack.c.h.b16 %v1770
    %v1835 = vunpack.c.l.b16 %v1771
    %v1836 = vunpack.c.h.b16 %v1771
    %v1837 = vunpack.c.l.b16 %v1772
    %v1838 = vunpack.c.h.b16 %v1772
    %v1839 = vunpack.c.l.b16 %v1773
    %v1840 = vunpack.c.h.b16 %v1773
    %v1841 = vunpack.c.l.b16 %v1774
    %v1842 = vunpack.c.h.b16 %v1774
    %v1843 = vunpack.c.l.b16 %v1775
    %v1844 = vunpack.c.h.b16 %v1775
    %v1845 = vunpack.c.l.b16 %v1776
    %v1846 = vunpack.c.h.b16 %v1776
    %v1847 = vunpack.c.l.b16 %v1777
    %v1848 = vunpack.c.h.b16 %v1777
    %v1849 = vunpack.c.l.b16 %v1778
    %v1850 = vunpack.c.h.b16 %v1778
    %v1851 = vpack.c.b16 %v1803, %v1803
    %v1852 = vpack.c.b16 %v1804, %v1804
    %v1853 = vpack.c.b16 %v1805, %v1805
    %v1854 = vpack.c.b16 %v1806, %v1806
    %v1855 = vpack.c.b16 %v1807, %v1807
    %v1856 = vpack.c.b16 %v1808, %v1808
    %v1857 = vpack.c.b16 %v1809, %v1809
    %v1858 = vpack.c.b16 %v1810, %v1810
    %v1859 = vpack.c.b16 %v1811, %v1811
    %v1860 = vpack.c.b16 %v1812, %v1812
    %v1861 = vpack.c.b16 %v1813, %v1813
    %v1862 = vpack.c.b16 %v1814, %v1814
    %v1863 = vpack.c.b16 %v1815, %v1815
    %v1864 = vpack.c.b16 %v1816, %v1816
    %v1865 = vpack.c.b16 %v1817, %v1817
    %v1866 = vpack.c.b16 %v1818, %v1818
    %v1867 = vpack.c.b16 %v1819, %v1819
    %v1868 = vpack.c.b16 %v1820, %v1820
    %v1869 = vpack.c.b16 %v1821, %v1821
    %v1870 = vpack.c.b16 %v1822, %v1822
    %v1871 = vpack.c.b16 %v1823, %v1823
    %v1872 = vpack.c.b16 %v1824, %v1824
    %v1873 = vpack.c.b16 %v1825, %v1825
    %v1874 = vpack.c.b16 %v1826, %v1826
    %v1875 = vpack.c.b16 %v1827, %v1827
    %v1876 = vpack.c.b16 %v1828, %v1828
    %v1877 = vpack.c.b16 %v1829, %v1829
    %v1878 = vpack.c.b16 %v1830, %v1830
    %v1879 = vpack.c.b16 %v1831, %v1831
    %v1880 = vpack.c.b16 %v1832, %v1832
    %v1881 = vpack.c.b16 %v1833, %v1833
    %v1882 = vpack.c.b16 %v1834, %v1834
    %v1883 = vpack.c.b16 %v1835, %v1835
    %v1884 = vpack.c.b16 %v1836, %v1836
    %v1885 = vpack.c.b16 %v1837, %v1837
    %v1886 = vpack.c.b16 %v1838, %v1838
    %v1887 = vpack.c.b16 %v1839, %v1839
    %v1888 = vpack.c.b16 %v1840, %v1840
    %v1889 = vpack.c.b16 %v1841, %v1841
    %v1890 = vpack.c.b16 %v1842, %v1842
    %v1891 = vpack.c.b16 %v1843, %v1843
    %v1892 = vpack.c.b16 %v1844, %v1844
    %v1893 = vpack.c.b16 %v1845, %v1845
    %v1894 = vpack.c.b16 %v1846, %v1846
    %v1895 = vpack.c.b16 %v1847, %v1847
    %v1896 = vpack.c.b16 %v1848, %v1848
    %v1897 = vpack.c.b16 %v1849, %v1849
    %v1898 = vpack.c.b16 %v1850, %v1850
    %1947 = vst [vmem:[%s4] sm:$0xf] %v1851
    %1948 = vst [vmem:[%s4 + $0x4] sm:$0xf] %v1852
    %1949 = vst [vmem:[%s4 + $0x8] sm:$0xf] %v1853
    %1950 = vst [vmem:[%s4 + $0xc] sm:$0xf] %v1854
    %1951 = vst [vmem:[%s4 + $0x10] sm:$0xf] %v1855
    %1952 = vst [vmem:[%s4 + $0x14] sm:$0xf] %v1856
    %1953 = vst [vmem:[%s4 + $0x18] sm:$0xf] %v1857
    %1954 = vst [vmem:[%s4 + $0x1c] sm:$0xf] %v1858
    %1955 = vst [vmem:[%s4 + $0x20] sm:$0xf] %v1859
    %1956 = vst [vmem:[%s4 + $0x24] sm:$0xf] %v1860
    %1957 = vst [vmem:[%s4 + $0x28] sm:$0xf] %v1861
    %1958 = vst [vmem:[%s4 + $0x2c] sm:$0xf] %v1862
    %1959 = vst [vmem:[%s4 + $0x30] sm:$0xf] %v1863
    %1960 = vst [vmem:[%s4 + $0x34] sm:$0xf] %v1864
    %1961 = vst [vmem:[%s4 + $0x38] sm:$0xf] %v1865
    %1962 = vst [vmem:[%s4 + $0x3c] sm:$0xf] %v1866
    %1963 = vst [vmem:[%s4 + $0x40] sm:$0xf] %v1867
    %1964 = vst [vmem:[%s4 + $0x44] sm:$0xf] %v1868
    %1965 = vst [vmem:[%s4 + $0x48] sm:$0xf] %v1869
    %1966 = vst [vmem:[%s4 + $0x4c] sm:$0xf] %v1870
    %1967 = vst [vmem:[%s4 + $0x50] sm:$0xf] %v1871
    %1968 = vst [vmem:[%s4 + $0x54] sm:$0xf] %v1872
    %1969 = vst [vmem:[%s4 + $0x58] sm:$0xf] %v1873
    %1970 = vst [vmem:[%s4 + $0x5c] sm:$0xf] %v1874
    %1971 = vst [vmem:[%s4 + $0x60] sm:$0xf] %v1875
    %1972 = vst [vmem:[%s4 + $0x64] sm:$0xf] %v1876
    %1973 = vst [vmem:[%s4 + $0x68] sm:$0xf] %v1877
    %1974 = vst [vmem:[%s4 + $0x6c] sm:$0xf] %v1878
    %1975 = vst [vmem:[%s4 + $0x70] sm:$0xf] %v1879
    %1976 = vst [vmem:[%s4 + $0x74] sm:$0xf] %v1880
    %1977 = vst [vmem:[%s4 + $0x78] sm:$0xf] %v1881
    %1978 = vst [vmem:[%s4 + $0x7c] sm:$0xf] %v1882
    %1979 = vst [vmem:[%s4 + $0x80] sm:$0xf] %v1883
    %1980 = vst [vmem:[%s4 + $0x84] sm:$0xf] %v1884
    %1981 = vst [vmem:[%s4 + $0x88] sm:$0xf] %v1885
    %1982 = vst [vmem:[%s4 + $0x8c] sm:$0xf] %v1886
    %1983 = vst [vmem:[%s4 + $0x90] sm:$0xf] %v1887
    %1984 = vst [vmem:[%s4 + $0x94] sm:$0xf] %v1888
    %1985 = vst [vmem:[%s4 + $0x98] sm:$0xf] %v1889
    %1986 = vst [vmem:[%s4 + $0x9c] sm:$0xf] %v1890
    %1987 = vst [vmem:[%s4 + $0xa0] sm:$0xf] %v1891
    %1988 = vst [vmem:[%s4 + $0xa4] sm:$0xf] %v1892
    %1989 = vst [vmem:[%s4 + $0xa8] sm:$0xf] %v1893
    %1990 = vst [vmem:[%s4 + $0xac] sm:$0xf] %v1894
    %1991 = vst [vmem:[%s4 + $0xb0] sm:$0xf] %v1895
    %1992 = vst [vmem:[%s4 + $0xb4] sm:$0xf] %v1896
    %1993 = vst [vmem:[%s4 + $0xb8] sm:$0xf] %v1897
    %1994 = vst [vmem:[%s4 + $0xbc] sm:$0xf] %v1898
  $region25: #{simple_gnn_pallas.2} parent=0 // pred_fallthru
    _
  // Predicated region
  $region26: #{simple_gnn_pallas.2} parent=0 // pred_check
    _
  $region27: #{simple_gnn_pallas.2} parent=0 // pred_check_branch
    %1996 = sbr.rel (0) target = $region29
  $region28: #{simple_gnn_pallas.2} parent=0 // pred_region
    _
  $region29: #{simple_gnn_pallas.2} parent=0 // pred_fallthru
    _
  // Predicated region
  $region30: #{simple_gnn_pallas.2} parent=0 // pred_check
    _
  $region31: #{simple_gnn_pallas.2} parent=0 // pred_check_branch
    %1998 = sbr.rel (0) target = $region33
  $region32: #{simple_gnn_pallas.2} parent=0 // pred_region
    _
  $region33: #{simple_gnn_pallas.2} parent=0 // pred_fallthru
    _

</llo_original>
